<compile_context>
chip_gen: v6e
topology: v6e:2x2x1
jax: 0.10.0
libtpu: 0.0.40
codegen_flags: <defaults>
</compile_context>

<pallas_src>
import jax
import jax.numpy as jnp
from jax import lax
from jax.experimental import pallas as pl
from jax.experimental.pallas import tpu as pltpu


def _elu(v):
    # PyTorch ELU (alpha=1): x if x > 0 else exp(x) - 1.
    # exp argument clamped so the unselected branch never produces inf.
    return jnp.where(v > 0, v, jnp.exp(jnp.minimum(v, 0.0)) - 1.0)


def _make_decoder_kernel(*, d_in, width, out_dim, n_res_blocks, res_skip,
                         residual, lane_chunk, n_chunks, use_mxu_input):
    """Kernel: input Linear+ELU, n_res_blocks*(res_skip Linear+ELU) with residual
    adds, final Linear (with bias).  Batch lives on lanes (last dim); the layer
    stack is evaluated per `lane_chunk`-wide batch chunk to bound vreg pressure."""
    n_layers = n_res_blocks * res_skip

    def kernel(xT_ref, w_in_ref, res_w_ref, w_out_ref, b_hid_ref, b_out_ref, o_ref):
        # Tiny parameters: load once per grid step (VMEM -> vreg is cheap).
        w_in = w_in_ref[...]        # (width, d_in)
        w_out = w_out_ref[...]      # (out_dim, width)
        b_out = b_out_ref[...]      # (out_dim, 1)

        def chunk_body(c, carry):
            if n_chunks > 1:
                start = pl.multiple_of(c * lane_chunk, 128)
            else:
                start = 0
            xc = xT_ref[:, pl.ds(start, lane_chunk)]          # (d_in, chunk)

            if use_mxu_input:
                h = jnp.dot(w_in, xc, preferred_element_type=jnp.float32,
                            precision=lax.Precision.DEFAULT)
            else:
                # K = d_in is tiny: broadcast-FMAs on the VPU keep the MXU free.
                h = w_in[:, 0:1] * xc[0:1, :]
                for k in range(1, d_in):
                    h = h + w_in[:, k:k + 1] * xc[k:k + 1, :]
            x = _elu(h + b_hid_ref[:, 0:1])                   # (width, chunk)

            li = 0
            for _ in range(n_res_blocks):
                y = x
                for _ in range(res_skip):
                    # Explicit default precision: 1-pass bf16 MXU, f32 accumulate.
                    y = _elu(
                        jnp.dot(res_w_ref[li], y,
                                preferred_element_type=jnp.float32,
                                precision=lax.Precision.DEFAULT)
                        + b_hid_ref[:, li + 1:li + 2])
                    li += 1
                x = x + y if residual else y

            # Lane-dense (unmasked) store of this batch chunk.
            o_ref[:, pl.ds(start, lane_chunk)] = (
                jnp.dot(w_out, x, preferred_element_type=jnp.float32,
                        precision=lax.Precision.DEFAULT) + b_out)
            return carry

        if n_chunks == 1:
            chunk_body(0, None)
        else:
            lax.fori_loop(0, n_chunks, chunk_body, None, unroll=True)

    return kernel


def cv_decoder_forward_t(xT, w_in, b_in, res_ws, res_bs, w_out, b_out, *,
                         n_res_blocks, res_skip, residual=True,
                         num_batch_tiles=1, lane_chunk=256):
    """Hot-path entry point (no layout transposes).

    xT       : (bottleneck_dim, B)  float32  -- batch on lanes
    w_in     : (width, bottleneck_dim)   [PyTorch (out, in) layout]
    b_in     : (width,)
    res_ws[i]: (width, width), res_bs[i]: (width,)
    w_out    : (output_dim, width), b_out: (output_dim,)
    returns  : (output_dim, B)

    num_batch_tiles=1 (default) -> single grid step; best on 1-TC chips (v5e/v6e).
    num_batch_tiles=2           -> one "parallel" tile per TensorCore on v7x.
    """
    d_in, B = xT.shape
    width = w_in.shape[0]
    out_dim = w_out.shape[0]
    n_layers = n_res_blocks * res_skip
    assert n_layers >= 1, "expect at least one residual layer (module default: 4)"
    assert len(res_ws) == n_layers and len(res_bs) == n_layers

    assert B % num_batch_tiles == 0, "batch must be divisible by num_batch_tiles"
    tm = B // num_batch_tiles
    assert tm == B or tm % 128 == 0, (
        "batch tile must be a multiple of 128 lanes or equal the full batch")

    # In-kernel lane chunking to bound vreg pressure (x + y stay well under 64 vregs).
    if tm <= lane_chunk or tm % lane_chunk != 0:
        chunk = tm
    else:
        chunk = lane_chunk
    n_chunks = tm // chunk
    if n_chunks > 1:
        assert chunk % 128 == 0

    # Consolidated parameter arrays (fewer inputs -> fewer DMA descriptors/buffers).
    res_w = jnp.stack(res_ws, axis=0)                    # (n_layers, width, width)
    b_hid = jnp.stack([b_in] + list(res_bs), axis=1)     # (width, n_layers + 1)
    b_out2 = b_out.reshape(out_dim, 1)

    kernel = _make_decoder_kernel(
        d_in=d_in, width=width, out_dim=out_dim,
        n_res_blocks=n_res_blocks, res_skip=res_skip, residual=residual,
        lane_chunk=chunk, n_chunks=n_chunks, use_mxu_input=(d_in > 16))

    in_specs = [
        pl.BlockSpec((d_in, tm), lambda i: (0, i)),                   # xT: batch-tiled
        pl.BlockSpec((width, d_in), lambda i: (0, 0)),                # w_in (broadcast)
        pl.BlockSpec((n_layers, width, width), lambda i: (0, 0, 0)),  # stacked res W
        pl.BlockSpec((out_dim, width), lambda i: (0, 0)),             # w_out
        pl.BlockSpec((width, n_layers + 1), lambda i: (0, 0)),        # stacked biases
        pl.BlockSpec((out_dim, 1), lambda i: (0, 0)),                 # out bias
    ]
    out_spec = pl.BlockSpec((out_dim, tm), lambda i: (0, i))          # lane-dense

    # Advisory cost hint for XLA's scheduler.
    flops = 2 * B * (d_in * width + n_layers * width * width + width * out_dim)
    transcendentals = B * width * (1 + n_layers)
    param_bytes = 4 * (width * d_in + n_layers * width * width
                       + out_dim * width + width * (n_layers + 1) + out_dim)
    bytes_accessed = 4 * B * (d_in + out_dim) + param_bytes

    fn = pl.pallas_call(
        kernel,
        out_shape=jax.ShapeDtypeStruct((out_dim, B), jnp.float32),
        grid_spec=pltpu.PrefetchScalarGridSpec(
            num_scalar_prefetch=0,
            grid=(num_batch_tiles,),
            in_specs=in_specs,
            out_specs=out_spec,
        ),
        compiler_params=pltpu.CompilerParams(
            dimension_semantics=("parallel",),
        ),
        cost_estimate=pl.CostEstimate(
            flops=int(flops),
            transcendentals=int(transcendentals),
            bytes_accessed=int(bytes_accessed),
        ),
    )
    return fn(xT, w_in, res_w, w_out, b_hid, b_out2)


def cv_decoder_forward(x, w_in, b_in, res_ws, res_bs, w_out, b_out, *,
                       n_res_blocks, res_skip, residual=True,
                       num_batch_tiles=1, lane_chunk=256):
    """Convenience wrapper matching the PyTorch module's (B, d_in) -> (B, out_dim)
    layout.  The two transposes are separate HBM<->HBM XLA ops comparable in cost
    to the whole kernel at these sizes; prefer cv_decoder_forward_t and keep the
    transposed layout in the producer/consumer when possible."""
    outT = cv_decoder_forward_t(x.T, w_in, b_in, res_ws, res_bs, w_out, b_out,
                                n_res_blocks=n_res_blocks, res_skip=res_skip,
                                residual=residual, num_batch_tiles=num_batch_tiles,
                                lane_chunk=lane_chunk)
    return outT.T


def cv_decoder_reference(x, w_in, b_in, res_ws, res_bs, w_out, b_out, *,
                         n_res_blocks, res_skip, residual=True):
    """Plain-JAX reference mirroring the PyTorch forward (rewiring=False, no noise)."""
    h = _elu(x @ w_in.T + b_in)
    li = 0
    for _ in range(n_res_blocks):
        y = h
        for _ in range(res_skip):
            y = _elu(y @ res_ws[li].T + res_bs[li])
            li += 1
        h = h + y if residual else y
    return h @ w_out.T + b_out


if __name__ == "__main__":
    # Shapes consistent with the module (residual=True, n_res_blocks=4, res_skip=1,
    # ELU).  Batch 512 -> single grid step with two 256-lane chunks inside the kernel.
    B, BOTTLENECK, WIDTH, OUT_DIM = 512, 2, 64, 16
    N_RES_BLOCKS, RES_SKIP = 4, 1
    n_layers = N_RES_BLOCKS * RES_SKIP

    key = jax.random.PRNGKey(0)
    keys = jax.random.split(key, 5 + 2 * n_layers)

    # Demo values are rounded to bf16 (kept in f32) so the kernel's exact-f32 VPU
    # input layer and the reference's default-precision (bf16 x bf16 -> f32) MXU
    # dots see bit-identical operands; the self-check then validates structure and
    # layout rather than MXU rounding mode.
    def q(a):
        return a.astype(jnp.bfloat16).astype(jnp.float32)

    x = q(jax.random.normal(keys[0], (B, BOTTLENECK), dtype=jnp.float32))

    # Weights kept in native PyTorch nn.Linear (out, in) layout.
    w_in = q(jax.random.normal(keys[1], (WIDTH, BOTTLENECK), dtype=jnp.float32) * 0.3)
    b_in = q(jax.random.normal(keys[2], (WIDTH,), dtype=jnp.float32) * 0.1)

    res_ws, res_bs = [], []
    for li in range(n_layers):
        res_ws.append(q(jax.random.normal(keys[3 + 2 * li], (WIDTH, WIDTH),
                                          dtype=jnp.float32) * 0.15))
        res_bs.append(q(jax.random.normal(keys[4 + 2 * li], (WIDTH,),
                                          dtype=jnp.float32) * 0.1))

    w_out = q(jax.random.normal(keys[3 + 2 * n_layers], (OUT_DIM, WIDTH),
                                dtype=jnp.float32) * 0.2)
    b_out = q(jax.random.normal(keys[4 + 2 * n_layers], (OUT_DIM,),
                                dtype=jnp.float32) * 0.1)

    ref = cv_decoder_reference(x, w_in, b_in, res_ws, res_bs, w_out, b_out,
                               n_res_blocks=N_RES_BLOCKS, res_skip=RES_SKIP,
                               residual=True)
    ref = jax.block_until_ready(ref)

    # 1) Hot-path entry point: transposed layout, single grid step (v5e / v6e default).
    xT = x.T  # layout owned by the producer in real use
    outT = jax.block_until_ready(
        cv_decoder_forward_t(xT, w_in, b_in, res_ws, res_bs, w_out, b_out,
                             n_res_blocks=N_RES_BLOCKS, res_skip=RES_SKIP,
                             residual=True, num_batch_tiles=1))
    assert outT.shape == (OUT_DIM, B)
    d1 = float(jnp.max(jnp.abs(outT - ref.T)))
    assert jnp.allclose(outT, ref.T, atol=1e-3, rtol=1e-3), f"mismatch (1 tile): {d1}"

    # 2) v7x configuration: two "parallel" batch tiles, one per TensorCore.
    outT2 = jax.block_until_ready(
        cv_decoder_forward_t(xT, w_in, b_in, res_ws, res_bs, w_out, b_out,
                             n_res_blocks=N_RES_BLOCKS, res_skip=RES_SKIP,
                             residual=True, num_batch_tiles=2))
    d2 = float(jnp.max(jnp.abs(outT2 - ref.T)))
    assert jnp.allclose(outT2, ref.T, atol=1e-3, rtol=1e-3), f"mismatch (2 tiles): {d2}"

    # 3) PyTorch-layout convenience wrapper (module-identical signature).
    out = jax.block_until_ready(
        cv_decoder_forward(x, w_in, b_in, res_ws, res_bs, w_out, b_out,
                           n_res_blocks=N_RES_BLOCKS, res_skip=RES_SKIP,
                           residual=True))
    assert out.shape == (B, OUT_DIM)
    d3 = float(jnp.max(jnp.abs(out - ref)))
    assert jnp.allclose(out, ref, atol=1e-3, rtol=1e-3), f"mismatch (wrapper): {d3}"

    print("KERNEL_OK")
</pallas_src>

<mosaic_0001>
module attributes {stable_mosaic.version = 11 : i64} {
  func.func @kernel(%arg0: i32, %arg1: memref<2x512xf32, #tpu.memory_space<vmem>>, %arg2: memref<64x2xf32, #tpu.memory_space<vmem>>, %arg3: memref<4x64x64xf32, #tpu.memory_space<vmem>>, %arg4: memref<16x64xf32, #tpu.memory_space<vmem>>, %arg5: memref<64x5xf32, #tpu.memory_space<vmem>>, %arg6: memref<16x1xf32, #tpu.memory_space<vmem>>, %arg7: memref<16x512xf32, #tpu.memory_space<vmem>>) attributes {dimension_semantics = [#tpu.dimension_semantics<parallel>], iteration_bounds = array<i64: 1>, scalar_prefetch = 0 : i64, scratch_operands = 0 : i64, tpu.core_type = #tpu.core_type<tc>, window_params = [{transform_indices = @transform_0, window_bounds = array<i64: 2, 512>}, {pipeline_mode = #tpu.pipeline_mode<synchronous>, transform_indices = @transform_1, window_bounds = array<i64: 64, 2>}, {pipeline_mode = #tpu.pipeline_mode<synchronous>, transform_indices = @transform_2, window_bounds = array<i64: 4, 64, 64>}, {pipeline_mode = #tpu.pipeline_mode<synchronous>, transform_indices = @transform_3, window_bounds = array<i64: 16, 64>}, {pipeline_mode = #tpu.pipeline_mode<synchronous>, transform_indices = @transform_4, window_bounds = array<i64: 64, 5>}, {pipeline_mode = #tpu.pipeline_mode<synchronous>, transform_indices = @transform_5, window_bounds = array<i64: 16, 1>}, {transform_indices = @transform_6, window_bounds = array<i64: 16, 512>}]} {
    %c0 = arith.constant 0 : index
    %c0_0 = arith.constant 0 : index
    %0 = vector.load %arg2[%c0, %c0_0] : memref<64x2xf32, #tpu.memory_space<vmem>>, vector<64x2xf32>
    %c0_1 = arith.constant 0 : index
    %c0_2 = arith.constant 0 : index
    %1 = vector.load %arg4[%c0_1, %c0_2] : memref<16x64xf32, #tpu.memory_space<vmem>>, vector<16x64xf32>
    %c0_3 = arith.constant 0 : index
    %c0_4 = arith.constant 0 : index
    %2 = vector.load %arg6[%c0_3, %c0_4] : memref<16x1xf32, #tpu.memory_space<vmem>>, vector<16x1xf32>
    %c0_i32 = arith.constant 0 : i32
    %c256_i32 = arith.constant 256 : i32
    %3 = arith.muli %c0_i32, %c256_i32 : i32
    %4 = tpu.assume_multiple %3, 128 : i32
    %c0_5 = arith.constant 0 : index
    %5 = arith.index_cast %4 : i32 to index
    %6 = vector.load %arg1[%c0_5, %5] : memref<2x512xf32, #tpu.memory_space<vmem>>, vector<2x256xf32>
    %7 = vector.extract_strided_slice %0 {offsets = [0, 0], sizes = [64, 1], strides = [1, 1]} : vector<64x2xf32> to vector<64x1xf32>
    %8 = vector.extract_strided_slice %6 {offsets = [0, 0], sizes = [1, 256], strides = [1, 1]} : vector<2x256xf32> to vector<1x256xf32>
    %9 = vector.broadcast %7 : vector<64x1xf32> to vector<64x256xf32>
    %10 = vector.broadcast %8 : vector<1x256xf32> to vector<64x256xf32>
    %11 = arith.mulf %9, %10 : vector<64x256xf32>
    %12 = vector.extract_strided_slice %0 {offsets = [0, 1], sizes = [64, 1], strides = [1, 1]} : vector<64x2xf32> to vector<64x1xf32>
    %13 = vector.extract_strided_slice %6 {offsets = [1, 0], sizes = [1, 256], strides = [1, 1]} : vector<2x256xf32> to vector<1x256xf32>
    %14 = vector.broadcast %12 : vector<64x1xf32> to vector<64x256xf32>
    %15 = vector.broadcast %13 : vector<1x256xf32> to vector<64x256xf32>
    %16 = arith.mulf %14, %15 : vector<64x256xf32>
    %17 = arith.addf %11, %16 : vector<64x256xf32>
    %c0_6 = arith.constant 0 : index
    %c0_7 = arith.constant 0 : index
    %18 = vector.load %arg5[%c0_6, %c0_7] : memref<64x5xf32, #tpu.memory_space<vmem>>, vector<64x1xf32>
    %19 = vector.broadcast %18 : vector<64x1xf32> to vector<64x256xf32>
    %20 = arith.addf %17, %19 : vector<64x256xf32>
    %cst = arith.constant 0.000000e+00 : f32
    %21 = vector.broadcast %cst : f32 to vector<64x256xf32>
    %22 = arith.cmpf ogt, %20, %21 : vector<64x256xf32>
    %cst_8 = arith.constant 0.000000e+00 : f32
    %23 = vector.broadcast %cst_8 : f32 to vector<64x256xf32>
    %24 = arith.minimumf %20, %23 : vector<64x256xf32>
    %25 = math.exp %24 : vector<64x256xf32>
    %cst_9 = arith.constant 1.000000e+00 : f32
    %26 = vector.broadcast %cst_9 : f32 to vector<64x256xf32>
    %27 = arith.subf %25, %26 : vector<64x256xf32>
    %28 = arith.select %22, %20, %27 : vector<64x256xi1>, vector<64x256xf32>
    %c0_10 = arith.constant 0 : index
    %c0_11 = arith.constant 0 : index
    %c0_12 = arith.constant 0 : index
    %29 = vector.load %arg3[%c0_10, %c0_11, %c0_12] : memref<4x64x64xf32, #tpu.memory_space<vmem>>, vector<1x64x64xf32>
    %30 = vector.shape_cast %29 : vector<1x64x64xf32> to vector<64x64xf32>
    %cst_13 = arith.constant dense<0.000000e+00> : vector<64x256xf32>
    %31 = tpu.matmul %30, %28, %cst_13 {dimension_numbers = #tpu.dot_dimension_numbers<[1], [0], [0], [1], [0, 0, 1, 1], [], []>} : vector<64x64xf32>, vector<64x256xf32>, vector<64x256xf32> -> vector<64x256xf32>
    %c0_14 = arith.constant 0 : index
    %c1 = arith.constant 1 : index
    %32 = vector.load %arg5[%c0_14, %c1] : memref<64x5xf32, #tpu.memory_space<vmem>>, vector<64x1xf32>
    %33 = vector.broadcast %32 : vector<64x1xf32> to vector<64x256xf32>
    %34 = arith.addf %31, %33 : vector<64x256xf32>
    %cst_15 = arith.constant 0.000000e+00 : f32
    %35 = vector.broadcast %cst_15 : f32 to vector<64x256xf32>
    %36 = arith.cmpf ogt, %34, %35 : vector<64x256xf32>
    %cst_16 = arith.constant 0.000000e+00 : f32
    %37 = vector.broadcast %cst_16 : f32 to vector<64x256xf32>
    %38 = arith.minimumf %34, %37 : vector<64x256xf32>
    %39 = math.exp %38 : vector<64x256xf32>
    %cst_17 = arith.constant 1.000000e+00 : f32
    %40 = vector.broadcast %cst_17 : f32 to vector<64x256xf32>
    %41 = arith.subf %39, %40 : vector<64x256xf32>
    %42 = arith.select %36, %34, %41 : vector<64x256xi1>, vector<64x256xf32>
    %43 = arith.addf %28, %42 : vector<64x256xf32>
    %c1_18 = arith.constant 1 : index
    %c0_19 = arith.constant 0 : index
    %c0_20 = arith.constant 0 : index
    %44 = vector.load %arg3[%c1_18, %c0_19, %c0_20] : memref<4x64x64xf32, #tpu.memory_space<vmem>>, vector<1x64x64xf32>
    %45 = vector.shape_cast %44 : vector<1x64x64xf32> to vector<64x64xf32>
    %cst_21 = arith.constant dense<0.000000e+00> : vector<64x256xf32>
    %46 = tpu.matmul %45, %43, %cst_21 {dimension_numbers = #tpu.dot_dimension_numbers<[1], [0], [0], [1], [0, 0, 1, 1], [], []>} : vector<64x64xf32>, vector<64x256xf32>, vector<64x256xf32> -> vector<64x256xf32>
    %c0_22 = arith.constant 0 : index
    %c2 = arith.constant 2 : index
    %47 = vector.load %arg5[%c0_22, %c2] : memref<64x5xf32, #tpu.memory_space<vmem>>, vector<64x1xf32>
    %48 = vector.broadcast %47 : vector<64x1xf32> to vector<64x256xf32>
    %49 = arith.addf %46, %48 : vector<64x256xf32>
    %cst_23 = arith.constant 0.000000e+00 : f32
    %50 = vector.broadcast %cst_23 : f32 to vector<64x256xf32>
    %51 = arith.cmpf ogt, %49, %50 : vector<64x256xf32>
    %cst_24 = arith.constant 0.000000e+00 : f32
    %52 = vector.broadcast %cst_24 : f32 to vector<64x256xf32>
    %53 = arith.minimumf %49, %52 : vector<64x256xf32>
    %54 = math.exp %53 : vector<64x256xf32>
    %cst_25 = arith.constant 1.000000e+00 : f32
    %55 = vector.broadcast %cst_25 : f32 to vector<64x256xf32>
    %56 = arith.subf %54, %55 : vector<64x256xf32>
    %57 = arith.select %51, %49, %56 : vector<64x256xi1>, vector<64x256xf32>
    %58 = arith.addf %43, %57 : vector<64x256xf32>
    %c2_26 = arith.constant 2 : index
    %c0_27 = arith.constant 0 : index
    %c0_28 = arith.constant 0 : index
    %59 = vector.load %arg3[%c2_26, %c0_27, %c0_28] : memref<4x64x64xf32, #tpu.memory_space<vmem>>, vector<1x64x64xf32>
    %60 = vector.shape_cast %59 : vector<1x64x64xf32> to vector<64x64xf32>
    %cst_29 = arith.constant dense<0.000000e+00> : vector<64x256xf32>
    %61 = tpu.matmul %60, %58, %cst_29 {dimension_numbers = #tpu.dot_dimension_numbers<[1], [0], [0], [1], [0, 0, 1, 1], [], []>} : vector<64x64xf32>, vector<64x256xf32>, vector<64x256xf32> -> vector<64x256xf32>
    %c0_30 = arith.constant 0 : index
    %c3 = arith.constant 3 : index
    %62 = vector.load %arg5[%c0_30, %c3] : memref<64x5xf32, #tpu.memory_space<vmem>>, vector<64x1xf32>
    %63 = vector.broadcast %62 : vector<64x1xf32> to vector<64x256xf32>
    %64 = arith.addf %61, %63 : vector<64x256xf32>
    %cst_31 = arith.constant 0.000000e+00 : f32
    %65 = vector.broadcast %cst_31 : f32 to vector<64x256xf32>
    %66 = arith.cmpf ogt, %64, %65 : vector<64x256xf32>
    %cst_32 = arith.constant 0.000000e+00 : f32
    %67 = vector.broadcast %cst_32 : f32 to vector<64x256xf32>
    %68 = arith.minimumf %64, %67 : vector<64x256xf32>
    %69 = math.exp %68 : vector<64x256xf32>
    %cst_33 = arith.constant 1.000000e+00 : f32
    %70 = vector.broadcast %cst_33 : f32 to vector<64x256xf32>
    %71 = arith.subf %69, %70 : vector<64x256xf32>
    %72 = arith.select %66, %64, %71 : vector<64x256xi1>, vector<64x256xf32>
    %73 = arith.addf %58, %72 : vector<64x256xf32>
    %c3_34 = arith.constant 3 : index
    %c0_35 = arith.constant 0 : index
    %c0_36 = arith.constant 0 : index
    %74 = vector.load %arg3[%c3_34, %c0_35, %c0_36] : memref<4x64x64xf32, #tpu.memory_space<vmem>>, vector<1x64x64xf32>
    %75 = vector.shape_cast %74 : vector<1x64x64xf32> to vector<64x64xf32>
    %cst_37 = arith.constant dense<0.000000e+00> : vector<64x256xf32>
    %76 = tpu.matmul %75, %73, %cst_37 {dimension_numbers = #tpu.dot_dimension_numbers<[1], [0], [0], [1], [0, 0, 1, 1], [], []>} : vector<64x64xf32>, vector<64x256xf32>, vector<64x256xf32> -> vector<64x256xf32>
    %c0_38 = arith.constant 0 : index
    %c4 = arith.constant 4 : index
    %77 = vector.load %arg5[%c0_38, %c4] : memref<64x5xf32, #tpu.memory_space<vmem>>, vector<64x1xf32>
    %78 = vector.broadcast %77 : vector<64x1xf32> to vector<64x256xf32>
    %79 = arith.addf %76, %78 : vector<64x256xf32>
    %cst_39 = arith.constant 0.000000e+00 : f32
    %80 = vector.broadcast %cst_39 : f32 to vector<64x256xf32>
    %81 = arith.cmpf ogt, %79, %80 : vector<64x256xf32>
    %cst_40 = arith.constant 0.000000e+00 : f32
    %82 = vector.broadcast %cst_40 : f32 to vector<64x256xf32>
    %83 = arith.minimumf %79, %82 : vector<64x256xf32>
    %84 = math.exp %83 : vector<64x256xf32>
    %cst_41 = arith.constant 1.000000e+00 : f32
    %85 = vector.broadcast %cst_41 : f32 to vector<64x256xf32>
    %86 = arith.subf %84, %85 : vector<64x256xf32>
    %87 = arith.select %81, %79, %86 : vector<64x256xi1>, vector<64x256xf32>
    %88 = arith.addf %73, %87 : vector<64x256xf32>
    %cst_42 = arith.constant dense<0.000000e+00> : vector<16x256xf32>
    %89 = tpu.matmul %1, %88, %cst_42 {dimension_numbers = #tpu.dot_dimension_numbers<[1], [0], [0], [1], [0, 0, 1, 1], [], []>} : vector<16x64xf32>, vector<64x256xf32>, vector<16x256xf32> -> vector<16x256xf32>
    %90 = vector.broadcast %2 : vector<16x1xf32> to vector<16x256xf32>
    %91 = arith.addf %89, %90 : vector<16x256xf32>
    %c0_43 = arith.constant 0 : index
    %92 = arith.index_cast %4 : i32 to index
    %93 = vector.load %arg7[%c0_43, %92] : memref<16x512xf32, #tpu.memory_space<vmem>>, vector<16x256xf32>
    tpu.vector_store %arg7[%c0_43, %92], %91 {strides = array<i32>} : memref<16x512xf32, #tpu.memory_space<vmem>>, vector<16x256xf32>,
    %c1_i32 = arith.constant 1 : i32
    %c256_i32_44 = arith.constant 256 : i32
    %94 = arith.muli %c1_i32, %c256_i32_44 : i32
    %95 = tpu.assume_multiple %94, 128 : i32
    %c0_45 = arith.constant 0 : index
    %96 = arith.index_cast %95 : i32 to index
    %97 = vector.load %arg1[%c0_45, %96] : memref<2x512xf32, #tpu.memory_space<vmem>>, vector<2x256xf32>
    %98 = vector.extract_strided_slice %0 {offsets = [0, 0], sizes = [64, 1], strides = [1, 1]} : vector<64x2xf32> to vector<64x1xf32>
    %99 = vector.extract_strided_slice %97 {offsets = [0, 0], sizes = [1, 256], strides = [1, 1]} : vector<2x256xf32> to vector<1x256xf32>
    %100 = vector.broadcast %98 : vector<64x1xf32> to vector<64x256xf32>
    %101 = vector.broadcast %99 : vector<1x256xf32> to vector<64x256xf32>
    %102 = arith.mulf %100, %101 : vector<64x256xf32>
    %103 = vector.extract_strided_slice %0 {offsets = [0, 1], sizes = [64, 1], strides = [1, 1]} : vector<64x2xf32> to vector<64x1xf32>
    %104 = vector.extract_strided_slice %97 {offsets = [1, 0], sizes = [1, 256], strides = [1, 1]} : vector<2x256xf32> to vector<1x256xf32>
    %105 = vector.broadcast %103 : vector<64x1xf32> to vector<64x256xf32>
    %106 = vector.broadcast %104 : vector<1x256xf32> to vector<64x256xf32>
    %107 = arith.mulf %105, %106 : vector<64x256xf32>
    %108 = arith.addf %102, %107 : vector<64x256xf32>
    %c0_46 = arith.constant 0 : index
    %c0_47 = arith.constant 0 : index
    %109 = vector.load %arg5[%c0_46, %c0_47] : memref<64x5xf32, #tpu.memory_space<vmem>>, vector<64x1xf32>
    %110 = vector.broadcast %109 : vector<64x1xf32> to vector<64x256xf32>
    %111 = arith.addf %108, %110 : vector<64x256xf32>
    %cst_48 = arith.constant 0.000000e+00 : f32
    %112 = vector.broadcast %cst_48 : f32 to vector<64x256xf32>
    %113 = arith.cmpf ogt, %111, %112 : vector<64x256xf32>
    %cst_49 = arith.constant 0.000000e+00 : f32
    %114 = vector.broadcast %cst_49 : f32 to vector<64x256xf32>
    %115 = arith.minimumf %111, %114 : vector<64x256xf32>
    %116 = math.exp %115 : vector<64x256xf32>
    %cst_50 = arith.constant 1.000000e+00 : f32
    %117 = vector.broadcast %cst_50 : f32 to vector<64x256xf32>
    %118 = arith.subf %116, %117 : vector<64x256xf32>
    %119 = arith.select %113, %111, %118 : vector<64x256xi1>, vector<64x256xf32>
    %c0_51 = arith.constant 0 : index
    %c0_52 = arith.constant 0 : index
    %c0_53 = arith.constant 0 : index
    %120 = vector.load %arg3[%c0_51, %c0_52, %c0_53] : memref<4x64x64xf32, #tpu.memory_space<vmem>>, vector<1x64x64xf32>
    %121 = vector.shape_cast %120 : vector<1x64x64xf32> to vector<64x64xf32>
    %cst_54 = arith.constant dense<0.000000e+00> : vector<64x256xf32>
    %122 = tpu.matmul %121, %119, %cst_54 {dimension_numbers = #tpu.dot_dimension_numbers<[1], [0], [0], [1], [0, 0, 1, 1], [], []>} : vector<64x64xf32>, vector<64x256xf32>, vector<64x256xf32> -> vector<64x256xf32>
    %c0_55 = arith.constant 0 : index
    %c1_56 = arith.constant 1 : index
    %123 = vector.load %arg5[%c0_55, %c1_56] : memref<64x5xf32, #tpu.memory_space<vmem>>, vector<64x1xf32>
    %124 = vector.broadcast %123 : vector<64x1xf32> to vector<64x256xf32>
    %125 = arith.addf %122, %124 : vector<64x256xf32>
    %cst_57 = arith.constant 0.000000e+00 : f32
    %126 = vector.broadcast %cst_57 : f32 to vector<64x256xf32>
    %127 = arith.cmpf ogt, %125, %126 : vector<64x256xf32>
    %cst_58 = arith.constant 0.000000e+00 : f32
    %128 = vector.broadcast %cst_58 : f32 to vector<64x256xf32>
    %129 = arith.minimumf %125, %128 : vector<64x256xf32>
    %130 = math.exp %129 : vector<64x256xf32>
    %cst_59 = arith.constant 1.000000e+00 : f32
    %131 = vector.broadcast %cst_59 : f32 to vector<64x256xf32>
    %132 = arith.subf %130, %131 : vector<64x256xf32>
    %133 = arith.select %127, %125, %132 : vector<64x256xi1>, vector<64x256xf32>
    %134 = arith.addf %119, %133 : vector<64x256xf32>
    %c1_60 = arith.constant 1 : index
    %c0_61 = arith.constant 0 : index
    %c0_62 = arith.constant 0 : index
    %135 = vector.load %arg3[%c1_60, %c0_61, %c0_62] : memref<4x64x64xf32, #tpu.memory_space<vmem>>, vector<1x64x64xf32>
    %136 = vector.shape_cast %135 : vector<1x64x64xf32> to vector<64x64xf32>
    %cst_63 = arith.constant dense<0.000000e+00> : vector<64x256xf32>
    %137 = tpu.matmul %136, %134, %cst_63 {dimension_numbers = #tpu.dot_dimension_numbers<[1], [0], [0], [1], [0, 0, 1, 1], [], []>} : vector<64x64xf32>, vector<64x256xf32>, vector<64x256xf32> -> vector<64x256xf32>
    %c0_64 = arith.constant 0 : index
    %c2_65 = arith.constant 2 : index
    %138 = vector.load %arg5[%c0_64, %c2_65] : memref<64x5xf32, #tpu.memory_space<vmem>>, vector<64x1xf32>
    %139 = vector.broadcast %138 : vector<64x1xf32> to vector<64x256xf32>
    %140 = arith.addf %137, %139 : vector<64x256xf32>
    %cst_66 = arith.constant 0.000000e+00 : f32
    %141 = vector.broadcast %cst_66 : f32 to vector<64x256xf32>
    %142 = arith.cmpf ogt, %140, %141 : vector<64x256xf32>
    %cst_67 = arith.constant 0.000000e+00 : f32
    %143 = vector.broadcast %cst_67 : f32 to vector<64x256xf32>
    %144 = arith.minimumf %140, %143 : vector<64x256xf32>
    %145 = math.exp %144 : vector<64x256xf32>
    %cst_68 = arith.constant 1.000000e+00 : f32
    %146 = vector.broadcast %cst_68 : f32 to vector<64x256xf32>
    %147 = arith.subf %145, %146 : vector<64x256xf32>
    %148 = arith.select %142, %140, %147 : vector<64x256xi1>, vector<64x256xf32>
    %149 = arith.addf %134, %148 : vector<64x256xf32>
    %c2_69 = arith.constant 2 : index
    %c0_70 = arith.constant 0 : index
    %c0_71 = arith.constant 0 : index
    %150 = vector.load %arg3[%c2_69, %c0_70, %c0_71] : memref<4x64x64xf32, #tpu.memory_space<vmem>>, vector<1x64x64xf32>
    %151 = vector.shape_cast %150 : vector<1x64x64xf32> to vector<64x64xf32>
    %cst_72 = arith.constant dense<0.000000e+00> : vector<64x256xf32>
    %152 = tpu.matmul %151, %149, %cst_72 {dimension_numbers = #tpu.dot_dimension_numbers<[1], [0], [0], [1], [0, 0, 1, 1], [], []>} : vector<64x64xf32>, vector<64x256xf32>, vector<64x256xf32> -> vector<64x256xf32>
    %c0_73 = arith.constant 0 : index
    %c3_74 = arith.constant 3 : index
    %153 = vector.load %arg5[%c0_73, %c3_74] : memref<64x5xf32, #tpu.memory_space<vmem>>, vector<64x1xf32>
    %154 = vector.broadcast %153 : vector<64x1xf32> to vector<64x256xf32>
    %155 = arith.addf %152, %154 : vector<64x256xf32>
    %cst_75 = arith.constant 0.000000e+00 : f32
    %156 = vector.broadcast %cst_75 : f32 to vector<64x256xf32>
    %157 = arith.cmpf ogt, %155, %156 : vector<64x256xf32>
    %cst_76 = arith.constant 0.000000e+00 : f32
    %158 = vector.broadcast %cst_76 : f32 to vector<64x256xf32>
    %159 = arith.minimumf %155, %158 : vector<64x256xf32>
    %160 = math.exp %159 : vector<64x256xf32>
    %cst_77 = arith.constant 1.000000e+00 : f32
    %161 = vector.broadcast %cst_77 : f32 to vector<64x256xf32>
    %162 = arith.subf %160, %161 : vector<64x256xf32>
    %163 = arith.select %157, %155, %162 : vector<64x256xi1>, vector<64x256xf32>
    %164 = arith.addf %149, %163 : vector<64x256xf32>
    %c3_78 = arith.constant 3 : index
    %c0_79 = arith.constant 0 : index
    %c0_80 = arith.constant 0 : index
    %165 = vector.load %arg3[%c3_78, %c0_79, %c0_80] : memref<4x64x64xf32, #tpu.memory_space<vmem>>, vector<1x64x64xf32>
    %166 = vector.shape_cast %165 : vector<1x64x64xf32> to vector<64x64xf32>
    %cst_81 = arith.constant dense<0.000000e+00> : vector<64x256xf32>
    %167 = tpu.matmul %166, %164, %cst_81 {dimension_numbers = #tpu.dot_dimension_numbers<[1], [0], [0], [1], [0, 0, 1, 1], [], []>} : vector<64x64xf32>, vector<64x256xf32>, vector<64x256xf32> -> vector<64x256xf32>
    %c0_82 = arith.constant 0 : index
    %c4_83 = arith.constant 4 : index
    %168 = vector.load %arg5[%c0_82, %c4_83] : memref<64x5xf32, #tpu.memory_space<vmem>>, vector<64x1xf32>
    %169 = vector.broadcast %168 : vector<64x1xf32> to vector<64x256xf32>
    %170 = arith.addf %167, %169 : vector<64x256xf32>
    %cst_84 = arith.constant 0.000000e+00 : f32
    %171 = vector.broadcast %cst_84 : f32 to vector<64x256xf32>
    %172 = arith.cmpf ogt, %170, %171 : vector<64x256xf32>
    %cst_85 = arith.constant 0.000000e+00 : f32
    %173 = vector.broadcast %cst_85 : f32 to vector<64x256xf32>
    %174 = arith.minimumf %170, %173 : vector<64x256xf32>
    %175 = math.exp %174 : vector<64x256xf32>
    %cst_86 = arith.constant 1.000000e+00 : f32
    %176 = vector.broadcast %cst_86 : f32 to vector<64x256xf32>
    %177 = arith.subf %175, %176 : vector<64x256xf32>
    %178 = arith.select %172, %170, %177 : vector<64x256xi1>, vector<64x256xf32>
    %179 = arith.addf %164, %178 : vector<64x256xf32>
    %cst_87 = arith.constant dense<0.000000e+00> : vector<16x256xf32>
    %180 = tpu.matmul %1, %179, %cst_87 {dimension_numbers = #tpu.dot_dimension_numbers<[1], [0], [0], [1], [0, 0, 1, 1], [], []>} : vector<16x64xf32>, vector<64x256xf32>, vector<16x256xf32> -> vector<16x256xf32>
    %181 = vector.broadcast %2 : vector<16x1xf32> to vector<16x256xf32>
    %182 = arith.addf %180, %181 : vector<16x256xf32>
    %c0_88 = arith.constant 0 : index
    %183 = arith.index_cast %95 : i32 to index
    %184 = vector.load %arg7[%c0_88, %183] : memref<16x512xf32, #tpu.memory_space<vmem>>, vector<16x256xf32>
    tpu.vector_store %arg7[%c0_88, %183], %182 {strides = array<i32>} : memref<16x512xf32, #tpu.memory_space<vmem>>, vector<16x256xf32>,
    %c2_i32 = arith.constant 2 : i32
    return
  }
  func.func @transform_0(%arg0: i32) -> (i32, i32) {
    %c0_i32 = arith.constant 0 : i32
    %c0_i32_0 = arith.constant 0 : i32
    return %c0_i32, %arg0 : i32, i32
  }
  func.func @transform_1(%arg0: i32) -> (i32, i32) {
    %c0_i32 = arith.constant 0 : i32
    %c0_i32_0 = arith.constant 0 : i32
    %c0_i32_1 = arith.constant 0 : i32
    return %c0_i32, %c0_i32_0 : i32, i32
  }
  func.func @transform_2(%arg0: i32) -> (i32, i32, i32) {
    %c0_i32 = arith.constant 0 : i32
    %c0_i32_0 = arith.constant 0 : i32
    %c0_i32_1 = arith.constant 0 : i32
    %c0_i32_2 = arith.constant 0 : i32
    return %c0_i32, %c0_i32_0, %c0_i32_1 : i32, i32, i32
  }
  func.func @transform_3(%arg0: i32) -> (i32, i32) {
    %c0_i32 = arith.constant 0 : i32
    %c0_i32_0 = arith.constant 0 : i32
    %c0_i32_1 = arith.constant 0 : i32
    return %c0_i32, %c0_i32_0 : i32, i32
  }
  func.func @transform_4(%arg0: i32) -> (i32, i32) {
    %c0_i32 = arith.constant 0 : i32
    %c0_i32_0 = arith.constant 0 : i32
    %c0_i32_1 = arith.constant 0 : i32
    return %c0_i32, %c0_i32_0 : i32, i32
  }
  func.func @transform_5(%arg0: i32) -> (i32, i32) {
    %c0_i32 = arith.constant 0 : i32
    %c0_i32_0 = arith.constant 0 : i32
    %c0_i32_1 = arith.constant 0 : i32
    return %c0_i32, %c0_i32_0 : i32, i32
  }
  func.func @transform_6(%arg0: i32) -> (i32, i32) {
    %c0_i32 = arith.constant 0 : i32
    %c0_i32_0 = arith.constant 0 : i32
    return %c0_i32, %arg0 : i32, i32
  }
}

</mosaic_0001>

<llo_original>
// kernel: tpu_custom_call.1
$region0: #{tpu_custom_call.1}
  #allocation0 [shape = 'u32[]', space=smem, size = 0x4, offset = 0x4, fixed_abs, tag = 'smem constant byte address 0x4 - core index']
  #allocation1 [shape = 'u32[144,128]{1,0:T(1,128)}', space=vmem, size = 0x12000, scoped, tag = 'internal scratch']
  %s0 = inlined_call_operand.vmem [shape: f32[2,512], index: 0, kind: input, shape index: {}]
  %s1 = inlined_call_operand.vmem [shape: f32[64,2], index: 1, kind: input, shape index: {}]
  %s2 = inlined_call_operand.hbm [shape: f32[4,64,64], index: 2, kind: input, shape index: {}]
  %s3 = inlined_call_operand.vmem [shape: f32[16,64], index: 3, kind: input, shape index: {}]
  %s4 = inlined_call_operand.vmem [shape: f32[64,5], index: 4, kind: input, shape index: {}]
  %s5 = inlined_call_operand.vmem [shape: f32[16,1], index: 5, kind: input, shape index: {}]
  %s6 = inlined_call_operand.hbm [shape: f32[16,512], index: 6, kind: output, shape index: {}]
  %s7 = sld [smem:[#allocation0]]
  $region38: #{tpu_custom_call.1} parent=0
    _
  %s9 = ssub.s32 1, %s7
  %s10 = scalar_select 0, %s9, %s7
  $region1: #{tpu_custom_call.1} parent=0
    #allocation2 [shape = 'u8[131072]{0}', space=vmem, size = 0x20000, scoped, tag = 'input window, operand 2, single buffered']
    #allocation3 [shape = 's32[1]{0}', space=sflag, size = 0x4, scoped, tag = 'scoped memory for tpu_custom_call.1']
    #allocation4 [shape = 's32[1]{0}', space=sflag, size = 0x4, scoped, tag = 'scoped memory for tpu_custom_call.1']
    #allocation5 [shape = 'u8[32768]{0}', space=vmem, size = 0x8000, scoped, tag = 'output window, operand 0, single buffered']
    %11 = vsyncpa [#allocation3], 0
    %12 = vsyncpa [#allocation4], 0
    // Predicated region
    $region2: #{tpu_custom_call.1} parent=1 // pred_check
      _
    $region3: #{tpu_custom_call.1} parent=1 // pred_check_branch
      %14 = sbr.rel (0) target = $region5
    $region4: #{tpu_custom_call.1} parent=1 // pred_region
      _
    $region5: #{tpu_custom_call.1} parent=1 // pred_fallthru
      _
    // Predicated region
    $region6: #{tpu_custom_call.1} parent=1 // pred_check
      _
    $region7: #{tpu_custom_call.1} parent=1 // pred_check_branch
      %16 = sbr.rel (0) target = $region9
    $region8: #{tpu_custom_call.1} parent=1 // pred_region
      _
    $region9: #{tpu_custom_call.1} parent=1 // pred_fallthru
      _
    // Predicated region
    $region10: #{tpu_custom_call.1} parent=1 // pred_check
      _
    $region11: #{tpu_custom_call.1} parent=1 // pred_check_branch
      %18 = sbr.rel (0) target = $region13
    $region12: #{tpu_custom_call.1} parent=1 // pred_region
      %s20 = ssub.s32 4096, 4096
      %21 = vsyncadd [#allocation3], %s20
      %s22 = sshll.u32 [#allocation2], 4
      %s23 = int_to_ptr.vmem [resolvable:$true] %s22
      %28 = dma.hbm_to_vmem [thread:$0]  %s2, 4096, %s23, [#allocation3], 128, 128, 8
    $region13: #{tpu_custom_call.1} parent=1 // pred_fallthru
      _
    // Predicated region
    $region14: #{tpu_custom_call.1} parent=1 // pred_check
      _
    $region15: #{tpu_custom_call.1} parent=1 // pred_check_branch
      %30 = sbr.rel (0) target = $region17
    $region16: #{tpu_custom_call.1} parent=1 // pred_region
      _
    $region17: #{tpu_custom_call.1} parent=1 // pred_fallthru
      _
    // Predicated region
    $region18: #{tpu_custom_call.1} parent=1 // pred_check
      _
    $region19: #{tpu_custom_call.1} parent=1 // pred_check_branch
      %32 = sbr.rel (0) target = $region21
    $region20: #{tpu_custom_call.1} parent=1 // pred_region
      _
    $region21: #{tpu_custom_call.1} parent=1 // pred_fallthru
      _
    // Predicated region
    $region22: #{tpu_custom_call.1} parent=1 // pred_check
      _
    $region23: #{tpu_custom_call.1} parent=1 // pred_check_branch
      %34 = sbr.rel (0) target = $region25
    $region24: #{tpu_custom_call.1} parent=1 // pred_region
      _
    $region25: #{tpu_custom_call.1} parent=1 // pred_fallthru
      _
    // Predicated region
    $region26: #{tpu_custom_call.1} parent=1 // pred_check
      _
    $region27: #{tpu_custom_call.1} parent=1 // pred_check_branch
      %36 = sbr.rel (0) target = $region29
    $region28: #{tpu_custom_call.1} parent=1 // pred_region
      %37 = dma.done [#allocation3], 4096
    $region29: #{tpu_custom_call.1} parent=1 // pred_fallthru
      _
    %v38 = vld [vmem:[%s1] sm:$0xff]
    %v39 = vld [vmem:[%s1 + $0x8] sm:$0xff]
    %v40 = vld [vmem:[%s1 + $0x10] sm:$0xff]
    %v41 = vld [vmem:[%s1 + $0x18] sm:$0xff]
    %v42 = vld [vmem:[%s1 + $0x20] sm:$0xff]
    %v43 = vld [vmem:[%s1 + $0x28] sm:$0xff]
    %v44 = vld [vmem:[%s1 + $0x30] sm:$0xff]
    %v45 = vld [vmem:[%s1 + $0x38] sm:$0xff]
    %v46 = vld [vmem:[%s3] sm:$0xff]
    %v47 = vld [vmem:[%s3 + $0x8] sm:$0xff]
    %v48 = vld [vmem:[%s5] sm:$0xff]
    %v49 = vld [vmem:[%s5 + $0x8] sm:$0xff]
    %v50 = vld [vmem:[%s0] sm:$0xf]
    %52 = vset.pattern.permute.xlu0 0
    %53 = vperm.xlu0 %52, %v38
    %v54 = vpop.permute.xlu0 %53
    %57 = vset.pattern.permute.xlu0 0
    %58 = vperm.xlu0 %57, %v39
    %v59 = vpop.permute.xlu0 %58
    %62 = vset.pattern.permute.xlu0 0
    %63 = vperm.xlu0 %62, %v40
    %v64 = vpop.permute.xlu0 %63
    %67 = vset.pattern.permute.xlu0 0
    %68 = vperm.xlu0 %67, %v41
    %v69 = vpop.permute.xlu0 %68
    %72 = vset.pattern.permute.xlu0 0
    %73 = vperm.xlu0 %72, %v42
    %v74 = vpop.permute.xlu0 %73
    %77 = vset.pattern.permute.xlu0 0
    %78 = vperm.xlu0 %77, %v43
    %v79 = vpop.permute.xlu0 %78
    %82 = vset.pattern.permute.xlu0 0
    %83 = vperm.xlu0 %82, %v44
    %v84 = vpop.permute.xlu0 %83
    %87 = vset.pattern.permute.xlu0 0
    %88 = vperm.xlu0 %87, %v45
    %v89 = vpop.permute.xlu0 %88
    %v92 = vlaneseq
    %v93 = vshrl.u32 %v92, 7
    %v94 = vsub.s32 0, %v93
    %v95 = vrot.slane %v50, %v94
    %v96 = vlaneseq
    %v97 = vshrl.u32 %v96, 7
    %v98 = vsub.s32 2, %v97
    %v99 = vrot.slane %v50, %v98
    %v102 = vlaneseq
    %v103 = vshrl.u32 %v102, 7
    %v104 = vsub.s32 0, %v103
    %v105 = vrot.slane %v95, %v104
    %v106 = vlaneseq
    %v107 = vshrl.u32 %v106, 7
    %v108 = vsub.s32 0, %v107
    %v109 = vrot.slane %v99, %v108
    %v110 = vmul.f32 %v54, %v105
    %v111 = vmul.f32 %v54, %v109
    %v112 = vmul.f32 %v59, %v105
    %v113 = vmul.f32 %v59, %v109
    %v114 = vmul.f32 %v64, %v105
    %v115 = vmul.f32 %v64, %v109
    %v116 = vmul.f32 %v69, %v105
    %v117 = vmul.f32 %v69, %v109
    %v118 = vmul.f32 %v74, %v105
    %v119 = vmul.f32 %v74, %v109
    %v120 = vmul.f32 %v79, %v105
    %v121 = vmul.f32 %v79, %v109
    %v122 = vmul.f32 %v84, %v105
    %v123 = vmul.f32 %v84, %v109
    %v124 = vmul.f32 %v89, %v105
    %v125 = vmul.f32 %v89, %v109
    %126 = vset.pattern.permute.xlu0 1
    %127 = vperm.xlu0 %126, %v38
    %v128 = vpop.permute.xlu0 %127
    %130 = vset.pattern.permute.xlu0 1
    %131 = vperm.xlu0 %130, %v39
    %v132 = vpop.permute.xlu0 %131
    %134 = vset.pattern.permute.xlu0 1
    %135 = vperm.xlu0 %134, %v40
    %v136 = vpop.permute.xlu0 %135
    %138 = vset.pattern.permute.xlu0 1
    %139 = vperm.xlu0 %138, %v41
    %v140 = vpop.permute.xlu0 %139
    %142 = vset.pattern.permute.xlu0 1
    %143 = vperm.xlu0 %142, %v42
    %v144 = vpop.permute.xlu0 %143
    %146 = vset.pattern.permute.xlu0 1
    %147 = vperm.xlu0 %146, %v43
    %v148 = vpop.permute.xlu0 %147
    %150 = vset.pattern.permute.xlu0 1
    %151 = vperm.xlu0 %150, %v44
    %v152 = vpop.permute.xlu0 %151
    %154 = vset.pattern.permute.xlu0 1
    %155 = vperm.xlu0 %154, %v45
    %v156 = vpop.permute.xlu0 %155
    %v158 = vlaneseq
    %v159 = vshrl.u32 %v158, 7
    %v160 = vsub.s32 1, %v159
    %v161 = vrot.slane %v50, %v160
    %v162 = vlaneseq
    %v163 = vshrl.u32 %v162, 7
    %v164 = vsub.s32 3, %v163
    %v165 = vrot.slane %v50, %v164
    %v168 = vlaneseq
    %v169 = vshrl.u32 %v168, 7
    %v170 = vsub.s32 1, %v169
    %v171 = vrot.slane %v161, %v170
    %v172 = vlaneseq
    %v173 = vshrl.u32 %v172, 7
    %v174 = vsub.s32 1, %v173
    %v175 = vrot.slane %v165, %v174
    %v176 = vmul.f32 %v128, %v171
    %v177 = vmul.f32 %v128, %v175
    %v178 = vmul.f32 %v132, %v171
    %v179 = vmul.f32 %v132, %v175
    %v180 = vmul.f32 %v136, %v171
    %v181 = vmul.f32 %v136, %v175
    %v182 = vmul.f32 %v140, %v171
    %v183 = vmul.f32 %v140, %v175
    %v184 = vmul.f32 %v144, %v171
    %v185 = vmul.f32 %v144, %v175
    %v186 = vmul.f32 %v148, %v171
    %v187 = vmul.f32 %v148, %v175
    %v188 = vmul.f32 %v152, %v171
    %v189 = vmul.f32 %v152, %v175
    %v190 = vmul.f32 %v156, %v171
    %v191 = vmul.f32 %v156, %v175
    %v192 = vadd.f32 %v110, %v176
    %v193 = vadd.f32 %v111, %v177
    %v194 = vadd.f32 %v112, %v178
    %v195 = vadd.f32 %v113, %v179
    %v196 = vadd.f32 %v114, %v180
    %v197 = vadd.f32 %v115, %v181
    %v198 = vadd.f32 %v116, %v182
    %v199 = vadd.f32 %v117, %v183
    %v200 = vadd.f32 %v118, %v184
    %v201 = vadd.f32 %v119, %v185
    %v202 = vadd.f32 %v120, %v186
    %v203 = vadd.f32 %v121, %v187
    %v204 = vadd.f32 %v122, %v188
    %v205 = vadd.f32 %v123, %v189
    %v206 = vadd.f32 %v124, %v190
    %v207 = vadd.f32 %v125, %v191
    %v208 = vld [vmem:[%s4] sm:$0xff]
    %v209 = vld [vmem:[%s4 + $0x8] sm:$0xff]
    %v210 = vld [vmem:[%s4 + $0x10] sm:$0xff]
    %v211 = vld [vmem:[%s4 + $0x18] sm:$0xff]
    %v212 = vld [vmem:[%s4 + $0x20] sm:$0xff]
    %v213 = vld [vmem:[%s4 + $0x28] sm:$0xff]
    %v214 = vld [vmem:[%s4 + $0x30] sm:$0xff]
    %v215 = vld [vmem:[%s4 + $0x38] sm:$0xff]
    %217 = vset.pattern.permute.xlu0 0
    %218 = vperm.xlu0 %217, %v208
    %v219 = vpop.permute.xlu0 %218
    %222 = vset.pattern.permute.xlu0 0
    %223 = vperm.xlu0 %222, %v209
    %v224 = vpop.permute.xlu0 %223
    %227 = vset.pattern.permute.xlu0 0
    %228 = vperm.xlu0 %227, %v210
    %v229 = vpop.permute.xlu0 %228
    %232 = vset.pattern.permute.xlu0 0
    %233 = vperm.xlu0 %232, %v211
    %v234 = vpop.permute.xlu0 %233
    %237 = vset.pattern.permute.xlu0 0
    %238 = vperm.xlu0 %237, %v212
    %v239 = vpop.permute.xlu0 %238
    %242 = vset.pattern.permute.xlu0 0
    %243 = vperm.xlu0 %242, %v213
    %v244 = vpop.permute.xlu0 %243
    %247 = vset.pattern.permute.xlu0 0
    %248 = vperm.xlu0 %247, %v214
    %v249 = vpop.permute.xlu0 %248
    %252 = vset.pattern.permute.xlu0 0
    %253 = vperm.xlu0 %252, %v215
    %v254 = vpop.permute.xlu0 %253
    %v256 = vadd.f32 %v192, %v219
    %v257 = vadd.f32 %v193, %v219
    %v258 = vadd.f32 %v194, %v224
    %v259 = vadd.f32 %v195, %v224
    %v260 = vadd.f32 %v196, %v229
    %v261 = vadd.f32 %v197, %v229
    %v262 = vadd.f32 %v198, %v234
    %v263 = vadd.f32 %v199, %v234
    %v264 = vadd.f32 %v200, %v239
    %v265 = vadd.f32 %v201, %v239
    %v266 = vadd.f32 %v202, %v244
    %v267 = vadd.f32 %v203, %v244
    %v268 = vadd.f32 %v204, %v249
    %v269 = vadd.f32 %v205, %v249
    %v270 = vadd.f32 %v206, %v254
    %v271 = vadd.f32 %v207, %v254
    %vm272 = vcmp.gt.f32.partialorder %v256, 0.0
    %vm273 = vcmp.gt.f32.partialorder %v257, 0.0
    %vm274 = vcmp.gt.f32.partialorder %v258, 0.0
    %vm275 = vcmp.gt.f32.partialorder %v259, 0.0
    %vm276 = vcmp.gt.f32.partialorder %v260, 0.0
    %vm277 = vcmp.gt.f32.partialorder %v261, 0.0
    %vm278 = vcmp.gt.f32.partialorder %v262, 0.0
    %vm279 = vcmp.gt.f32.partialorder %v263, 0.0
    %vm280 = vcmp.gt.f32.partialorder %v264, 0.0
    %vm281 = vcmp.gt.f32.partialorder %v265, 0.0
    %vm282 = vcmp.gt.f32.partialorder %v266, 0.0
    %vm283 = vcmp.gt.f32.partialorder %v267, 0.0
    %vm284 = vcmp.gt.f32.partialorder %v268, 0.0
    %vm285 = vcmp.gt.f32.partialorder %v269, 0.0
    %vm286 = vcmp.gt.f32.partialorder %v270, 0.0
    %vm287 = vcmp.gt.f32.partialorder %v271, 0.0
    %v288 = vmin.f32 %v256, 0.0
    %v289 = vmin.f32 %v257, 0.0
    %v290 = vmin.f32 %v258, 0.0
    %v291 = vmin.f32 %v259, 0.0
    %v292 = vmin.f32 %v260, 0.0
    %v293 = vmin.f32 %v261, 0.0
    %v294 = vmin.f32 %v262, 0.0
    %v295 = vmin.f32 %v263, 0.0
    %v296 = vmin.f32 %v264, 0.0
    %v297 = vmin.f32 %v265, 0.0
    %v298 = vmin.f32 %v266, 0.0
    %v299 = vmin.f32 %v267, 0.0
    %v300 = vmin.f32 %v268, 0.0
    %v301 = vmin.f32 %v269, 0.0
    %v302 = vmin.f32 %v270, 0.0
    %v303 = vmin.f32 %v271, 0.0
    %v304 = vmul.f32 %v288, 1.442695
    %v305 = vpow.pop %v304
    %v306 = vmul.f32 %v289, 1.442695
    %v307 = vpow.pop %v306
    %v308 = vmul.f32 %v290, 1.442695
    %v309 = vpow.pop %v308
    %v310 = vmul.f32 %v291, 1.442695
    %v311 = vpow.pop %v310
    %v312 = vmul.f32 %v292, 1.442695
    %v313 = vpow.pop %v312
    %v314 = vmul.f32 %v293, 1.442695
    %v315 = vpow.pop %v314
    %v316 = vmul.f32 %v294, 1.442695
    %v317 = vpow.pop %v316
    %v318 = vmul.f32 %v295, 1.442695
    %v319 = vpow.pop %v318
    %v320 = vmul.f32 %v296, 1.442695
    %v321 = vpow.pop %v320
    %v322 = vmul.f32 %v297, 1.442695
    %v323 = vpow.pop %v322
    %v324 = vmul.f32 %v298, 1.442695
    %v325 = vpow.pop %v324
    %v326 = vmul.f32 %v299, 1.442695
    %v327 = vpow.pop %v326
    %v328 = vmul.f32 %v300, 1.442695
    %v329 = vpow.pop %v328
    %v330 = vmul.f32 %v301, 1.442695
    %v331 = vpow.pop %v330
    %v332 = vmul.f32 %v302, 1.442695
    %v333 = vpow.pop %v332
    %v334 = vmul.f32 %v303, 1.442695
    %v335 = vpow.pop %v334
    %v336 = vsub.f32 %v305, 1.0
    %v337 = vsub.f32 %v307, 1.0
    %v338 = vsub.f32 %v309, 1.0
    %v339 = vsub.f32 %v311, 1.0
    %v340 = vsub.f32 %v313, 1.0
    %v341 = vsub.f32 %v315, 1.0
    %v342 = vsub.f32 %v317, 1.0
    %v343 = vsub.f32 %v319, 1.0
    %v344 = vsub.f32 %v321, 1.0
    %v345 = vsub.f32 %v323, 1.0
    %v346 = vsub.f32 %v325, 1.0
    %v347 = vsub.f32 %v327, 1.0
    %v348 = vsub.f32 %v329, 1.0
    %v349 = vsub.f32 %v331, 1.0
    %v350 = vsub.f32 %v333, 1.0
    %v351 = vsub.f32 %v335, 1.0
    %v352 = vsel %vm272, %v256, %v336
    %v353 = vsel %vm273, %v257, %v337
    %v354 = vsel %vm274, %v258, %v338
    %v355 = vsel %vm275, %v259, %v339
    %v356 = vsel %vm276, %v260, %v340
    %v357 = vsel %vm277, %v261, %v341
    %v358 = vsel %vm278, %v262, %v342
    %v359 = vsel %vm279, %v263, %v343
    %v360 = vsel %vm280, %v264, %v344
    %v361 = vsel %vm281, %v265, %v345
    %v362 = vsel %vm282, %v266, %v346
    %v363 = vsel %vm283, %v267, %v347
    %v364 = vsel %vm284, %v268, %v348
    %v365 = vsel %vm285, %v269, %v349
    %v366 = vsel %vm286, %v270, %v350
    %v367 = vsel %vm287, %v271, %v351
    %v368 = vld [vmem:[#allocation2] sm:$0xff]
    %v369 = vld [vmem:[#allocation2 + $0x8] sm:$0xff]
    %v370 = vld [vmem:[#allocation2 + $0x10] sm:$0xff]
    %v371 = vld [vmem:[#allocation2 + $0x18] sm:$0xff]
    %v372 = vld [vmem:[#allocation2 + $0x20] sm:$0xff]
    %v373 = vld [vmem:[#allocation2 + $0x28] sm:$0xff]
    %v374 = vld [vmem:[#allocation2 + $0x30] sm:$0xff]
    %v375 = vld [vmem:[#allocation2 + $0x38] sm:$0xff]
    %376 = vset.pattern.permute.xlu0 1
    %377 = vperm.xlu0 %376, %v208
    %v378 = vpop.permute.xlu0 %377
    %380 = vset.pattern.permute.xlu0 1
    %381 = vperm.xlu0 %380, %v209
    %v382 = vpop.permute.xlu0 %381
    %384 = vset.pattern.permute.xlu0 1
    %385 = vperm.xlu0 %384, %v210
    %v386 = vpop.permute.xlu0 %385
    %388 = vset.pattern.permute.xlu0 1
    %389 = vperm.xlu0 %388, %v211
    %v390 = vpop.permute.xlu0 %389
    %392 = vset.pattern.permute.xlu0 1
    %393 = vperm.xlu0 %392, %v212
    %v394 = vpop.permute.xlu0 %393
    %396 = vset.pattern.permute.xlu0 1
    %397 = vperm.xlu0 %396, %v213
    %v398 = vpop.permute.xlu0 %397
    %400 = vset.pattern.permute.xlu0 1
    %401 = vperm.xlu0 %400, %v214
    %v402 = vpop.permute.xlu0 %401
    %404 = vset.pattern.permute.xlu0 1
    %405 = vperm.xlu0 %404, %v215
    %v406 = vpop.permute.xlu0 %405
    %vm408 = vcmask 523264
    %v410 = vsel %vm408, %v368, 0
    %v413 = vsel %vm408, %v369, 0
    %v416 = vsel %vm408, %v370, 0
    %v419 = vsel %vm408, %v371, 0
    %v422 = vsel %vm408, %v372, 0
    %v425 = vsel %vm408, %v373, 0
    %v428 = vsel %vm408, %v374, 0
    %v431 = vsel %vm408, %v375, 0
    %433 = vmatprep.subr.mxu0 0.0
    %434 = vmatpush1.msra.mxu0 0.0
    %435 = vmatprep.subr.mxu0 0.0
    %436 = vmatpush1.msra.mxu0 0.0
    %437 = vmatprep.subr.mxu0 0.0
    %438 = vmatpush1.msra.mxu0 0.0
    %439 = vmatprep.subr.mxu0 0.0
    %440 = vmatpush1.msra.mxu0 0.0
    %441 = vmatprep.subr.mxu0 0.0
    %442 = vmatpush1.msra.mxu0 0.0
    %443 = vmatprep.subr.mxu0 0.0
    %444 = vmatpush1.msra.mxu0 0.0
    %445 = vmatprep.subr.mxu0 0.0
    %446 = vmatpush1.msra.mxu0 0.0
    %447 = vmatprep.subr.mxu0 0.0
    %448 = vmatpush1.msra.mxu0 0.0
    %449 = vmatprep.subr.mxu0 %v367
    %450 = vmatpush1.msra.mxu0 %v366
    %451 = vmatprep.subr.mxu0 %v365
    %452 = vmatpush1.msra.mxu0 %v364
    %453 = vmatprep.subr.mxu0 %v363
    %454 = vmatpush1.msra.mxu0 %v362
    %455 = vmatprep.subr.mxu0 %v361
    %456 = vmatpush1.msra.mxu0 %v360
    %457 = vmatprep.subr.mxu0 %v359
    %458 = vmatpush1.msra.mxu0 %v358
    %459 = vmatprep.subr.mxu0 %v357
    %460 = vmatpush1.msra.mxu0 %v356
    %461 = vmatprep.subr.mxu0 %v355
    %462 = vmatpush1.msra.mxu0 %v354
    %463 = vmatprep.subr.mxu0 %v353
    %464 = vmatpush1.msra.mxu0 %v352
    %465 = vmatprep.subr.mxu0 0.0
    %466 = vmatpush2.msra.mxu0 0.0
    %467 = vmatprep.subr.mxu0 0.0
    %468 = vmatpush2.msra.mxu0 0.0
    %469 = vmatprep.subr.mxu0 0.0
    %470 = vmatpush2.msra.mxu0 0.0
    %471 = vmatprep.subr.mxu0 0.0
    %472 = vmatpush2.msra.mxu0 0.0
    %473 = vmatprep.subr.mxu0 0.0
    %474 = vmatpush2.msra.mxu0 0.0
    %475 = vmatprep.subr.mxu0 0.0
    %476 = vmatpush2.msra.mxu0 0.0
    %477 = vmatprep.subr.mxu0 0.0
    %478 = vmatpush2.msra.mxu0 0.0
    %479 = vmatprep.subr.mxu0 0.0
    %480 = vmatpush2.msra.mxu0 0.0
    %481 = vmatprep.subr.mxu0 0.0
    %482 = vmatpush2.msra.mxu0 0.0
    %483 = vmatprep.subr.mxu0 0.0
    %484 = vmatpush2.msra.mxu0 0.0
    %485 = vmatprep.subr.mxu0 0.0
    %486 = vmatpush2.msra.mxu0 0.0
    %487 = vmatprep.subr.mxu0 0.0
    %488 = vmatpush2.msra.mxu0 0.0
    %489 = vmatprep.subr.mxu0 0.0
    %490 = vmatpush2.msra.mxu0 0.0
    %491 = vmatprep.subr.mxu0 0.0
    %492 = vmatpush2.msra.mxu0 0.0
    %493 = vmatprep.subr.mxu0 0.0
    %494 = vmatpush2.msra.mxu0 0.0
    %495 = vmatprep.subr.mxu0 0.0
    %496 = vmatpush2.msra.mxu0 0.0
    %497 = vmatprep.mubr.f32.mxu0 0.0
    %498 = vmatmul.mubr.f32.gmra.mxu0 %v410
    %v499 = vpop.f32.mrf.mxu0
    %v500 = vadd.f32 %v378, %v499
    %v501 = vpop.f32.mrf.mxu0
    %v502 = vadd.f32 %v378, %v501
    %503 = vmatprep.mubr.f32.mxu0 0.0
    %504 = vmatmul.mubr.f32.gmra.mxu0 %v413
    %v505 = vpop.f32.mrf.mxu0
    %v506 = vadd.f32 %v382, %v505
    %v507 = vpop.f32.mrf.mxu0
    %v508 = vadd.f32 %v382, %v507
    %509 = vmatprep.mubr.f32.mxu0 0.0
    %510 = vmatmul.mubr.f32.gmra.mxu0 %v416
    %v511 = vpop.f32.mrf.mxu0
    %v512 = vadd.f32 %v386, %v511
    %v513 = vpop.f32.mrf.mxu0
    %v514 = vadd.f32 %v386, %v513
    %515 = vmatprep.mubr.f32.mxu0 0.0
    %516 = vmatmul.mubr.f32.gmra.mxu0 %v419
    %v517 = vpop.f32.mrf.mxu0
    %v518 = vadd.f32 %v390, %v517
    %v519 = vpop.f32.mrf.mxu0
    %v520 = vadd.f32 %v390, %v519
    %521 = vmatprep.mubr.f32.mxu0 0.0
    %522 = vmatmul.mubr.f32.gmra.mxu0 %v422
    %v523 = vpop.f32.mrf.mxu0
    %v524 = vadd.f32 %v394, %v523
    %v525 = vpop.f32.mrf.mxu0
    %v526 = vadd.f32 %v394, %v525
    %527 = vmatprep.mubr.f32.mxu0 0.0
    %528 = vmatmul.mubr.f32.gmra.mxu0 %v425
    %v529 = vpop.f32.mrf.mxu0
    %v530 = vadd.f32 %v398, %v529
    %v531 = vpop.f32.mrf.mxu0
    %v532 = vadd.f32 %v398, %v531
    %533 = vmatprep.mubr.f32.mxu0 0.0
    %534 = vmatmul.mubr.f32.gmra.mxu0 %v428
    %v535 = vpop.f32.mrf.mxu0
    %v536 = vadd.f32 %v402, %v535
    %v537 = vpop.f32.mrf.mxu0
    %v538 = vadd.f32 %v402, %v537
    %539 = vmatprep.mubr.f32.mxu0 0.0
    %540 = vmatmul.mubr.f32.gmra.mxu0 %v431
    %v541 = vpop.f32.mrf.mxu0
    %v542 = vadd.f32 %v406, %v541
    %v543 = vpop.f32.mrf.mxu0
    %v544 = vadd.f32 %v406, %v543
    %545 = vdwg.mxu0
    %vm546 = vcmp.gt.f32.partialorder %v500, 0.0
    %vm547 = vcmp.gt.f32.partialorder %v502, 0.0
    %vm548 = vcmp.gt.f32.partialorder %v506, 0.0
    %vm549 = vcmp.gt.f32.partialorder %v508, 0.0
    %vm550 = vcmp.gt.f32.partialorder %v512, 0.0
    %vm551 = vcmp.gt.f32.partialorder %v514, 0.0
    %vm552 = vcmp.gt.f32.partialorder %v518, 0.0
    %vm553 = vcmp.gt.f32.partialorder %v520, 0.0
    %vm554 = vcmp.gt.f32.partialorder %v524, 0.0
    %vm555 = vcmp.gt.f32.partialorder %v526, 0.0
    %vm556 = vcmp.gt.f32.partialorder %v530, 0.0
    %vm557 = vcmp.gt.f32.partialorder %v532, 0.0
    %vm558 = vcmp.gt.f32.partialorder %v536, 0.0
    %vm559 = vcmp.gt.f32.partialorder %v538, 0.0
    %vm560 = vcmp.gt.f32.partialorder %v542, 0.0
    %vm561 = vcmp.gt.f32.partialorder %v544, 0.0
    %v562 = vmin.f32 %v500, 0.0
    %v563 = vmin.f32 %v502, 0.0
    %v564 = vmin.f32 %v506, 0.0
    %v565 = vmin.f32 %v508, 0.0
    %v566 = vmin.f32 %v512, 0.0
    %v567 = vmin.f32 %v514, 0.0
    %v568 = vmin.f32 %v518, 0.0
    %v569 = vmin.f32 %v520, 0.0
    %v570 = vmin.f32 %v524, 0.0
    %v571 = vmin.f32 %v526, 0.0
    %v572 = vmin.f32 %v530, 0.0
    %v573 = vmin.f32 %v532, 0.0
    %v574 = vmin.f32 %v536, 0.0
    %v575 = vmin.f32 %v538, 0.0
    %v576 = vmin.f32 %v542, 0.0
    %v577 = vmin.f32 %v544, 0.0
    %v578 = vmul.f32 %v562, 1.442695
    %v579 = vpow.pop %v578
    %v580 = vmul.f32 %v563, 1.442695
    %v581 = vpow.pop %v580
    %v582 = vmul.f32 %v564, 1.442695
    %v583 = vpow.pop %v582
    %v584 = vmul.f32 %v565, 1.442695
    %v585 = vpow.pop %v584
    %v586 = vmul.f32 %v566, 1.442695
    %v587 = vpow.pop %v586
    %v588 = vmul.f32 %v567, 1.442695
    %v589 = vpow.pop %v588
    %v590 = vmul.f32 %v568, 1.442695
    %v591 = vpow.pop %v590
    %v592 = vmul.f32 %v569, 1.442695
    %v593 = vpow.pop %v592
    %v594 = vmul.f32 %v570, 1.442695
    %v595 = vpow.pop %v594
    %v596 = vmul.f32 %v571, 1.442695
    %v597 = vpow.pop %v596
    %v598 = vmul.f32 %v572, 1.442695
    %v599 = vpow.pop %v598
    %v600 = vmul.f32 %v573, 1.442695
    %v601 = vpow.pop %v600
    %v602 = vmul.f32 %v574, 1.442695
    %v603 = vpow.pop %v602
    %v604 = vmul.f32 %v575, 1.442695
    %v605 = vpow.pop %v604
    %v606 = vmul.f32 %v576, 1.442695
    %v607 = vpow.pop %v606
    %v608 = vmul.f32 %v577, 1.442695
    %v609 = vpow.pop %v608
    %v610 = vsub.f32 %v579, 1.0
    %v611 = vsub.f32 %v581, 1.0
    %v612 = vsub.f32 %v583, 1.0
    %v613 = vsub.f32 %v585, 1.0
    %v614 = vsub.f32 %v587, 1.0
    %v615 = vsub.f32 %v589, 1.0
    %v616 = vsub.f32 %v591, 1.0
    %v617 = vsub.f32 %v593, 1.0
    %v618 = vsub.f32 %v595, 1.0
    %v619 = vsub.f32 %v597, 1.0
    %v620 = vsub.f32 %v599, 1.0
    %v621 = vsub.f32 %v601, 1.0
    %v622 = vsub.f32 %v603, 1.0
    %v623 = vsub.f32 %v605, 1.0
    %v624 = vsub.f32 %v607, 1.0
    %v625 = vsub.f32 %v609, 1.0
    %v626 = vsel %vm546, %v500, %v610
    %v627 = vsel %vm547, %v502, %v611
    %v628 = vsel %vm548, %v506, %v612
    %v629 = vsel %vm549, %v508, %v613
    %v630 = vsel %vm550, %v512, %v614
    %v631 = vsel %vm551, %v514, %v615
    %v632 = vsel %vm552, %v518, %v616
    %v633 = vsel %vm553, %v520, %v617
    %v634 = vsel %vm554, %v524, %v618
    %v635 = vsel %vm555, %v526, %v619
    %v636 = vsel %vm556, %v530, %v620
    %v637 = vsel %vm557, %v532, %v621
    %v638 = vsel %vm558, %v536, %v622
    %v639 = vsel %vm559, %v538, %v623
    %v640 = vsel %vm560, %v542, %v624
    %v641 = vsel %vm561, %v544, %v625
    %v642 = vadd.f32 %v352, %v626
    %v643 = vadd.f32 %v353, %v627
    %v644 = vadd.f32 %v354, %v628
    %v645 = vadd.f32 %v355, %v629
    %v646 = vadd.f32 %v356, %v630
    %v647 = vadd.f32 %v357, %v631
    %v648 = vadd.f32 %v358, %v632
    %v649 = vadd.f32 %v359, %v633
    %v650 = vadd.f32 %v360, %v634
    %v651 = vadd.f32 %v361, %v635
    %v652 = vadd.f32 %v362, %v636
    %v653 = vadd.f32 %v363, %v637
    %v654 = vadd.f32 %v364, %v638
    %v655 = vadd.f32 %v365, %v639
    %v656 = vadd.f32 %v366, %v640
    %v657 = vadd.f32 %v367, %v641
    %s658 = scalar_lea.vmem [#allocation2], 64
    %v659 = vld [vmem:[%s658] sm:$0xff]
    %v660 = vld [vmem:[%s658 + $0x8] sm:$0xff]
    %v661 = vld [vmem:[%s658 + $0x10] sm:$0xff]
    %v662 = vld [vmem:[%s658 + $0x18] sm:$0xff]
    %v663 = vld [vmem:[%s658 + $0x20] sm:$0xff]
    %v664 = vld [vmem:[%s658 + $0x28] sm:$0xff]
    %v665 = vld [vmem:[%s658 + $0x30] sm:$0xff]
    %v666 = vld [vmem:[%s658 + $0x38] sm:$0xff]
    %667 = vset.pattern.permute.xlu0 2
    %668 = vperm.xlu0 %667, %v208
    %v669 = vpop.permute.xlu0 %668
    %671 = vset.pattern.permute.xlu0 2
    %672 = vperm.xlu0 %671, %v209
    %v673 = vpop.permute.xlu0 %672
    %675 = vset.pattern.permute.xlu0 2
    %676 = vperm.xlu0 %675, %v210
    %v677 = vpop.permute.xlu0 %676
    %679 = vset.pattern.permute.xlu0 2
    %680 = vperm.xlu0 %679, %v211
    %v681 = vpop.permute.xlu0 %680
    %683 = vset.pattern.permute.xlu0 2
    %684 = vperm.xlu0 %683, %v212
    %v685 = vpop.permute.xlu0 %684
    %687 = vset.pattern.permute.xlu0 2
    %688 = vperm.xlu0 %687, %v213
    %v689 = vpop.permute.xlu0 %688
    %691 = vset.pattern.permute.xlu0 2
    %692 = vperm.xlu0 %691, %v214
    %v693 = vpop.permute.xlu0 %692
    %695 = vset.pattern.permute.xlu0 2
    %696 = vperm.xlu0 %695, %v215
    %v697 = vpop.permute.xlu0 %696
    %v700 = vsel %vm408, %v659, 0
    %v703 = vsel %vm408, %v660, 0
    %v706 = vsel %vm408, %v661, 0
    %v709 = vsel %vm408, %v662, 0
    %v712 = vsel %vm408, %v663, 0
    %v715 = vsel %vm408, %v664, 0
    %v718 = vsel %vm408, %v665, 0
    %v721 = vsel %vm408, %v666, 0
    %723 = vmatprep.subr.mxu0 0.0
    %724 = vmatpush1.msra.mxu0 0.0
    %725 = vmatprep.subr.mxu0 0.0
    %726 = vmatpush1.msra.mxu0 0.0
    %727 = vmatprep.subr.mxu0 0.0
    %728 = vmatpush1.msra.mxu0 0.0
    %729 = vmatprep.subr.mxu0 0.0
    %730 = vmatpush1.msra.mxu0 0.0
    %731 = vmatprep.subr.mxu0 0.0
    %732 = vmatpush1.msra.mxu0 0.0
    %733 = vmatprep.subr.mxu0 0.0
    %734 = vmatpush1.msra.mxu0 0.0
    %735 = vmatprep.subr.mxu0 0.0
    %736 = vmatpush1.msra.mxu0 0.0
    %737 = vmatprep.subr.mxu0 0.0
    %738 = vmatpush1.msra.mxu0 0.0
    %739 = vmatprep.subr.mxu0 %v657
    %740 = vmatpush1.msra.mxu0 %v656
    %741 = vmatprep.subr.mxu0 %v655
    %742 = vmatpush1.msra.mxu0 %v654
    %743 = vmatprep.subr.mxu0 %v653
    %744 = vmatpush1.msra.mxu0 %v652
    %745 = vmatprep.subr.mxu0 %v651
    %746 = vmatpush1.msra.mxu0 %v650
    %747 = vmatprep.subr.mxu0 %v649
    %748 = vmatpush1.msra.mxu0 %v648
    %749 = vmatprep.subr.mxu0 %v647
    %750 = vmatpush1.msra.mxu0 %v646
    %751 = vmatprep.subr.mxu0 %v645
    %752 = vmatpush1.msra.mxu0 %v644
    %753 = vmatprep.subr.mxu0 %v643
    %754 = vmatpush1.msra.mxu0 %v642
    %755 = vmatprep.subr.mxu0 0.0
    %756 = vmatpush2.msra.mxu0 0.0
    %757 = vmatprep.subr.mxu0 0.0
    %758 = vmatpush2.msra.mxu0 0.0
    %759 = vmatprep.subr.mxu0 0.0
    %760 = vmatpush2.msra.mxu0 0.0
    %761 = vmatprep.subr.mxu0 0.0
    %762 = vmatpush2.msra.mxu0 0.0
    %763 = vmatprep.subr.mxu0 0.0
    %764 = vmatpush2.msra.mxu0 0.0
    %765 = vmatprep.subr.mxu0 0.0
    %766 = vmatpush2.msra.mxu0 0.0
    %767 = vmatprep.subr.mxu0 0.0
    %768 = vmatpush2.msra.mxu0 0.0
    %769 = vmatprep.subr.mxu0 0.0
    %770 = vmatpush2.msra.mxu0 0.0
    %771 = vmatprep.subr.mxu0 0.0
    %772 = vmatpush2.msra.mxu0 0.0
    %773 = vmatprep.subr.mxu0 0.0
    %774 = vmatpush2.msra.mxu0 0.0
    %775 = vmatprep.subr.mxu0 0.0
    %776 = vmatpush2.msra.mxu0 0.0
    %777 = vmatprep.subr.mxu0 0.0
    %778 = vmatpush2.msra.mxu0 0.0
    %779 = vmatprep.subr.mxu0 0.0
    %780 = vmatpush2.msra.mxu0 0.0
    %781 = vmatprep.subr.mxu0 0.0
    %782 = vmatpush2.msra.mxu0 0.0
    %783 = vmatprep.subr.mxu0 0.0
    %784 = vmatpush2.msra.mxu0 0.0
    %785 = vmatprep.subr.mxu0 0.0
    %786 = vmatpush2.msra.mxu0 0.0
    %787 = vmatprep.mubr.f32.mxu0 0.0
    %788 = vmatmul.mubr.f32.gmra.mxu0 %v700
    %v789 = vpop.f32.mrf.mxu0
    %v790 = vadd.f32 %v669, %v789
    %v791 = vpop.f32.mrf.mxu0
    %v792 = vadd.f32 %v669, %v791
    %793 = vmatprep.mubr.f32.mxu0 0.0
    %794 = vmatmul.mubr.f32.gmra.mxu0 %v703
    %v795 = vpop.f32.mrf.mxu0
    %v796 = vadd.f32 %v673, %v795
    %v797 = vpop.f32.mrf.mxu0
    %v798 = vadd.f32 %v673, %v797
    %799 = vmatprep.mubr.f32.mxu0 0.0
    %800 = vmatmul.mubr.f32.gmra.mxu0 %v706
    %v801 = vpop.f32.mrf.mxu0
    %v802 = vadd.f32 %v677, %v801
    %v803 = vpop.f32.mrf.mxu0
    %v804 = vadd.f32 %v677, %v803
    %805 = vmatprep.mubr.f32.mxu0 0.0
    %806 = vmatmul.mubr.f32.gmra.mxu0 %v709
    %v807 = vpop.f32.mrf.mxu0
    %v808 = vadd.f32 %v681, %v807
    %v809 = vpop.f32.mrf.mxu0
    %v810 = vadd.f32 %v681, %v809
    %811 = vmatprep.mubr.f32.mxu0 0.0
    %812 = vmatmul.mubr.f32.gmra.mxu0 %v712
    %v813 = vpop.f32.mrf.mxu0
    %v814 = vadd.f32 %v685, %v813
    %v815 = vpop.f32.mrf.mxu0
    %v816 = vadd.f32 %v685, %v815
    %817 = vmatprep.mubr.f32.mxu0 0.0
    %818 = vmatmul.mubr.f32.gmra.mxu0 %v715
    %v819 = vpop.f32.mrf.mxu0
    %v820 = vadd.f32 %v689, %v819
    %v821 = vpop.f32.mrf.mxu0
    %v822 = vadd.f32 %v689, %v821
    %823 = vmatprep.mubr.f32.mxu0 0.0
    %824 = vmatmul.mubr.f32.gmra.mxu0 %v718
    %v825 = vpop.f32.mrf.mxu0
    %v826 = vadd.f32 %v693, %v825
    %v827 = vpop.f32.mrf.mxu0
    %v828 = vadd.f32 %v693, %v827
    %829 = vmatprep.mubr.f32.mxu0 0.0
    %830 = vmatmul.mubr.f32.gmra.mxu0 %v721
    %v831 = vpop.f32.mrf.mxu0
    %v832 = vadd.f32 %v697, %v831
    %v833 = vpop.f32.mrf.mxu0
    %v834 = vadd.f32 %v697, %v833
    %835 = vdwg.mxu0
    %vm836 = vcmp.gt.f32.partialorder %v790, 0.0
    %vm837 = vcmp.gt.f32.partialorder %v792, 0.0
    %vm838 = vcmp.gt.f32.partialorder %v796, 0.0
    %vm839 = vcmp.gt.f32.partialorder %v798, 0.0
    %vm840 = vcmp.gt.f32.partialorder %v802, 0.0
    %vm841 = vcmp.gt.f32.partialorder %v804, 0.0
    %vm842 = vcmp.gt.f32.partialorder %v808, 0.0
    %vm843 = vcmp.gt.f32.partialorder %v810, 0.0
    %vm844 = vcmp.gt.f32.partialorder %v814, 0.0
    %vm845 = vcmp.gt.f32.partialorder %v816, 0.0
    %vm846 = vcmp.gt.f32.partialorder %v820, 0.0
    %vm847 = vcmp.gt.f32.partialorder %v822, 0.0
    %vm848 = vcmp.gt.f32.partialorder %v826, 0.0
    %vm849 = vcmp.gt.f32.partialorder %v828, 0.0
    %vm850 = vcmp.gt.f32.partialorder %v832, 0.0
    %vm851 = vcmp.gt.f32.partialorder %v834, 0.0
    %v852 = vmin.f32 %v790, 0.0
    %v853 = vmin.f32 %v792, 0.0
    %v854 = vmin.f32 %v796, 0.0
    %v855 = vmin.f32 %v798, 0.0
    %v856 = vmin.f32 %v802, 0.0
    %v857 = vmin.f32 %v804, 0.0
    %v858 = vmin.f32 %v808, 0.0
    %v859 = vmin.f32 %v810, 0.0
    %v860 = vmin.f32 %v814, 0.0
    %v861 = vmin.f32 %v816, 0.0
    %v862 = vmin.f32 %v820, 0.0
    %v863 = vmin.f32 %v822, 0.0
    %v864 = vmin.f32 %v826, 0.0
    %v865 = vmin.f32 %v828, 0.0
    %v866 = vmin.f32 %v832, 0.0
    %v867 = vmin.f32 %v834, 0.0
    %v868 = vmul.f32 %v852, 1.442695
    %v869 = vpow.pop %v868
    %v870 = vmul.f32 %v853, 1.442695
    %v871 = vpow.pop %v870
    %v872 = vmul.f32 %v854, 1.442695
    %v873 = vpow.pop %v872
    %v874 = vmul.f32 %v855, 1.442695
    %v875 = vpow.pop %v874
    %v876 = vmul.f32 %v856, 1.442695
    %v877 = vpow.pop %v876
    %v878 = vmul.f32 %v857, 1.442695
    %v879 = vpow.pop %v878
    %v880 = vmul.f32 %v858, 1.442695
    %v881 = vpow.pop %v880
    %v882 = vmul.f32 %v859, 1.442695
    %v883 = vpow.pop %v882
    %v884 = vmul.f32 %v860, 1.442695
    %v885 = vpow.pop %v884
    %v886 = vmul.f32 %v861, 1.442695
    %v887 = vpow.pop %v886
    %v888 = vmul.f32 %v862, 1.442695
    %v889 = vpow.pop %v888
    %v890 = vmul.f32 %v863, 1.442695
    %v891 = vpow.pop %v890
    %v892 = vmul.f32 %v864, 1.442695
    %v893 = vpow.pop %v892
    %v894 = vmul.f32 %v865, 1.442695
    %v895 = vpow.pop %v894
    %v896 = vmul.f32 %v866, 1.442695
    %v897 = vpow.pop %v896
    %v898 = vmul.f32 %v867, 1.442695
    %v899 = vpow.pop %v898
    %v900 = vsub.f32 %v869, 1.0
    %v901 = vsub.f32 %v871, 1.0
    %v902 = vsub.f32 %v873, 1.0
    %v903 = vsub.f32 %v875, 1.0
    %v904 = vsub.f32 %v877, 1.0
    %v905 = vsub.f32 %v879, 1.0
    %v906 = vsub.f32 %v881, 1.0
    %v907 = vsub.f32 %v883, 1.0
    %v908 = vsub.f32 %v885, 1.0
    %v909 = vsub.f32 %v887, 1.0
    %v910 = vsub.f32 %v889, 1.0
    %v911 = vsub.f32 %v891, 1.0
    %v912 = vsub.f32 %v893, 1.0
    %v913 = vsub.f32 %v895, 1.0
    %v914 = vsub.f32 %v897, 1.0
    %v915 = vsub.f32 %v899, 1.0
    %v916 = vsel %vm836, %v790, %v900
    %v917 = vsel %vm837, %v792, %v901
    %v918 = vsel %vm838, %v796, %v902
    %v919 = vsel %vm839, %v798, %v903
    %v920 = vsel %vm840, %v802, %v904
    %v921 = vsel %vm841, %v804, %v905
    %v922 = vsel %vm842, %v808, %v906
    %v923 = vsel %vm843, %v810, %v907
    %v924 = vsel %vm844, %v814, %v908
    %v925 = vsel %vm845, %v816, %v909
    %v926 = vsel %vm846, %v820, %v910
    %v927 = vsel %vm847, %v822, %v911
    %v928 = vsel %vm848, %v826, %v912
    %v929 = vsel %vm849, %v828, %v913
    %v930 = vsel %vm850, %v832, %v914
    %v931 = vsel %vm851, %v834, %v915
    %v932 = vadd.f32 %v642, %v916
    %v933 = vadd.f32 %v643, %v917
    %v934 = vadd.f32 %v644, %v918
    %v935 = vadd.f32 %v645, %v919
    %v936 = vadd.f32 %v646, %v920
    %v937 = vadd.f32 %v647, %v921
    %v938 = vadd.f32 %v648, %v922
    %v939 = vadd.f32 %v649, %v923
    %v940 = vadd.f32 %v650, %v924
    %v941 = vadd.f32 %v651, %v925
    %v942 = vadd.f32 %v652, %v926
    %v943 = vadd.f32 %v653, %v927
    %v944 = vadd.f32 %v654, %v928
    %v945 = vadd.f32 %v655, %v929
    %v946 = vadd.f32 %v656, %v930
    %v947 = vadd.f32 %v657, %v931
    %s948 = scalar_lea.vmem [#allocation2], 128
    %v949 = vld [vmem:[%s948] sm:$0xff]
    %v950 = vld [vmem:[%s948 + $0x8] sm:$0xff]
    %v951 = vld [vmem:[%s948 + $0x10] sm:$0xff]
    %v952 = vld [vmem:[%s948 + $0x18] sm:$0xff]
    %v953 = vld [vmem:[%s948 + $0x20] sm:$0xff]
    %v954 = vld [vmem:[%s948 + $0x28] sm:$0xff]
    %v955 = vld [vmem:[%s948 + $0x30] sm:$0xff]
    %v956 = vld [vmem:[%s948 + $0x38] sm:$0xff]
    %957 = vset.pattern.permute.xlu0 3
    %958 = vperm.xlu0 %957, %v208
    %v959 = vpop.permute.xlu0 %958
    %961 = vset.pattern.permute.xlu0 3
    %962 = vperm.xlu0 %961, %v209
    %v963 = vpop.permute.xlu0 %962
    %965 = vset.pattern.permute.xlu0 3
    %966 = vperm.xlu0 %965, %v210
    %v967 = vpop.permute.xlu0 %966
    %969 = vset.pattern.permute.xlu0 3
    %970 = vperm.xlu0 %969, %v211
    %v971 = vpop.permute.xlu0 %970
    %973 = vset.pattern.permute.xlu0 3
    %974 = vperm.xlu0 %973, %v212
    %v975 = vpop.permute.xlu0 %974
    %977 = vset.pattern.permute.xlu0 3
    %978 = vperm.xlu0 %977, %v213
    %v979 = vpop.permute.xlu0 %978
    %981 = vset.pattern.permute.xlu0 3
    %982 = vperm.xlu0 %981, %v214
    %v983 = vpop.permute.xlu0 %982
    %985 = vset.pattern.permute.xlu0 3
    %986 = vperm.xlu0 %985, %v215
    %v987 = vpop.permute.xlu0 %986
    %v990 = vsel %vm408, %v949, 0
    %v993 = vsel %vm408, %v950, 0
    %v996 = vsel %vm408, %v951, 0
    %v999 = vsel %vm408, %v952, 0
    %v1002 = vsel %vm408, %v953, 0
    %v1005 = vsel %vm408, %v954, 0
    %v1008 = vsel %vm408, %v955, 0
    %v1011 = vsel %vm408, %v956, 0
    %1013 = vmatprep.subr.mxu0 0.0
    %1014 = vmatpush1.msra.mxu0 0.0
    %1015 = vmatprep.subr.mxu0 0.0
    %1016 = vmatpush1.msra.mxu0 0.0
    %1017 = vmatprep.subr.mxu0 0.0
    %1018 = vmatpush1.msra.mxu0 0.0
    %1019 = vmatprep.subr.mxu0 0.0
    %1020 = vmatpush1.msra.mxu0 0.0
    %1021 = vmatprep.subr.mxu0 0.0
    %1022 = vmatpush1.msra.mxu0 0.0
    %1023 = vmatprep.subr.mxu0 0.0
    %1024 = vmatpush1.msra.mxu0 0.0
    %1025 = vmatprep.subr.mxu0 0.0
    %1026 = vmatpush1.msra.mxu0 0.0
    %1027 = vmatprep.subr.mxu0 0.0
    %1028 = vmatpush1.msra.mxu0 0.0
    %1029 = vmatprep.subr.mxu0 %v947
    %1030 = vmatpush1.msra.mxu0 %v946
    %1031 = vmatprep.subr.mxu0 %v945
    %1032 = vmatpush1.msra.mxu0 %v944
    %1033 = vmatprep.subr.mxu0 %v943
    %1034 = vmatpush1.msra.mxu0 %v942
    %1035 = vmatprep.subr.mxu0 %v941
    %1036 = vmatpush1.msra.mxu0 %v940
    %1037 = vmatprep.subr.mxu0 %v939
    %1038 = vmatpush1.msra.mxu0 %v938
    %1039 = vmatprep.subr.mxu0 %v937
    %1040 = vmatpush1.msra.mxu0 %v936
    %1041 = vmatprep.subr.mxu0 %v935
    %1042 = vmatpush1.msra.mxu0 %v934
    %1043 = vmatprep.subr.mxu0 %v933
    %1044 = vmatpush1.msra.mxu0 %v932
    %1045 = vmatprep.subr.mxu0 0.0
    %1046 = vmatpush2.msra.mxu0 0.0
    %1047 = vmatprep.subr.mxu0 0.0
    %1048 = vmatpush2.msra.mxu0 0.0
    %1049 = vmatprep.subr.mxu0 0.0
    %1050 = vmatpush2.msra.mxu0 0.0
    %1051 = vmatprep.subr.mxu0 0.0
    %1052 = vmatpush2.msra.mxu0 0.0
    %1053 = vmatprep.subr.mxu0 0.0
    %1054 = vmatpush2.msra.mxu0 0.0
    %1055 = vmatprep.subr.mxu0 0.0
    %1056 = vmatpush2.msra.mxu0 0.0
    %1057 = vmatprep.subr.mxu0 0.0
    %1058 = vmatpush2.msra.mxu0 0.0
    %1059 = vmatprep.subr.mxu0 0.0
    %1060 = vmatpush2.msra.mxu0 0.0
    %1061 = vmatprep.subr.mxu0 0.0
    %1062 = vmatpush2.msra.mxu0 0.0
    %1063 = vmatprep.subr.mxu0 0.0
    %1064 = vmatpush2.msra.mxu0 0.0
    %1065 = vmatprep.subr.mxu0 0.0
    %1066 = vmatpush2.msra.mxu0 0.0
    %1067 = vmatprep.subr.mxu0 0.0
    %1068 = vmatpush2.msra.mxu0 0.0
    %1069 = vmatprep.subr.mxu0 0.0
    %1070 = vmatpush2.msra.mxu0 0.0
    %1071 = vmatprep.subr.mxu0 0.0
    %1072 = vmatpush2.msra.mxu0 0.0
    %1073 = vmatprep.subr.mxu0 0.0
    %1074 = vmatpush2.msra.mxu0 0.0
    %1075 = vmatprep.subr.mxu0 0.0
    %1076 = vmatpush2.msra.mxu0 0.0
    %1077 = vmatprep.mubr.f32.mxu0 0.0
    %1078 = vmatmul.mubr.f32.gmra.mxu0 %v990
    %v1079 = vpop.f32.mrf.mxu0
    %v1080 = vadd.f32 %v959, %v1079
    %v1081 = vpop.f32.mrf.mxu0
    %v1082 = vadd.f32 %v959, %v1081
    %1083 = vmatprep.mubr.f32.mxu0 0.0
    %1084 = vmatmul.mubr.f32.gmra.mxu0 %v993
    %v1085 = vpop.f32.mrf.mxu0
    %v1086 = vadd.f32 %v963, %v1085
    %v1087 = vpop.f32.mrf.mxu0
    %v1088 = vadd.f32 %v963, %v1087
    %1089 = vmatprep.mubr.f32.mxu0 0.0
    %1090 = vmatmul.mubr.f32.gmra.mxu0 %v996
    %v1091 = vpop.f32.mrf.mxu0
    %v1092 = vadd.f32 %v967, %v1091
    %v1093 = vpop.f32.mrf.mxu0
    %v1094 = vadd.f32 %v967, %v1093
    %1095 = vmatprep.mubr.f32.mxu0 0.0
    %1096 = vmatmul.mubr.f32.gmra.mxu0 %v999
    %v1097 = vpop.f32.mrf.mxu0
    %v1098 = vadd.f32 %v971, %v1097
    %v1099 = vpop.f32.mrf.mxu0
    %v1100 = vadd.f32 %v971, %v1099
    %1101 = vmatprep.mubr.f32.mxu0 0.0
    %1102 = vmatmul.mubr.f32.gmra.mxu0 %v1002
    %v1103 = vpop.f32.mrf.mxu0
    %v1104 = vadd.f32 %v975, %v1103
    %v1105 = vpop.f32.mrf.mxu0
    %v1106 = vadd.f32 %v975, %v1105
    %1107 = vmatprep.mubr.f32.mxu0 0.0
    %1108 = vmatmul.mubr.f32.gmra.mxu0 %v1005
    %v1109 = vpop.f32.mrf.mxu0
    %v1110 = vadd.f32 %v979, %v1109
    %v1111 = vpop.f32.mrf.mxu0
    %v1112 = vadd.f32 %v979, %v1111
    %1113 = vmatprep.mubr.f32.mxu0 0.0
    %1114 = vmatmul.mubr.f32.gmra.mxu0 %v1008
    %v1115 = vpop.f32.mrf.mxu0
    %v1116 = vadd.f32 %v983, %v1115
    %v1117 = vpop.f32.mrf.mxu0
    %v1118 = vadd.f32 %v983, %v1117
    %1119 = vmatprep.mubr.f32.mxu0 0.0
    %1120 = vmatmul.mubr.f32.gmra.mxu0 %v1011
    %v1121 = vpop.f32.mrf.mxu0
    %v1122 = vadd.f32 %v987, %v1121
    %v1123 = vpop.f32.mrf.mxu0
    %v1124 = vadd.f32 %v987, %v1123
    %1125 = vdwg.mxu0
    %vm1126 = vcmp.gt.f32.partialorder %v1080, 0.0
    %vm1127 = vcmp.gt.f32.partialorder %v1082, 0.0
    %vm1128 = vcmp.gt.f32.partialorder %v1086, 0.0
    %vm1129 = vcmp.gt.f32.partialorder %v1088, 0.0
    %vm1130 = vcmp.gt.f32.partialorder %v1092, 0.0
    %vm1131 = vcmp.gt.f32.partialorder %v1094, 0.0
    %vm1132 = vcmp.gt.f32.partialorder %v1098, 0.0
    %vm1133 = vcmp.gt.f32.partialorder %v1100, 0.0
    %vm1134 = vcmp.gt.f32.partialorder %v1104, 0.0
    %vm1135 = vcmp.gt.f32.partialorder %v1106, 0.0
    %vm1136 = vcmp.gt.f32.partialorder %v1110, 0.0
    %vm1137 = vcmp.gt.f32.partialorder %v1112, 0.0
    %vm1138 = vcmp.gt.f32.partialorder %v1116, 0.0
    %vm1139 = vcmp.gt.f32.partialorder %v1118, 0.0
    %vm1140 = vcmp.gt.f32.partialorder %v1122, 0.0
    %vm1141 = vcmp.gt.f32.partialorder %v1124, 0.0
    %v1142 = vmin.f32 %v1080, 0.0
    %v1143 = vmin.f32 %v1082, 0.0
    %v1144 = vmin.f32 %v1086, 0.0
    %v1145 = vmin.f32 %v1088, 0.0
    %v1146 = vmin.f32 %v1092, 0.0
    %v1147 = vmin.f32 %v1094, 0.0
    %v1148 = vmin.f32 %v1098, 0.0
    %v1149 = vmin.f32 %v1100, 0.0
    %v1150 = vmin.f32 %v1104, 0.0
    %v1151 = vmin.f32 %v1106, 0.0
    %v1152 = vmin.f32 %v1110, 0.0
    %v1153 = vmin.f32 %v1112, 0.0
    %v1154 = vmin.f32 %v1116, 0.0
    %v1155 = vmin.f32 %v1118, 0.0
    %v1156 = vmin.f32 %v1122, 0.0
    %v1157 = vmin.f32 %v1124, 0.0
    %v1158 = vmul.f32 %v1142, 1.442695
    %v1159 = vpow.pop %v1158
    %v1160 = vmul.f32 %v1143, 1.442695
    %v1161 = vpow.pop %v1160
    %v1162 = vmul.f32 %v1144, 1.442695
    %v1163 = vpow.pop %v1162
    %v1164 = vmul.f32 %v1145, 1.442695
    %v1165 = vpow.pop %v1164
    %v1166 = vmul.f32 %v1146, 1.442695
    %v1167 = vpow.pop %v1166
    %v1168 = vmul.f32 %v1147, 1.442695
    %v1169 = vpow.pop %v1168
    %v1170 = vmul.f32 %v1148, 1.442695
    %v1171 = vpow.pop %v1170
    %v1172 = vmul.f32 %v1149, 1.442695
    %v1173 = vpow.pop %v1172
    %v1174 = vmul.f32 %v1150, 1.442695
    %v1175 = vpow.pop %v1174
    %v1176 = vmul.f32 %v1151, 1.442695
    %v1177 = vpow.pop %v1176
    %v1178 = vmul.f32 %v1152, 1.442695
    %v1179 = vpow.pop %v1178
    %v1180 = vmul.f32 %v1153, 1.442695
    %v1181 = vpow.pop %v1180
    %v1182 = vmul.f32 %v1154, 1.442695
    %v1183 = vpow.pop %v1182
    %v1184 = vmul.f32 %v1155, 1.442695
    %v1185 = vpow.pop %v1184
    %v1186 = vmul.f32 %v1156, 1.442695
    %v1187 = vpow.pop %v1186
    %v1188 = vmul.f32 %v1157, 1.442695
    %v1189 = vpow.pop %v1188
    %v1190 = vsub.f32 %v1159, 1.0
    %v1191 = vsub.f32 %v1161, 1.0
    %v1192 = vsub.f32 %v1163, 1.0
    %v1193 = vsub.f32 %v1165, 1.0
    %v1194 = vsub.f32 %v1167, 1.0
    %v1195 = vsub.f32 %v1169, 1.0
    %v1196 = vsub.f32 %v1171, 1.0
    %v1197 = vsub.f32 %v1173, 1.0
    %v1198 = vsub.f32 %v1175, 1.0
    %v1199 = vsub.f32 %v1177, 1.0
    %v1200 = vsub.f32 %v1179, 1.0
    %v1201 = vsub.f32 %v1181, 1.0
    %v1202 = vsub.f32 %v1183, 1.0
    %v1203 = vsub.f32 %v1185, 1.0
    %v1204 = vsub.f32 %v1187, 1.0
    %v1205 = vsub.f32 %v1189, 1.0
    %v1206 = vsel %vm1126, %v1080, %v1190
    %v1207 = vsel %vm1127, %v1082, %v1191
    %v1208 = vsel %vm1128, %v1086, %v1192
    %v1209 = vsel %vm1129, %v1088, %v1193
    %v1210 = vsel %vm1130, %v1092, %v1194
    %v1211 = vsel %vm1131, %v1094, %v1195
    %v1212 = vsel %vm1132, %v1098, %v1196
    %v1213 = vsel %vm1133, %v1100, %v1197
    %v1214 = vsel %vm1134, %v1104, %v1198
    %v1215 = vsel %vm1135, %v1106, %v1199
    %v1216 = vsel %vm1136, %v1110, %v1200
    %v1217 = vsel %vm1137, %v1112, %v1201
    %v1218 = vsel %vm1138, %v1116, %v1202
    %v1219 = vsel %vm1139, %v1118, %v1203
    %v1220 = vsel %vm1140, %v1122, %v1204
    %v1221 = vsel %vm1141, %v1124, %v1205
    %v1222 = vadd.f32 %v932, %v1206
    %v1223 = vadd.f32 %v933, %v1207
    %v1224 = vadd.f32 %v934, %v1208
    %v1225 = vadd.f32 %v935, %v1209
    %v1226 = vadd.f32 %v936, %v1210
    %v1227 = vadd.f32 %v937, %v1211
    %v1228 = vadd.f32 %v938, %v1212
    %v1229 = vadd.f32 %v939, %v1213
    %v1230 = vadd.f32 %v940, %v1214
    %v1231 = vadd.f32 %v941, %v1215
    %v1232 = vadd.f32 %v942, %v1216
    %v1233 = vadd.f32 %v943, %v1217
    %v1234 = vadd.f32 %v944, %v1218
    %v1235 = vadd.f32 %v945, %v1219
    %v1236 = vadd.f32 %v946, %v1220
    %v1237 = vadd.f32 %v947, %v1221
    %s1238 = scalar_lea.vmem [#allocation2], 192
    %v1239 = vld [vmem:[%s1238] sm:$0xff]
    %v1240 = vld [vmem:[%s1238 + $0x8] sm:$0xff]
    %v1241 = vld [vmem:[%s1238 + $0x10] sm:$0xff]
    %v1242 = vld [vmem:[%s1238 + $0x18] sm:$0xff]
    %v1243 = vld [vmem:[%s1238 + $0x20] sm:$0xff]
    %v1244 = vld [vmem:[%s1238 + $0x28] sm:$0xff]
    %v1245 = vld [vmem:[%s1238 + $0x30] sm:$0xff]
    %v1246 = vld [vmem:[%s1238 + $0x38] sm:$0xff]
    %1247 = vset.pattern.permute.xlu0 4
    %1248 = vperm.xlu0 %1247, %v208
    %v1249 = vpop.permute.xlu0 %1248
    %1251 = vset.pattern.permute.xlu0 4
    %1252 = vperm.xlu0 %1251, %v209
    %v1253 = vpop.permute.xlu0 %1252
    %1255 = vset.pattern.permute.xlu0 4
    %1256 = vperm.xlu0 %1255, %v210
    %v1257 = vpop.permute.xlu0 %1256
    %1259 = vset.pattern.permute.xlu0 4
    %1260 = vperm.xlu0 %1259, %v211
    %v1261 = vpop.permute.xlu0 %1260
    %1263 = vset.pattern.permute.xlu0 4
    %1264 = vperm.xlu0 %1263, %v212
    %v1265 = vpop.permute.xlu0 %1264
    %1267 = vset.pattern.permute.xlu0 4
    %1268 = vperm.xlu0 %1267, %v213
    %v1269 = vpop.permute.xlu0 %1268
    %1271 = vset.pattern.permute.xlu0 4
    %1272 = vperm.xlu0 %1271, %v214
    %v1273 = vpop.permute.xlu0 %1272
    %1275 = vset.pattern.permute.xlu0 4
    %1276 = vperm.xlu0 %1275, %v215
    %v1277 = vpop.permute.xlu0 %1276
    %v1280 = vsel %vm408, %v1239, 0
    %v1283 = vsel %vm408, %v1240, 0
    %v1286 = vsel %vm408, %v1241, 0
    %v1289 = vsel %vm408, %v1242, 0
    %v1292 = vsel %vm408, %v1243, 0
    %v1295 = vsel %vm408, %v1244, 0
    %v1298 = vsel %vm408, %v1245, 0
    %v1301 = vsel %vm408, %v1246, 0
    %1303 = vmatprep.subr.mxu0 0.0
    %1304 = vmatpush1.msra.mxu0 0.0
    %1305 = vmatprep.subr.mxu0 0.0
    %1306 = vmatpush1.msra.mxu0 0.0
    %1307 = vmatprep.subr.mxu0 0.0
    %1308 = vmatpush1.msra.mxu0 0.0
    %1309 = vmatprep.subr.mxu0 0.0
    %1310 = vmatpush1.msra.mxu0 0.0
    %1311 = vmatprep.subr.mxu0 0.0
    %1312 = vmatpush1.msra.mxu0 0.0
    %1313 = vmatprep.subr.mxu0 0.0
    %1314 = vmatpush1.msra.mxu0 0.0
    %1315 = vmatprep.subr.mxu0 0.0
    %1316 = vmatpush1.msra.mxu0 0.0
    %1317 = vmatprep.subr.mxu0 0.0
    %1318 = vmatpush1.msra.mxu0 0.0
    %1319 = vmatprep.subr.mxu0 %v1237
    %1320 = vmatpush1.msra.mxu0 %v1236
    %1321 = vmatprep.subr.mxu0 %v1235
    %1322 = vmatpush1.msra.mxu0 %v1234
    %1323 = vmatprep.subr.mxu0 %v1233
    %1324 = vmatpush1.msra.mxu0 %v1232
    %1325 = vmatprep.subr.mxu0 %v1231
    %1326 = vmatpush1.msra.mxu0 %v1230
    %1327 = vmatprep.subr.mxu0 %v1229
    %1328 = vmatpush1.msra.mxu0 %v1228
    %1329 = vmatprep.subr.mxu0 %v1227
    %1330 = vmatpush1.msra.mxu0 %v1226
    %1331 = vmatprep.subr.mxu0 %v1225
    %1332 = vmatpush1.msra.mxu0 %v1224
    %1333 = vmatprep.subr.mxu0 %v1223
    %1334 = vmatpush1.msra.mxu0 %v1222
    %1335 = vmatprep.subr.mxu0 0.0
    %1336 = vmatpush2.msra.mxu0 0.0
    %1337 = vmatprep.subr.mxu0 0.0
    %1338 = vmatpush2.msra.mxu0 0.0
    %1339 = vmatprep.subr.mxu0 0.0
    %1340 = vmatpush2.msra.mxu0 0.0
    %1341 = vmatprep.subr.mxu0 0.0
    %1342 = vmatpush2.msra.mxu0 0.0
    %1343 = vmatprep.subr.mxu0 0.0
    %1344 = vmatpush2.msra.mxu0 0.0
    %1345 = vmatprep.subr.mxu0 0.0
    %1346 = vmatpush2.msra.mxu0 0.0
    %1347 = vmatprep.subr.mxu0 0.0
    %1348 = vmatpush2.msra.mxu0 0.0
    %1349 = vmatprep.subr.mxu0 0.0
    %1350 = vmatpush2.msra.mxu0 0.0
    %1351 = vmatprep.subr.mxu0 0.0
    %1352 = vmatpush2.msra.mxu0 0.0
    %1353 = vmatprep.subr.mxu0 0.0
    %1354 = vmatpush2.msra.mxu0 0.0
    %1355 = vmatprep.subr.mxu0 0.0
    %1356 = vmatpush2.msra.mxu0 0.0
    %1357 = vmatprep.subr.mxu0 0.0
    %1358 = vmatpush2.msra.mxu0 0.0
    %1359 = vmatprep.subr.mxu0 0.0
    %1360 = vmatpush2.msra.mxu0 0.0
    %1361 = vmatprep.subr.mxu0 0.0
    %1362 = vmatpush2.msra.mxu0 0.0
    %1363 = vmatprep.subr.mxu0 0.0
    %1364 = vmatpush2.msra.mxu0 0.0
    %1365 = vmatprep.subr.mxu0 0.0
    %1366 = vmatpush2.msra.mxu0 0.0
    %1367 = vmatprep.mubr.f32.mxu0 0.0
    %1368 = vmatmul.mubr.f32.gmra.mxu0 %v1280
    %v1369 = vpop.f32.mrf.mxu0
    %v1370 = vadd.f32 %v1249, %v1369
    %v1371 = vpop.f32.mrf.mxu0
    %v1372 = vadd.f32 %v1249, %v1371
    %1373 = vmatprep.mubr.f32.mxu0 0.0
    %1374 = vmatmul.mubr.f32.gmra.mxu0 %v1283
    %v1375 = vpop.f32.mrf.mxu0
    %v1376 = vadd.f32 %v1253, %v1375
    %v1377 = vpop.f32.mrf.mxu0
    %v1378 = vadd.f32 %v1253, %v1377
    %1379 = vmatprep.mubr.f32.mxu0 0.0
    %1380 = vmatmul.mubr.f32.gmra.mxu0 %v1286
    %v1381 = vpop.f32.mrf.mxu0
    %v1382 = vadd.f32 %v1257, %v1381
    %v1383 = vpop.f32.mrf.mxu0
    %v1384 = vadd.f32 %v1257, %v1383
    %1385 = vmatprep.mubr.f32.mxu0 0.0
    %1386 = vmatmul.mubr.f32.gmra.mxu0 %v1289
    %v1387 = vpop.f32.mrf.mxu0
    %v1388 = vadd.f32 %v1261, %v1387
    %v1389 = vpop.f32.mrf.mxu0
    %v1390 = vadd.f32 %v1261, %v1389
    %1391 = vmatprep.mubr.f32.mxu0 0.0
    %1392 = vmatmul.mubr.f32.gmra.mxu0 %v1292
    %v1393 = vpop.f32.mrf.mxu0
    %v1394 = vadd.f32 %v1265, %v1393
    %v1395 = vpop.f32.mrf.mxu0
    %v1396 = vadd.f32 %v1265, %v1395
    %1397 = vmatprep.mubr.f32.mxu0 0.0
    %1398 = vmatmul.mubr.f32.gmra.mxu0 %v1295
    %v1399 = vpop.f32.mrf.mxu0
    %v1400 = vadd.f32 %v1269, %v1399
    %v1401 = vpop.f32.mrf.mxu0
    %v1402 = vadd.f32 %v1269, %v1401
    %1403 = vmatprep.mubr.f32.mxu0 0.0
    %1404 = vmatmul.mubr.f32.gmra.mxu0 %v1298
    %v1405 = vpop.f32.mrf.mxu0
    %v1406 = vadd.f32 %v1273, %v1405
    %v1407 = vpop.f32.mrf.mxu0
    %v1408 = vadd.f32 %v1273, %v1407
    %1409 = vmatprep.mubr.f32.mxu0 0.0
    %1410 = vmatmul.mubr.f32.gmra.mxu0 %v1301
    %v1411 = vpop.f32.mrf.mxu0
    %v1412 = vadd.f32 %v1277, %v1411
    %v1413 = vpop.f32.mrf.mxu0
    %v1414 = vadd.f32 %v1277, %v1413
    %1415 = vdwg.mxu0
    %vm1416 = vcmp.gt.f32.partialorder %v1370, 0.0
    %vm1417 = vcmp.gt.f32.partialorder %v1372, 0.0
    %vm1418 = vcmp.gt.f32.partialorder %v1376, 0.0
    %vm1419 = vcmp.gt.f32.partialorder %v1378, 0.0
    %vm1420 = vcmp.gt.f32.partialorder %v1382, 0.0
    %vm1421 = vcmp.gt.f32.partialorder %v1384, 0.0
    %vm1422 = vcmp.gt.f32.partialorder %v1388, 0.0
    %vm1423 = vcmp.gt.f32.partialorder %v1390, 0.0
    %vm1424 = vcmp.gt.f32.partialorder %v1394, 0.0
    %vm1425 = vcmp.gt.f32.partialorder %v1396, 0.0
    %vm1426 = vcmp.gt.f32.partialorder %v1400, 0.0
    %vm1427 = vcmp.gt.f32.partialorder %v1402, 0.0
    %vm1428 = vcmp.gt.f32.partialorder %v1406, 0.0
    %vm1429 = vcmp.gt.f32.partialorder %v1408, 0.0
    %vm1430 = vcmp.gt.f32.partialorder %v1412, 0.0
    %vm1431 = vcmp.gt.f32.partialorder %v1414, 0.0
    %v1432 = vmin.f32 %v1370, 0.0
    %v1433 = vmin.f32 %v1372, 0.0
    %v1434 = vmin.f32 %v1376, 0.0
    %v1435 = vmin.f32 %v1378, 0.0
    %v1436 = vmin.f32 %v1382, 0.0
    %v1437 = vmin.f32 %v1384, 0.0
    %v1438 = vmin.f32 %v1388, 0.0
    %v1439 = vmin.f32 %v1390, 0.0
    %v1440 = vmin.f32 %v1394, 0.0
    %v1441 = vmin.f32 %v1396, 0.0
    %v1442 = vmin.f32 %v1400, 0.0
    %v1443 = vmin.f32 %v1402, 0.0
    %v1444 = vmin.f32 %v1406, 0.0
    %v1445 = vmin.f32 %v1408, 0.0
    %v1446 = vmin.f32 %v1412, 0.0
    %v1447 = vmin.f32 %v1414, 0.0
    %v1448 = vmul.f32 %v1432, 1.442695
    %v1449 = vpow.pop %v1448
    %v1450 = vmul.f32 %v1433, 1.442695
    %v1451 = vpow.pop %v1450
    %v1452 = vmul.f32 %v1434, 1.442695
    %v1453 = vpow.pop %v1452
    %v1454 = vmul.f32 %v1435, 1.442695
    %v1455 = vpow.pop %v1454
    %v1456 = vmul.f32 %v1436, 1.442695
    %v1457 = vpow.pop %v1456
    %v1458 = vmul.f32 %v1437, 1.442695
    %v1459 = vpow.pop %v1458
    %v1460 = vmul.f32 %v1438, 1.442695
    %v1461 = vpow.pop %v1460
    %v1462 = vmul.f32 %v1439, 1.442695
    %v1463 = vpow.pop %v1462
    %v1464 = vmul.f32 %v1440, 1.442695
    %v1465 = vpow.pop %v1464
    %v1466 = vmul.f32 %v1441, 1.442695
    %v1467 = vpow.pop %v1466
    %v1468 = vmul.f32 %v1442, 1.442695
    %v1469 = vpow.pop %v1468
    %v1470 = vmul.f32 %v1443, 1.442695
    %v1471 = vpow.pop %v1470
    %v1472 = vmul.f32 %v1444, 1.442695
    %v1473 = vpow.pop %v1472
    %v1474 = vmul.f32 %v1445, 1.442695
    %v1475 = vpow.pop %v1474
    %v1476 = vmul.f32 %v1446, 1.442695
    %v1477 = vpow.pop %v1476
    %v1478 = vmul.f32 %v1447, 1.442695
    %v1479 = vpow.pop %v1478
    %v1480 = vsub.f32 %v1449, 1.0
    %v1481 = vsub.f32 %v1451, 1.0
    %v1482 = vsub.f32 %v1453, 1.0
    %v1483 = vsub.f32 %v1455, 1.0
    %v1484 = vsub.f32 %v1457, 1.0
    %v1485 = vsub.f32 %v1459, 1.0
    %v1486 = vsub.f32 %v1461, 1.0
    %v1487 = vsub.f32 %v1463, 1.0
    %v1488 = vsub.f32 %v1465, 1.0
    %v1489 = vsub.f32 %v1467, 1.0
    %v1490 = vsub.f32 %v1469, 1.0
    %v1491 = vsub.f32 %v1471, 1.0
    %v1492 = vsub.f32 %v1473, 1.0
    %v1493 = vsub.f32 %v1475, 1.0
    %v1494 = vsub.f32 %v1477, 1.0
    %v1495 = vsub.f32 %v1479, 1.0
    %v1496 = vsel %vm1416, %v1370, %v1480
    %v1497 = vsel %vm1417, %v1372, %v1481
    %v1498 = vsel %vm1418, %v1376, %v1482
    %v1499 = vsel %vm1419, %v1378, %v1483
    %v1500 = vsel %vm1420, %v1382, %v1484
    %v1501 = vsel %vm1421, %v1384, %v1485
    %v1502 = vsel %vm1422, %v1388, %v1486
    %v1503 = vsel %vm1423, %v1390, %v1487
    %v1504 = vsel %vm1424, %v1394, %v1488
    %v1505 = vsel %vm1425, %v1396, %v1489
    %v1506 = vsel %vm1426, %v1400, %v1490
    %v1507 = vsel %vm1427, %v1402, %v1491
    %v1508 = vsel %vm1428, %v1406, %v1492
    %v1509 = vsel %vm1429, %v1408, %v1493
    %v1510 = vsel %vm1430, %v1412, %v1494
    %v1511 = vsel %vm1431, %v1414, %v1495
    %v1512 = vadd.f32 %v1222, %v1496
    %v1513 = vadd.f32 %v1223, %v1497
    %v1514 = vadd.f32 %v1224, %v1498
    %v1515 = vadd.f32 %v1225, %v1499
    %v1516 = vadd.f32 %v1226, %v1500
    %v1517 = vadd.f32 %v1227, %v1501
    %v1518 = vadd.f32 %v1228, %v1502
    %v1519 = vadd.f32 %v1229, %v1503
    %v1520 = vadd.f32 %v1230, %v1504
    %v1521 = vadd.f32 %v1231, %v1505
    %v1522 = vadd.f32 %v1232, %v1506
    %v1523 = vadd.f32 %v1233, %v1507
    %v1524 = vadd.f32 %v1234, %v1508
    %v1525 = vadd.f32 %v1235, %v1509
    %v1526 = vadd.f32 %v1236, %v1510
    %v1527 = vadd.f32 %v1237, %v1511
    %1529 = vset.pattern.permute.xlu0 0
    %1530 = vperm.xlu0 %1529, %v48
    %v1531 = vpop.permute.xlu0 %1530
    %1534 = vset.pattern.permute.xlu0 0
    %1535 = vperm.xlu0 %1534, %v49
    %v1536 = vpop.permute.xlu0 %1535
    %v1539 = vsel %vm408, %v46, 0
    %v1542 = vsel %vm408, %v47, 0
    %1544 = vmatprep.subr.mxu0 0.0
    %1545 = vmatpush1.msra.mxu0 0.0
    %1546 = vmatprep.subr.mxu0 0.0
    %1547 = vmatpush1.msra.mxu0 0.0
    %1548 = vmatprep.subr.mxu0 0.0
    %1549 = vmatpush1.msra.mxu0 0.0
    %1550 = vmatprep.subr.mxu0 0.0
    %1551 = vmatpush1.msra.mxu0 0.0
    %1552 = vmatprep.subr.mxu0 0.0
    %1553 = vmatpush1.msra.mxu0 0.0
    %1554 = vmatprep.subr.mxu0 0.0
    %1555 = vmatpush1.msra.mxu0 0.0
    %1556 = vmatprep.subr.mxu0 0.0
    %1557 = vmatpush1.msra.mxu0 0.0
    %1558 = vmatprep.subr.mxu0 0.0
    %1559 = vmatpush1.msra.mxu0 0.0
    %1560 = vmatprep.subr.mxu0 %v1527
    %1561 = vmatpush1.msra.mxu0 %v1526
    %1562 = vmatprep.subr.mxu0 %v1525
    %1563 = vmatpush1.msra.mxu0 %v1524
    %1564 = vmatprep.subr.mxu0 %v1523
    %1565 = vmatpush1.msra.mxu0 %v1522
    %1566 = vmatprep.subr.mxu0 %v1521
    %1567 = vmatpush1.msra.mxu0 %v1520
    %1568 = vmatprep.subr.mxu0 %v1519
    %1569 = vmatpush1.msra.mxu0 %v1518
    %1570 = vmatprep.subr.mxu0 %v1517
    %1571 = vmatpush1.msra.mxu0 %v1516
    %1572 = vmatprep.subr.mxu0 %v1515
    %1573 = vmatpush1.msra.mxu0 %v1514
    %1574 = vmatprep.subr.mxu0 %v1513
    %1575 = vmatpush1.msra.mxu0 %v1512
    %1576 = vmatprep.subr.mxu0 0.0
    %1577 = vmatpush2.msra.mxu0 0.0
    %1578 = vmatprep.subr.mxu0 0.0
    %1579 = vmatpush2.msra.mxu0 0.0
    %1580 = vmatprep.subr.mxu0 0.0
    %1581 = vmatpush2.msra.mxu0 0.0
    %1582 = vmatprep.subr.mxu0 0.0
    %1583 = vmatpush2.msra.mxu0 0.0
    %1584 = vmatprep.subr.mxu0 0.0
    %1585 = vmatpush2.msra.mxu0 0.0
    %1586 = vmatprep.subr.mxu0 0.0
    %1587 = vmatpush2.msra.mxu0 0.0
    %1588 = vmatprep.subr.mxu0 0.0
    %1589 = vmatpush2.msra.mxu0 0.0
    %1590 = vmatprep.subr.mxu0 0.0
    %1591 = vmatpush2.msra.mxu0 0.0
    %1592 = vmatprep.subr.mxu0 0.0
    %1593 = vmatpush2.msra.mxu0 0.0
    %1594 = vmatprep.subr.mxu0 0.0
    %1595 = vmatpush2.msra.mxu0 0.0
    %1596 = vmatprep.subr.mxu0 0.0
    %1597 = vmatpush2.msra.mxu0 0.0
    %1598 = vmatprep.subr.mxu0 0.0
    %1599 = vmatpush2.msra.mxu0 0.0
    %1600 = vmatprep.subr.mxu0 0.0
    %1601 = vmatpush2.msra.mxu0 0.0
    %1602 = vmatprep.subr.mxu0 0.0
    %1603 = vmatpush2.msra.mxu0 0.0
    %1604 = vmatprep.subr.mxu0 0.0
    %1605 = vmatpush2.msra.mxu0 0.0
    %1606 = vmatprep.subr.mxu0 0.0
    %1607 = vmatpush2.msra.mxu0 0.0
    %1608 = vmatprep.mubr.f32.mxu0 0.0
    %1609 = vmatmul.mubr.f32.gmra.mxu0 %v1539
    %v1610 = vpop.f32.mrf.mxu0
    %v1611 = vadd.f32 %v1531, %v1610
    %v1612 = vpop.f32.mrf.mxu0
    %v1613 = vadd.f32 %v1531, %v1612
    %1614 = vmatprep.mubr.f32.mxu0 0.0
    %1615 = vmatmul.mubr.f32.gmra.mxu0 %v1542
    %v1616 = vpop.f32.mrf.mxu0
    %v1617 = vadd.f32 %v1536, %v1616
    %v1618 = vpop.f32.mrf.mxu0
    %v1619 = vadd.f32 %v1536, %v1618
    %1620 = vdwg.mxu0
    %1621 = vst [vmem:[#allocation5] sm:$0xff] %v1611
    %1622 = vst [vmem:[#allocation5 + $0x8] sm:$0xff] %v1613
    %1623 = vst [vmem:[#allocation5 + $0x20] sm:$0xff] %v1617
    %1624 = vst [vmem:[#allocation5 + $0x28] sm:$0xff] %v1619
    %s1625 = scalar_lea.vmem %s0, 4
    %v1626 = vld [vmem:[%s1625] sm:$0xf]
    %v1628 = vlaneseq
    %v1629 = vshrl.u32 %v1628, 7
    %v1630 = vsub.s32 0, %v1629
    %v1631 = vrot.slane %v1626, %v1630
    %v1632 = vlaneseq
    %v1633 = vshrl.u32 %v1632, 7
    %v1634 = vsub.s32 2, %v1633
    %v1635 = vrot.slane %v1626, %v1634
    %v1638 = vlaneseq
    %v1639 = vshrl.u32 %v1638, 7
    %v1640 = vsub.s32 0, %v1639
    %v1641 = vrot.slane %v1631, %v1640
    %v1642 = vlaneseq
    %v1643 = vshrl.u32 %v1642, 7
    %v1644 = vsub.s32 0, %v1643
    %v1645 = vrot.slane %v1635, %v1644
    %v1646 = vmul.f32 %v54, %v1641
    %v1647 = vmul.f32 %v54, %v1645
    %v1648 = vmul.f32 %v59, %v1641
    %v1649 = vmul.f32 %v59, %v1645
    %v1650 = vmul.f32 %v64, %v1641
    %v1651 = vmul.f32 %v64, %v1645
    %v1652 = vmul.f32 %v69, %v1641
    %v1653 = vmul.f32 %v69, %v1645
    %v1654 = vmul.f32 %v74, %v1641
    %v1655 = vmul.f32 %v74, %v1645
    %v1656 = vmul.f32 %v79, %v1641
    %v1657 = vmul.f32 %v79, %v1645
    %v1658 = vmul.f32 %v84, %v1641
    %v1659 = vmul.f32 %v84, %v1645
    %v1660 = vmul.f32 %v89, %v1641
    %v1661 = vmul.f32 %v89, %v1645
    %v1662 = vlaneseq
    %v1663 = vshrl.u32 %v1662, 7
    %v1664 = vsub.s32 1, %v1663
    %v1665 = vrot.slane %v1626, %v1664
    %v1666 = vlaneseq
    %v1667 = vshrl.u32 %v1666, 7
    %v1668 = vsub.s32 3, %v1667
    %v1669 = vrot.slane %v1626, %v1668
    %v1672 = vlaneseq
    %v1673 = vshrl.u32 %v1672, 7
    %v1674 = vsub.s32 1, %v1673
    %v1675 = vrot.slane %v1665, %v1674
    %v1676 = vlaneseq
    %v1677 = vshrl.u32 %v1676, 7
    %v1678 = vsub.s32 1, %v1677
    %v1679 = vrot.slane %v1669, %v1678
    %v1680 = vmul.f32 %v128, %v1675
    %v1681 = vmul.f32 %v128, %v1679
    %v1682 = vmul.f32 %v132, %v1675
    %v1683 = vmul.f32 %v132, %v1679
    %v1684 = vmul.f32 %v136, %v1675
    %v1685 = vmul.f32 %v136, %v1679
    %v1686 = vmul.f32 %v140, %v1675
    %v1687 = vmul.f32 %v140, %v1679
    %v1688 = vmul.f32 %v144, %v1675
    %v1689 = vmul.f32 %v144, %v1679
    %v1690 = vmul.f32 %v148, %v1675
    %v1691 = vmul.f32 %v148, %v1679
    %v1692 = vmul.f32 %v152, %v1675
    %v1693 = vmul.f32 %v152, %v1679
    %v1694 = vmul.f32 %v156, %v1675
    %v1695 = vmul.f32 %v156, %v1679
    %v1696 = vadd.f32 %v1646, %v1680
    %v1697 = vadd.f32 %v1647, %v1681
    %v1698 = vadd.f32 %v1648, %v1682
    %v1699 = vadd.f32 %v1649, %v1683
    %v1700 = vadd.f32 %v1650, %v1684
    %v1701 = vadd.f32 %v1651, %v1685
    %v1702 = vadd.f32 %v1652, %v1686
    %v1703 = vadd.f32 %v1653, %v1687
    %v1704 = vadd.f32 %v1654, %v1688
    %v1705 = vadd.f32 %v1655, %v1689
    %v1706 = vadd.f32 %v1656, %v1690
    %v1707 = vadd.f32 %v1657, %v1691
    %v1708 = vadd.f32 %v1658, %v1692
    %v1709 = vadd.f32 %v1659, %v1693
    %v1710 = vadd.f32 %v1660, %v1694
    %v1711 = vadd.f32 %v1661, %v1695
    %v1712 = vld [vmem:[%s4] sm:$0xff]
    %v1713 = vld [vmem:[%s4 + $0x8] sm:$0xff]
    %v1714 = vld [vmem:[%s4 + $0x10] sm:$0xff]
    %v1715 = vld [vmem:[%s4 + $0x18] sm:$0xff]
    %v1716 = vld [vmem:[%s4 + $0x20] sm:$0xff]
    %v1717 = vld [vmem:[%s4 + $0x28] sm:$0xff]
    %v1718 = vld [vmem:[%s4 + $0x30] sm:$0xff]
    %v1719 = vld [vmem:[%s4 + $0x38] sm:$0xff]
    %1721 = vset.pattern.permute.xlu0 0
    %1722 = vperm.xlu0 %1721, %v1712
    %v1723 = vpop.permute.xlu0 %1722
    %1726 = vset.pattern.permute.xlu0 0
    %1727 = vperm.xlu0 %1726, %v1713
    %v1728 = vpop.permute.xlu0 %1727
    %1731 = vset.pattern.permute.xlu0 0
    %1732 = vperm.xlu0 %1731, %v1714
    %v1733 = vpop.permute.xlu0 %1732
    %1736 = vset.pattern.permute.xlu0 0
    %1737 = vperm.xlu0 %1736, %v1715
    %v1738 = vpop.permute.xlu0 %1737
    %1741 = vset.pattern.permute.xlu0 0
    %1742 = vperm.xlu0 %1741, %v1716
    %v1743 = vpop.permute.xlu0 %1742
    %1746 = vset.pattern.permute.xlu0 0
    %1747 = vperm.xlu0 %1746, %v1717
    %v1748 = vpop.permute.xlu0 %1747
    %1751 = vset.pattern.permute.xlu0 0
    %1752 = vperm.xlu0 %1751, %v1718
    %v1753 = vpop.permute.xlu0 %1752
    %1756 = vset.pattern.permute.xlu0 0
    %1757 = vperm.xlu0 %1756, %v1719
    %v1758 = vpop.permute.xlu0 %1757
    %v1760 = vadd.f32 %v1696, %v1723
    %v1761 = vadd.f32 %v1697, %v1723
    %v1762 = vadd.f32 %v1698, %v1728
    %v1763 = vadd.f32 %v1699, %v1728
    %v1764 = vadd.f32 %v1700, %v1733
    %v1765 = vadd.f32 %v1701, %v1733
    %v1766 = vadd.f32 %v1702, %v1738
    %v1767 = vadd.f32 %v1703, %v1738
    %v1768 = vadd.f32 %v1704, %v1743
    %v1769 = vadd.f32 %v1705, %v1743
    %v1770 = vadd.f32 %v1706, %v1748
    %v1771 = vadd.f32 %v1707, %v1748
    %v1772 = vadd.f32 %v1708, %v1753
    %v1773 = vadd.f32 %v1709, %v1753
    %v1774 = vadd.f32 %v1710, %v1758
    %v1775 = vadd.f32 %v1711, %v1758
    %vm1776 = vcmp.gt.f32.partialorder %v1760, 0.0
    %vm1777 = vcmp.gt.f32.partialorder %v1761, 0.0
    %vm1778 = vcmp.gt.f32.partialorder %v1762, 0.0
    %vm1779 = vcmp.gt.f32.partialorder %v1763, 0.0
    %vm1780 = vcmp.gt.f32.partialorder %v1764, 0.0
    %vm1781 = vcmp.gt.f32.partialorder %v1765, 0.0
    %vm1782 = vcmp.gt.f32.partialorder %v1766, 0.0
    %vm1783 = vcmp.gt.f32.partialorder %v1767, 0.0
    %vm1784 = vcmp.gt.f32.partialorder %v1768, 0.0
    %vm1785 = vcmp.gt.f32.partialorder %v1769, 0.0
    %vm1786 = vcmp.gt.f32.partialorder %v1770, 0.0
    %vm1787 = vcmp.gt.f32.partialorder %v1771, 0.0
    %vm1788 = vcmp.gt.f32.partialorder %v1772, 0.0
    %vm1789 = vcmp.gt.f32.partialorder %v1773, 0.0
    %vm1790 = vcmp.gt.f32.partialorder %v1774, 0.0
    %vm1791 = vcmp.gt.f32.partialorder %v1775, 0.0
    %v1792 = vmin.f32 %v1760, 0.0
    %v1793 = vmin.f32 %v1761, 0.0
    %v1794 = vmin.f32 %v1762, 0.0
    %v1795 = vmin.f32 %v1763, 0.0
    %v1796 = vmin.f32 %v1764, 0.0
    %v1797 = vmin.f32 %v1765, 0.0
    %v1798 = vmin.f32 %v1766, 0.0
    %v1799 = vmin.f32 %v1767, 0.0
    %v1800 = vmin.f32 %v1768, 0.0
    %v1801 = vmin.f32 %v1769, 0.0
    %v1802 = vmin.f32 %v1770, 0.0
    %v1803 = vmin.f32 %v1771, 0.0
    %v1804 = vmin.f32 %v1772, 0.0
    %v1805 = vmin.f32 %v1773, 0.0
    %v1806 = vmin.f32 %v1774, 0.0
    %v1807 = vmin.f32 %v1775, 0.0
    %v1808 = vmul.f32 %v1792, 1.442695
    %v1809 = vpow.pop %v1808
    %v1810 = vmul.f32 %v1793, 1.442695
    %v1811 = vpow.pop %v1810
    %v1812 = vmul.f32 %v1794, 1.442695
    %v1813 = vpow.pop %v1812
    %v1814 = vmul.f32 %v1795, 1.442695
    %v1815 = vpow.pop %v1814
    %v1816 = vmul.f32 %v1796, 1.442695
    %v1817 = vpow.pop %v1816
    %v1818 = vmul.f32 %v1797, 1.442695
    %v1819 = vpow.pop %v1818
    %v1820 = vmul.f32 %v1798, 1.442695
    %v1821 = vpow.pop %v1820
    %v1822 = vmul.f32 %v1799, 1.442695
    %v1823 = vpow.pop %v1822
    %v1824 = vmul.f32 %v1800, 1.442695
    %v1825 = vpow.pop %v1824
    %v1826 = vmul.f32 %v1801, 1.442695
    %v1827 = vpow.pop %v1826
    %v1828 = vmul.f32 %v1802, 1.442695
    %v1829 = vpow.pop %v1828
    %v1830 = vmul.f32 %v1803, 1.442695
    %v1831 = vpow.pop %v1830
    %v1832 = vmul.f32 %v1804, 1.442695
    %v1833 = vpow.pop %v1832
    %v1834 = vmul.f32 %v1805, 1.442695
    %v1835 = vpow.pop %v1834
    %v1836 = vmul.f32 %v1806, 1.442695
    %v1837 = vpow.pop %v1836
    %v1838 = vmul.f32 %v1807, 1.442695
    %v1839 = vpow.pop %v1838
    %v1840 = vsub.f32 %v1809, 1.0
    %v1841 = vsub.f32 %v1811, 1.0
    %v1842 = vsub.f32 %v1813, 1.0
    %v1843 = vsub.f32 %v1815, 1.0
    %v1844 = vsub.f32 %v1817, 1.0
    %v1845 = vsub.f32 %v1819, 1.0
    %v1846 = vsub.f32 %v1821, 1.0
    %v1847 = vsub.f32 %v1823, 1.0
    %v1848 = vsub.f32 %v1825, 1.0
    %v1849 = vsub.f32 %v1827, 1.0
    %v1850 = vsub.f32 %v1829, 1.0
    %v1851 = vsub.f32 %v1831, 1.0
    %v1852 = vsub.f32 %v1833, 1.0
    %v1853 = vsub.f32 %v1835, 1.0
    %v1854 = vsub.f32 %v1837, 1.0
    %v1855 = vsub.f32 %v1839, 1.0
    %v1856 = vsel %vm1776, %v1760, %v1840
    %v1857 = vsel %vm1777, %v1761, %v1841
    %v1858 = vsel %vm1778, %v1762, %v1842
    %v1859 = vsel %vm1779, %v1763, %v1843
    %v1860 = vsel %vm1780, %v1764, %v1844
    %v1861 = vsel %vm1781, %v1765, %v1845
    %v1862 = vsel %vm1782, %v1766, %v1846
    %v1863 = vsel %vm1783, %v1767, %v1847
    %v1864 = vsel %vm1784, %v1768, %v1848
    %v1865 = vsel %vm1785, %v1769, %v1849
    %v1866 = vsel %vm1786, %v1770, %v1850
    %v1867 = vsel %vm1787, %v1771, %v1851
    %v1868 = vsel %vm1788, %v1772, %v1852
    %v1869 = vsel %vm1789, %v1773, %v1853
    %v1870 = vsel %vm1790, %v1774, %v1854
    %v1871 = vsel %vm1791, %v1775, %v1855
    %v1872 = vld [vmem:[#allocation2] sm:$0xff]
    %v1873 = vld [vmem:[#allocation2 + $0x8] sm:$0xff]
    %v1874 = vld [vmem:[#allocation2 + $0x10] sm:$0xff]
    %v1875 = vld [vmem:[#allocation2 + $0x18] sm:$0xff]
    %v1876 = vld [vmem:[#allocation2 + $0x20] sm:$0xff]
    %v1877 = vld [vmem:[#allocation2 + $0x28] sm:$0xff]
    %v1878 = vld [vmem:[#allocation2 + $0x30] sm:$0xff]
    %v1879 = vld [vmem:[#allocation2 + $0x38] sm:$0xff]
    %1880 = vset.pattern.permute.xlu0 1
    %1881 = vperm.xlu0 %1880, %v1712
    %v1882 = vpop.permute.xlu0 %1881
    %1884 = vset.pattern.permute.xlu0 1
    %1885 = vperm.xlu0 %1884, %v1713
    %v1886 = vpop.permute.xlu0 %1885
    %1888 = vset.pattern.permute.xlu0 1
    %1889 = vperm.xlu0 %1888, %v1714
    %v1890 = vpop.permute.xlu0 %1889
    %1892 = vset.pattern.permute.xlu0 1
    %1893 = vperm.xlu0 %1892, %v1715
    %v1894 = vpop.permute.xlu0 %1893
    %1896 = vset.pattern.permute.xlu0 1
    %1897 = vperm.xlu0 %1896, %v1716
    %v1898 = vpop.permute.xlu0 %1897
    %1900 = vset.pattern.permute.xlu0 1
    %1901 = vperm.xlu0 %1900, %v1717
    %v1902 = vpop.permute.xlu0 %1901
    %1904 = vset.pattern.permute.xlu0 1
    %1905 = vperm.xlu0 %1904, %v1718
    %v1906 = vpop.permute.xlu0 %1905
    %1908 = vset.pattern.permute.xlu0 1
    %1909 = vperm.xlu0 %1908, %v1719
    %v1910 = vpop.permute.xlu0 %1909
    %v1913 = vsel %vm408, %v1872, 0
    %v1916 = vsel %vm408, %v1873, 0
    %v1919 = vsel %vm408, %v1874, 0
    %v1922 = vsel %vm408, %v1875, 0
    %v1925 = vsel %vm408, %v1876, 0
    %v1928 = vsel %vm408, %v1877, 0
    %v1931 = vsel %vm408, %v1878, 0
    %v1934 = vsel %vm408, %v1879, 0
    %1936 = vmatprep.subr.mxu0 0.0
    %1937 = vmatpush1.msra.mxu0 0.0
    %1938 = vmatprep.subr.mxu0 0.0
    %1939 = vmatpush1.msra.mxu0 0.0
    %1940 = vmatprep.subr.mxu0 0.0
    %1941 = vmatpush1.msra.mxu0 0.0
    %1942 = vmatprep.subr.mxu0 0.0
    %1943 = vmatpush1.msra.mxu0 0.0
    %1944 = vmatprep.subr.mxu0 0.0
    %1945 = vmatpush1.msra.mxu0 0.0
    %1946 = vmatprep.subr.mxu0 0.0
    %1947 = vmatpush1.msra.mxu0 0.0
    %1948 = vmatprep.subr.mxu0 0.0
    %1949 = vmatpush1.msra.mxu0 0.0
    %1950 = vmatprep.subr.mxu0 0.0
    %1951 = vmatpush1.msra.mxu0 0.0
    %1952 = vmatprep.subr.mxu0 %v1871
    %1953 = vmatpush1.msra.mxu0 %v1870
    %1954 = vmatprep.subr.mxu0 %v1869
    %1955 = vmatpush1.msra.mxu0 %v1868
    %1956 = vmatprep.subr.mxu0 %v1867
    %1957 = vmatpush1.msra.mxu0 %v1866
    %1958 = vmatprep.subr.mxu0 %v1865
    %1959 = vmatpush1.msra.mxu0 %v1864
    %1960 = vmatprep.subr.mxu0 %v1863
    %1961 = vmatpush1.msra.mxu0 %v1862
    %1962 = vmatprep.subr.mxu0 %v1861
    %1963 = vmatpush1.msra.mxu0 %v1860
    %1964 = vmatprep.subr.mxu0 %v1859
    %1965 = vmatpush1.msra.mxu0 %v1858
    %1966 = vmatprep.subr.mxu0 %v1857
    %1967 = vmatpush1.msra.mxu0 %v1856
    %1968 = vmatprep.subr.mxu0 0.0
    %1969 = vmatpush2.msra.mxu0 0.0
    %1970 = vmatprep.subr.mxu0 0.0
    %1971 = vmatpush2.msra.mxu0 0.0
    %1972 = vmatprep.subr.mxu0 0.0
    %1973 = vmatpush2.msra.mxu0 0.0
    %1974 = vmatprep.subr.mxu0 0.0
    %1975 = vmatpush2.msra.mxu0 0.0
    %1976 = vmatprep.subr.mxu0 0.0
    %1977 = vmatpush2.msra.mxu0 0.0
    %1978 = vmatprep.subr.mxu0 0.0
    %1979 = vmatpush2.msra.mxu0 0.0
    %1980 = vmatprep.subr.mxu0 0.0
    %1981 = vmatpush2.msra.mxu0 0.0
    %1982 = vmatprep.subr.mxu0 0.0
    %1983 = vmatpush2.msra.mxu0 0.0
    %1984 = vmatprep.subr.mxu0 0.0
    %1985 = vmatpush2.msra.mxu0 0.0
    %1986 = vmatprep.subr.mxu0 0.0
    %1987 = vmatpush2.msra.mxu0 0.0
    %1988 = vmatprep.subr.mxu0 0.0
    %1989 = vmatpush2.msra.mxu0 0.0
    %1990 = vmatprep.subr.mxu0 0.0
    %1991 = vmatpush2.msra.mxu0 0.0
    %1992 = vmatprep.subr.mxu0 0.0
    %1993 = vmatpush2.msra.mxu0 0.0
    %1994 = vmatprep.subr.mxu0 0.0
    %1995 = vmatpush2.msra.mxu0 0.0
    %1996 = vmatprep.subr.mxu0 0.0
    %1997 = vmatpush2.msra.mxu0 0.0
    %1998 = vmatprep.subr.mxu0 0.0
    %1999 = vmatpush2.msra.mxu0 0.0
    %2000 = vmatprep.mubr.f32.mxu0 0.0
    %2001 = vmatmul.mubr.f32.gmra.mxu0 %v1913
    %v2002 = vpop.f32.mrf.mxu0
    %v2003 = vadd.f32 %v1882, %v2002
    %v2004 = vpop.f32.mrf.mxu0
    %v2005 = vadd.f32 %v1882, %v2004
    %2006 = vmatprep.mubr.f32.mxu0 0.0
    %2007 = vmatmul.mubr.f32.gmra.mxu0 %v1916
    %v2008 = vpop.f32.mrf.mxu0
    %v2009 = vadd.f32 %v1886, %v2008
    %v2010 = vpop.f32.mrf.mxu0
    %v2011 = vadd.f32 %v1886, %v2010
    %2012 = vmatprep.mubr.f32.mxu0 0.0
    %2013 = vmatmul.mubr.f32.gmra.mxu0 %v1919
    %v2014 = vpop.f32.mrf.mxu0
    %v2015 = vadd.f32 %v1890, %v2014
    %v2016 = vpop.f32.mrf.mxu0
    %v2017 = vadd.f32 %v1890, %v2016
    %2018 = vmatprep.mubr.f32.mxu0 0.0
    %2019 = vmatmul.mubr.f32.gmra.mxu0 %v1922
    %v2020 = vpop.f32.mrf.mxu0
    %v2021 = vadd.f32 %v1894, %v2020
    %v2022 = vpop.f32.mrf.mxu0
    %v2023 = vadd.f32 %v1894, %v2022
    %2024 = vmatprep.mubr.f32.mxu0 0.0
    %2025 = vmatmul.mubr.f32.gmra.mxu0 %v1925
    %v2026 = vpop.f32.mrf.mxu0
    %v2027 = vadd.f32 %v1898, %v2026
    %v2028 = vpop.f32.mrf.mxu0
    %v2029 = vadd.f32 %v1898, %v2028
    %2030 = vmatprep.mubr.f32.mxu0 0.0
    %2031 = vmatmul.mubr.f32.gmra.mxu0 %v1928
    %v2032 = vpop.f32.mrf.mxu0
    %v2033 = vadd.f32 %v1902, %v2032
    %v2034 = vpop.f32.mrf.mxu0
    %v2035 = vadd.f32 %v1902, %v2034
    %2036 = vmatprep.mubr.f32.mxu0 0.0
    %2037 = vmatmul.mubr.f32.gmra.mxu0 %v1931
    %v2038 = vpop.f32.mrf.mxu0
    %v2039 = vadd.f32 %v1906, %v2038
    %v2040 = vpop.f32.mrf.mxu0
    %v2041 = vadd.f32 %v1906, %v2040
    %2042 = vmatprep.mubr.f32.mxu0 0.0
    %2043 = vmatmul.mubr.f32.gmra.mxu0 %v1934
    %v2044 = vpop.f32.mrf.mxu0
    %v2045 = vadd.f32 %v1910, %v2044
    %v2046 = vpop.f32.mrf.mxu0
    %v2047 = vadd.f32 %v1910, %v2046
    %2048 = vdwg.mxu0
    %vm2049 = vcmp.gt.f32.partialorder %v2003, 0.0
    %vm2050 = vcmp.gt.f32.partialorder %v2005, 0.0
    %vm2051 = vcmp.gt.f32.partialorder %v2009, 0.0
    %vm2052 = vcmp.gt.f32.partialorder %v2011, 0.0
    %vm2053 = vcmp.gt.f32.partialorder %v2015, 0.0
    %vm2054 = vcmp.gt.f32.partialorder %v2017, 0.0
    %vm2055 = vcmp.gt.f32.partialorder %v2021, 0.0
    %vm2056 = vcmp.gt.f32.partialorder %v2023, 0.0
    %vm2057 = vcmp.gt.f32.partialorder %v2027, 0.0
    %vm2058 = vcmp.gt.f32.partialorder %v2029, 0.0
    %vm2059 = vcmp.gt.f32.partialorder %v2033, 0.0
    %vm2060 = vcmp.gt.f32.partialorder %v2035, 0.0
    %vm2061 = vcmp.gt.f32.partialorder %v2039, 0.0
    %vm2062 = vcmp.gt.f32.partialorder %v2041, 0.0
    %vm2063 = vcmp.gt.f32.partialorder %v2045, 0.0
    %vm2064 = vcmp.gt.f32.partialorder %v2047, 0.0
    %v2065 = vmin.f32 %v2003, 0.0
    %v2066 = vmin.f32 %v2005, 0.0
    %v2067 = vmin.f32 %v2009, 0.0
    %v2068 = vmin.f32 %v2011, 0.0
    %v2069 = vmin.f32 %v2015, 0.0
    %v2070 = vmin.f32 %v2017, 0.0
    %v2071 = vmin.f32 %v2021, 0.0
    %v2072 = vmin.f32 %v2023, 0.0
    %v2073 = vmin.f32 %v2027, 0.0
    %v2074 = vmin.f32 %v2029, 0.0
    %v2075 = vmin.f32 %v2033, 0.0
    %v2076 = vmin.f32 %v2035, 0.0
    %v2077 = vmin.f32 %v2039, 0.0
    %v2078 = vmin.f32 %v2041, 0.0
    %v2079 = vmin.f32 %v2045, 0.0
    %v2080 = vmin.f32 %v2047, 0.0
    %v2081 = vmul.f32 %v2065, 1.442695
    %v2082 = vpow.pop %v2081
    %v2083 = vmul.f32 %v2066, 1.442695
    %v2084 = vpow.pop %v2083
    %v2085 = vmul.f32 %v2067, 1.442695
    %v2086 = vpow.pop %v2085
    %v2087 = vmul.f32 %v2068, 1.442695
    %v2088 = vpow.pop %v2087
    %v2089 = vmul.f32 %v2069, 1.442695
    %v2090 = vpow.pop %v2089
    %v2091 = vmul.f32 %v2070, 1.442695
    %v2092 = vpow.pop %v2091
    %v2093 = vmul.f32 %v2071, 1.442695
    %v2094 = vpow.pop %v2093
    %v2095 = vmul.f32 %v2072, 1.442695
    %v2096 = vpow.pop %v2095
    %v2097 = vmul.f32 %v2073, 1.442695
    %v2098 = vpow.pop %v2097
    %v2099 = vmul.f32 %v2074, 1.442695
    %v2100 = vpow.pop %v2099
    %v2101 = vmul.f32 %v2075, 1.442695
    %v2102 = vpow.pop %v2101
    %v2103 = vmul.f32 %v2076, 1.442695
    %v2104 = vpow.pop %v2103
    %v2105 = vmul.f32 %v2077, 1.442695
    %v2106 = vpow.pop %v2105
    %v2107 = vmul.f32 %v2078, 1.442695
    %v2108 = vpow.pop %v2107
    %v2109 = vmul.f32 %v2079, 1.442695
    %v2110 = vpow.pop %v2109
    %v2111 = vmul.f32 %v2080, 1.442695
    %v2112 = vpow.pop %v2111
    %v2113 = vsub.f32 %v2082, 1.0
    %v2114 = vsub.f32 %v2084, 1.0
    %v2115 = vsub.f32 %v2086, 1.0
    %v2116 = vsub.f32 %v2088, 1.0
    %v2117 = vsub.f32 %v2090, 1.0
    %v2118 = vsub.f32 %v2092, 1.0
    %v2119 = vsub.f32 %v2094, 1.0
    %v2120 = vsub.f32 %v2096, 1.0
    %v2121 = vsub.f32 %v2098, 1.0
    %v2122 = vsub.f32 %v2100, 1.0
    %v2123 = vsub.f32 %v2102, 1.0
    %v2124 = vsub.f32 %v2104, 1.0
    %v2125 = vsub.f32 %v2106, 1.0
    %v2126 = vsub.f32 %v2108, 1.0
    %v2127 = vsub.f32 %v2110, 1.0
    %v2128 = vsub.f32 %v2112, 1.0
    %v2129 = vsel %vm2049, %v2003, %v2113
    %v2130 = vsel %vm2050, %v2005, %v2114
    %v2131 = vsel %vm2051, %v2009, %v2115
    %v2132 = vsel %vm2052, %v2011, %v2116
    %v2133 = vsel %vm2053, %v2015, %v2117
    %v2134 = vsel %vm2054, %v2017, %v2118
    %v2135 = vsel %vm2055, %v2021, %v2119
    %v2136 = vsel %vm2056, %v2023, %v2120
    %v2137 = vsel %vm2057, %v2027, %v2121
    %v2138 = vsel %vm2058, %v2029, %v2122
    %v2139 = vsel %vm2059, %v2033, %v2123
    %v2140 = vsel %vm2060, %v2035, %v2124
    %v2141 = vsel %vm2061, %v2039, %v2125
    %v2142 = vsel %vm2062, %v2041, %v2126
    %v2143 = vsel %vm2063, %v2045, %v2127
    %v2144 = vsel %vm2064, %v2047, %v2128
    %v2145 = vadd.f32 %v1856, %v2129
    %v2146 = vadd.f32 %v1857, %v2130
    %v2147 = vadd.f32 %v1858, %v2131
    %v2148 = vadd.f32 %v1859, %v2132
    %v2149 = vadd.f32 %v1860, %v2133
    %v2150 = vadd.f32 %v1861, %v2134
    %v2151 = vadd.f32 %v1862, %v2135
    %v2152 = vadd.f32 %v1863, %v2136
    %v2153 = vadd.f32 %v1864, %v2137
    %v2154 = vadd.f32 %v1865, %v2138
    %v2155 = vadd.f32 %v1866, %v2139
    %v2156 = vadd.f32 %v1867, %v2140
    %v2157 = vadd.f32 %v1868, %v2141
    %v2158 = vadd.f32 %v1869, %v2142
    %v2159 = vadd.f32 %v1870, %v2143
    %v2160 = vadd.f32 %v1871, %v2144
    %v2161 = vld [vmem:[%s658] sm:$0xff]
    %v2162 = vld [vmem:[%s658 + $0x8] sm:$0xff]
    %v2163 = vld [vmem:[%s658 + $0x10] sm:$0xff]
    %v2164 = vld [vmem:[%s658 + $0x18] sm:$0xff]
    %v2165 = vld [vmem:[%s658 + $0x20] sm:$0xff]
    %v2166 = vld [vmem:[%s658 + $0x28] sm:$0xff]
    %v2167 = vld [vmem:[%s658 + $0x30] sm:$0xff]
    %v2168 = vld [vmem:[%s658 + $0x38] sm:$0xff]
    %2169 = vset.pattern.permute.xlu0 2
    %2170 = vperm.xlu0 %2169, %v1712
    %v2171 = vpop.permute.xlu0 %2170
    %2173 = vset.pattern.permute.xlu0 2
    %2174 = vperm.xlu0 %2173, %v1713
    %v2175 = vpop.permute.xlu0 %2174
    %2177 = vset.pattern.permute.xlu0 2
    %2178 = vperm.xlu0 %2177, %v1714
    %v2179 = vpop.permute.xlu0 %2178
    %2181 = vset.pattern.permute.xlu0 2
    %2182 = vperm.xlu0 %2181, %v1715
    %v2183 = vpop.permute.xlu0 %2182
    %2185 = vset.pattern.permute.xlu0 2
    %2186 = vperm.xlu0 %2185, %v1716
    %v2187 = vpop.permute.xlu0 %2186
    %2189 = vset.pattern.permute.xlu0 2
    %2190 = vperm.xlu0 %2189, %v1717
    %v2191 = vpop.permute.xlu0 %2190
    %2193 = vset.pattern.permute.xlu0 2
    %2194 = vperm.xlu0 %2193, %v1718
    %v2195 = vpop.permute.xlu0 %2194
    %2197 = vset.pattern.permute.xlu0 2
    %2198 = vperm.xlu0 %2197, %v1719
    %v2199 = vpop.permute.xlu0 %2198
    %v2202 = vsel %vm408, %v2161, 0
    %v2205 = vsel %vm408, %v2162, 0
    %v2208 = vsel %vm408, %v2163, 0
    %v2211 = vsel %vm408, %v2164, 0
    %v2214 = vsel %vm408, %v2165, 0
    %v2217 = vsel %vm408, %v2166, 0
    %v2220 = vsel %vm408, %v2167, 0
    %v2223 = vsel %vm408, %v2168, 0
    %2225 = vmatprep.subr.mxu0 0.0
    %2226 = vmatpush1.msra.mxu0 0.0
    %2227 = vmatprep.subr.mxu0 0.0
    %2228 = vmatpush1.msra.mxu0 0.0
    %2229 = vmatprep.subr.mxu0 0.0
    %2230 = vmatpush1.msra.mxu0 0.0
    %2231 = vmatprep.subr.mxu0 0.0
    %2232 = vmatpush1.msra.mxu0 0.0
    %2233 = vmatprep.subr.mxu0 0.0
    %2234 = vmatpush1.msra.mxu0 0.0
    %2235 = vmatprep.subr.mxu0 0.0
    %2236 = vmatpush1.msra.mxu0 0.0
    %2237 = vmatprep.subr.mxu0 0.0
    %2238 = vmatpush1.msra.mxu0 0.0
    %2239 = vmatprep.subr.mxu0 0.0
    %2240 = vmatpush1.msra.mxu0 0.0
    %2241 = vmatprep.subr.mxu0 %v2160
    %2242 = vmatpush1.msra.mxu0 %v2159
    %2243 = vmatprep.subr.mxu0 %v2158
    %2244 = vmatpush1.msra.mxu0 %v2157
    %2245 = vmatprep.subr.mxu0 %v2156
    %2246 = vmatpush1.msra.mxu0 %v2155
    %2247 = vmatprep.subr.mxu0 %v2154
    %2248 = vmatpush1.msra.mxu0 %v2153
    %2249 = vmatprep.subr.mxu0 %v2152
    %2250 = vmatpush1.msra.mxu0 %v2151
    %2251 = vmatprep.subr.mxu0 %v2150
    %2252 = vmatpush1.msra.mxu0 %v2149
    %2253 = vmatprep.subr.mxu0 %v2148
    %2254 = vmatpush1.msra.mxu0 %v2147
    %2255 = vmatprep.subr.mxu0 %v2146
    %2256 = vmatpush1.msra.mxu0 %v2145
    %2257 = vmatprep.subr.mxu0 0.0
    %2258 = vmatpush2.msra.mxu0 0.0
    %2259 = vmatprep.subr.mxu0 0.0
    %2260 = vmatpush2.msra.mxu0 0.0
    %2261 = vmatprep.subr.mxu0 0.0
    %2262 = vmatpush2.msra.mxu0 0.0
    %2263 = vmatprep.subr.mxu0 0.0
    %2264 = vmatpush2.msra.mxu0 0.0
    %2265 = vmatprep.subr.mxu0 0.0
    %2266 = vmatpush2.msra.mxu0 0.0
    %2267 = vmatprep.subr.mxu0 0.0
    %2268 = vmatpush2.msra.mxu0 0.0
    %2269 = vmatprep.subr.mxu0 0.0
    %2270 = vmatpush2.msra.mxu0 0.0
    %2271 = vmatprep.subr.mxu0 0.0
    %2272 = vmatpush2.msra.mxu0 0.0
    %2273 = vmatprep.subr.mxu0 0.0
    %2274 = vmatpush2.msra.mxu0 0.0
    %2275 = vmatprep.subr.mxu0 0.0
    %2276 = vmatpush2.msra.mxu0 0.0
    %2277 = vmatprep.subr.mxu0 0.0
    %2278 = vmatpush2.msra.mxu0 0.0
    %2279 = vmatprep.subr.mxu0 0.0
    %2280 = vmatpush2.msra.mxu0 0.0
    %2281 = vmatprep.subr.mxu0 0.0
    %2282 = vmatpush2.msra.mxu0 0.0
    %2283 = vmatprep.subr.mxu0 0.0
    %2284 = vmatpush2.msra.mxu0 0.0
    %2285 = vmatprep.subr.mxu0 0.0
    %2286 = vmatpush2.msra.mxu0 0.0
    %2287 = vmatprep.subr.mxu0 0.0
    %2288 = vmatpush2.msra.mxu0 0.0
    %2289 = vmatprep.mubr.f32.mxu0 0.0
    %2290 = vmatmul.mubr.f32.gmra.mxu0 %v2202
    %v2291 = vpop.f32.mrf.mxu0
    %v2292 = vadd.f32 %v2171, %v2291
    %v2293 = vpop.f32.mrf.mxu0
    %v2294 = vadd.f32 %v2171, %v2293
    %2295 = vmatprep.mubr.f32.mxu0 0.0
    %2296 = vmatmul.mubr.f32.gmra.mxu0 %v2205
    %v2297 = vpop.f32.mrf.mxu0
    %v2298 = vadd.f32 %v2175, %v2297
    %v2299 = vpop.f32.mrf.mxu0
    %v2300 = vadd.f32 %v2175, %v2299
    %2301 = vmatprep.mubr.f32.mxu0 0.0
    %2302 = vmatmul.mubr.f32.gmra.mxu0 %v2208
    %v2303 = vpop.f32.mrf.mxu0
    %v2304 = vadd.f32 %v2179, %v2303
    %v2305 = vpop.f32.mrf.mxu0
    %v2306 = vadd.f32 %v2179, %v2305
    %2307 = vmatprep.mubr.f32.mxu0 0.0
    %2308 = vmatmul.mubr.f32.gmra.mxu0 %v2211
    %v2309 = vpop.f32.mrf.mxu0
    %v2310 = vadd.f32 %v2183, %v2309
    %v2311 = vpop.f32.mrf.mxu0
    %v2312 = vadd.f32 %v2183, %v2311
    %2313 = vmatprep.mubr.f32.mxu0 0.0
    %2314 = vmatmul.mubr.f32.gmra.mxu0 %v2214
    %v2315 = vpop.f32.mrf.mxu0
    %v2316 = vadd.f32 %v2187, %v2315
    %v2317 = vpop.f32.mrf.mxu0
    %v2318 = vadd.f32 %v2187, %v2317
    %2319 = vmatprep.mubr.f32.mxu0 0.0
    %2320 = vmatmul.mubr.f32.gmra.mxu0 %v2217
    %v2321 = vpop.f32.mrf.mxu0
    %v2322 = vadd.f32 %v2191, %v2321
    %v2323 = vpop.f32.mrf.mxu0
    %v2324 = vadd.f32 %v2191, %v2323
    %2325 = vmatprep.mubr.f32.mxu0 0.0
    %2326 = vmatmul.mubr.f32.gmra.mxu0 %v2220
    %v2327 = vpop.f32.mrf.mxu0
    %v2328 = vadd.f32 %v2195, %v2327
    %v2329 = vpop.f32.mrf.mxu0
    %v2330 = vadd.f32 %v2195, %v2329
    %2331 = vmatprep.mubr.f32.mxu0 0.0
    %2332 = vmatmul.mubr.f32.gmra.mxu0 %v2223
    %v2333 = vpop.f32.mrf.mxu0
    %v2334 = vadd.f32 %v2199, %v2333
    %v2335 = vpop.f32.mrf.mxu0
    %v2336 = vadd.f32 %v2199, %v2335
    %2337 = vdwg.mxu0
    %vm2338 = vcmp.gt.f32.partialorder %v2292, 0.0
    %vm2339 = vcmp.gt.f32.partialorder %v2294, 0.0
    %vm2340 = vcmp.gt.f32.partialorder %v2298, 0.0
    %vm2341 = vcmp.gt.f32.partialorder %v2300, 0.0
    %vm2342 = vcmp.gt.f32.partialorder %v2304, 0.0
    %vm2343 = vcmp.gt.f32.partialorder %v2306, 0.0
    %vm2344 = vcmp.gt.f32.partialorder %v2310, 0.0
    %vm2345 = vcmp.gt.f32.partialorder %v2312, 0.0
    %vm2346 = vcmp.gt.f32.partialorder %v2316, 0.0
    %vm2347 = vcmp.gt.f32.partialorder %v2318, 0.0
    %vm2348 = vcmp.gt.f32.partialorder %v2322, 0.0
    %vm2349 = vcmp.gt.f32.partialorder %v2324, 0.0
    %vm2350 = vcmp.gt.f32.partialorder %v2328, 0.0
    %vm2351 = vcmp.gt.f32.partialorder %v2330, 0.0
    %vm2352 = vcmp.gt.f32.partialorder %v2334, 0.0
    %vm2353 = vcmp.gt.f32.partialorder %v2336, 0.0
    %v2354 = vmin.f32 %v2292, 0.0
    %v2355 = vmin.f32 %v2294, 0.0
    %v2356 = vmin.f32 %v2298, 0.0
    %v2357 = vmin.f32 %v2300, 0.0
    %v2358 = vmin.f32 %v2304, 0.0
    %v2359 = vmin.f32 %v2306, 0.0
    %v2360 = vmin.f32 %v2310, 0.0
    %v2361 = vmin.f32 %v2312, 0.0
    %v2362 = vmin.f32 %v2316, 0.0
    %v2363 = vmin.f32 %v2318, 0.0
    %v2364 = vmin.f32 %v2322, 0.0
    %v2365 = vmin.f32 %v2324, 0.0
    %v2366 = vmin.f32 %v2328, 0.0
    %v2367 = vmin.f32 %v2330, 0.0
    %v2368 = vmin.f32 %v2334, 0.0
    %v2369 = vmin.f32 %v2336, 0.0
    %v2370 = vmul.f32 %v2354, 1.442695
    %v2371 = vpow.pop %v2370
    %v2372 = vmul.f32 %v2355, 1.442695
    %v2373 = vpow.pop %v2372
    %v2374 = vmul.f32 %v2356, 1.442695
    %v2375 = vpow.pop %v2374
    %v2376 = vmul.f32 %v2357, 1.442695
    %v2377 = vpow.pop %v2376
    %v2378 = vmul.f32 %v2358, 1.442695
    %v2379 = vpow.pop %v2378
    %v2380 = vmul.f32 %v2359, 1.442695
    %v2381 = vpow.pop %v2380
    %v2382 = vmul.f32 %v2360, 1.442695
    %v2383 = vpow.pop %v2382
    %v2384 = vmul.f32 %v2361, 1.442695
    %v2385 = vpow.pop %v2384
    %v2386 = vmul.f32 %v2362, 1.442695
    %v2387 = vpow.pop %v2386
    %v2388 = vmul.f32 %v2363, 1.442695
    %v2389 = vpow.pop %v2388
    %v2390 = vmul.f32 %v2364, 1.442695
    %v2391 = vpow.pop %v2390
    %v2392 = vmul.f32 %v2365, 1.442695
    %v2393 = vpow.pop %v2392
    %v2394 = vmul.f32 %v2366, 1.442695
    %v2395 = vpow.pop %v2394
    %v2396 = vmul.f32 %v2367, 1.442695
    %v2397 = vpow.pop %v2396
    %v2398 = vmul.f32 %v2368, 1.442695
    %v2399 = vpow.pop %v2398
    %v2400 = vmul.f32 %v2369, 1.442695
    %v2401 = vpow.pop %v2400
    %v2402 = vsub.f32 %v2371, 1.0
    %v2403 = vsub.f32 %v2373, 1.0
    %v2404 = vsub.f32 %v2375, 1.0
    %v2405 = vsub.f32 %v2377, 1.0
    %v2406 = vsub.f32 %v2379, 1.0
    %v2407 = vsub.f32 %v2381, 1.0
    %v2408 = vsub.f32 %v2383, 1.0
    %v2409 = vsub.f32 %v2385, 1.0
    %v2410 = vsub.f32 %v2387, 1.0
    %v2411 = vsub.f32 %v2389, 1.0
    %v2412 = vsub.f32 %v2391, 1.0
    %v2413 = vsub.f32 %v2393, 1.0
    %v2414 = vsub.f32 %v2395, 1.0
    %v2415 = vsub.f32 %v2397, 1.0
    %v2416 = vsub.f32 %v2399, 1.0
    %v2417 = vsub.f32 %v2401, 1.0
    %v2418 = vsel %vm2338, %v2292, %v2402
    %v2419 = vsel %vm2339, %v2294, %v2403
    %v2420 = vsel %vm2340, %v2298, %v2404
    %v2421 = vsel %vm2341, %v2300, %v2405
    %v2422 = vsel %vm2342, %v2304, %v2406
    %v2423 = vsel %vm2343, %v2306, %v2407
    %v2424 = vsel %vm2344, %v2310, %v2408
    %v2425 = vsel %vm2345, %v2312, %v2409
    %v2426 = vsel %vm2346, %v2316, %v2410
    %v2427 = vsel %vm2347, %v2318, %v2411
    %v2428 = vsel %vm2348, %v2322, %v2412
    %v2429 = vsel %vm2349, %v2324, %v2413
    %v2430 = vsel %vm2350, %v2328, %v2414
    %v2431 = vsel %vm2351, %v2330, %v2415
    %v2432 = vsel %vm2352, %v2334, %v2416
    %v2433 = vsel %vm2353, %v2336, %v2417
    %v2434 = vadd.f32 %v2145, %v2418
    %v2435 = vadd.f32 %v2146, %v2419
    %v2436 = vadd.f32 %v2147, %v2420
    %v2437 = vadd.f32 %v2148, %v2421
    %v2438 = vadd.f32 %v2149, %v2422
    %v2439 = vadd.f32 %v2150, %v2423
    %v2440 = vadd.f32 %v2151, %v2424
    %v2441 = vadd.f32 %v2152, %v2425
    %v2442 = vadd.f32 %v2153, %v2426
    %v2443 = vadd.f32 %v2154, %v2427
    %v2444 = vadd.f32 %v2155, %v2428
    %v2445 = vadd.f32 %v2156, %v2429
    %v2446 = vadd.f32 %v2157, %v2430
    %v2447 = vadd.f32 %v2158, %v2431
    %v2448 = vadd.f32 %v2159, %v2432
    %v2449 = vadd.f32 %v2160, %v2433
    %v2450 = vld [vmem:[%s948] sm:$0xff]
    %v2451 = vld [vmem:[%s948 + $0x8] sm:$0xff]
    %v2452 = vld [vmem:[%s948 + $0x10] sm:$0xff]
    %v2453 = vld [vmem:[%s948 + $0x18] sm:$0xff]
    %v2454 = vld [vmem:[%s948 + $0x20] sm:$0xff]
    %v2455 = vld [vmem:[%s948 + $0x28] sm:$0xff]
    %v2456 = vld [vmem:[%s948 + $0x30] sm:$0xff]
    %v2457 = vld [vmem:[%s948 + $0x38] sm:$0xff]
    %2458 = vset.pattern.permute.xlu0 3
    %2459 = vperm.xlu0 %2458, %v1712
    %v2460 = vpop.permute.xlu0 %2459
    %2462 = vset.pattern.permute.xlu0 3
    %2463 = vperm.xlu0 %2462, %v1713
    %v2464 = vpop.permute.xlu0 %2463
    %2466 = vset.pattern.permute.xlu0 3
    %2467 = vperm.xlu0 %2466, %v1714
    %v2468 = vpop.permute.xlu0 %2467
    %2470 = vset.pattern.permute.xlu0 3
    %2471 = vperm.xlu0 %2470, %v1715
    %v2472 = vpop.permute.xlu0 %2471
    %2474 = vset.pattern.permute.xlu0 3
    %2475 = vperm.xlu0 %2474, %v1716
    %v2476 = vpop.permute.xlu0 %2475
    %2478 = vset.pattern.permute.xlu0 3
    %2479 = vperm.xlu0 %2478, %v1717
    %v2480 = vpop.permute.xlu0 %2479
    %2482 = vset.pattern.permute.xlu0 3
    %2483 = vperm.xlu0 %2482, %v1718
    %v2484 = vpop.permute.xlu0 %2483
    %2486 = vset.pattern.permute.xlu0 3
    %2487 = vperm.xlu0 %2486, %v1719
    %v2488 = vpop.permute.xlu0 %2487
    %v2491 = vsel %vm408, %v2450, 0
    %v2494 = vsel %vm408, %v2451, 0
    %v2497 = vsel %vm408, %v2452, 0
    %v2500 = vsel %vm408, %v2453, 0
    %v2503 = vsel %vm408, %v2454, 0
    %v2506 = vsel %vm408, %v2455, 0
    %v2509 = vsel %vm408, %v2456, 0
    %v2512 = vsel %vm408, %v2457, 0
    %2514 = vmatprep.subr.mxu0 0.0
    %2515 = vmatpush1.msra.mxu0 0.0
    %2516 = vmatprep.subr.mxu0 0.0
    %2517 = vmatpush1.msra.mxu0 0.0
    %2518 = vmatprep.subr.mxu0 0.0
    %2519 = vmatpush1.msra.mxu0 0.0
    %2520 = vmatprep.subr.mxu0 0.0
    %2521 = vmatpush1.msra.mxu0 0.0
    %2522 = vmatprep.subr.mxu0 0.0
    %2523 = vmatpush1.msra.mxu0 0.0
    %2524 = vmatprep.subr.mxu0 0.0
    %2525 = vmatpush1.msra.mxu0 0.0
    %2526 = vmatprep.subr.mxu0 0.0
    %2527 = vmatpush1.msra.mxu0 0.0
    %2528 = vmatprep.subr.mxu0 0.0
    %2529 = vmatpush1.msra.mxu0 0.0
    %2530 = vmatprep.subr.mxu0 %v2449
    %2531 = vmatpush1.msra.mxu0 %v2448
    %2532 = vmatprep.subr.mxu0 %v2447
    %2533 = vmatpush1.msra.mxu0 %v2446
    %2534 = vmatprep.subr.mxu0 %v2445
    %2535 = vmatpush1.msra.mxu0 %v2444
    %2536 = vmatprep.subr.mxu0 %v2443
    %2537 = vmatpush1.msra.mxu0 %v2442
    %2538 = vmatprep.subr.mxu0 %v2441
    %2539 = vmatpush1.msra.mxu0 %v2440
    %2540 = vmatprep.subr.mxu0 %v2439
    %2541 = vmatpush1.msra.mxu0 %v2438
    %2542 = vmatprep.subr.mxu0 %v2437
    %2543 = vmatpush1.msra.mxu0 %v2436
    %2544 = vmatprep.subr.mxu0 %v2435
    %2545 = vmatpush1.msra.mxu0 %v2434
    %2546 = vmatprep.subr.mxu0 0.0
    %2547 = vmatpush2.msra.mxu0 0.0
    %2548 = vmatprep.subr.mxu0 0.0
    %2549 = vmatpush2.msra.mxu0 0.0
    %2550 = vmatprep.subr.mxu0 0.0
    %2551 = vmatpush2.msra.mxu0 0.0
    %2552 = vmatprep.subr.mxu0 0.0
    %2553 = vmatpush2.msra.mxu0 0.0
    %2554 = vmatprep.subr.mxu0 0.0
    %2555 = vmatpush2.msra.mxu0 0.0
    %2556 = vmatprep.subr.mxu0 0.0
    %2557 = vmatpush2.msra.mxu0 0.0
    %2558 = vmatprep.subr.mxu0 0.0
    %2559 = vmatpush2.msra.mxu0 0.0
    %2560 = vmatprep.subr.mxu0 0.0
    %2561 = vmatpush2.msra.mxu0 0.0
    %2562 = vmatprep.subr.mxu0 0.0
    %2563 = vmatpush2.msra.mxu0 0.0
    %2564 = vmatprep.subr.mxu0 0.0
    %2565 = vmatpush2.msra.mxu0 0.0
    %2566 = vmatprep.subr.mxu0 0.0
    %2567 = vmatpush2.msra.mxu0 0.0
    %2568 = vmatprep.subr.mxu0 0.0
    %2569 = vmatpush2.msra.mxu0 0.0
    %2570 = vmatprep.subr.mxu0 0.0
    %2571 = vmatpush2.msra.mxu0 0.0
    %2572 = vmatprep.subr.mxu0 0.0
    %2573 = vmatpush2.msra.mxu0 0.0
    %2574 = vmatprep.subr.mxu0 0.0
    %2575 = vmatpush2.msra.mxu0 0.0
    %2576 = vmatprep.subr.mxu0 0.0
    %2577 = vmatpush2.msra.mxu0 0.0
    %2578 = vmatprep.mubr.f32.mxu0 0.0
    %2579 = vmatmul.mubr.f32.gmra.mxu0 %v2491
    %v2580 = vpop.f32.mrf.mxu0
    %v2581 = vadd.f32 %v2460, %v2580
    %v2582 = vpop.f32.mrf.mxu0
    %v2583 = vadd.f32 %v2460, %v2582
    %2584 = vmatprep.mubr.f32.mxu0 0.0
    %2585 = vmatmul.mubr.f32.gmra.mxu0 %v2494
    %v2586 = vpop.f32.mrf.mxu0
    %v2587 = vadd.f32 %v2464, %v2586
    %v2588 = vpop.f32.mrf.mxu0
    %v2589 = vadd.f32 %v2464, %v2588
    %2590 = vmatprep.mubr.f32.mxu0 0.0
    %2591 = vmatmul.mubr.f32.gmra.mxu0 %v2497
    %v2592 = vpop.f32.mrf.mxu0
    %v2593 = vadd.f32 %v2468, %v2592
    %v2594 = vpop.f32.mrf.mxu0
    %v2595 = vadd.f32 %v2468, %v2594
    %2596 = vmatprep.mubr.f32.mxu0 0.0
    %2597 = vmatmul.mubr.f32.gmra.mxu0 %v2500
    %v2598 = vpop.f32.mrf.mxu0
    %v2599 = vadd.f32 %v2472, %v2598
    %v2600 = vpop.f32.mrf.mxu0
    %v2601 = vadd.f32 %v2472, %v2600
    %2602 = vmatprep.mubr.f32.mxu0 0.0
    %2603 = vmatmul.mubr.f32.gmra.mxu0 %v2503
    %v2604 = vpop.f32.mrf.mxu0
    %v2605 = vadd.f32 %v2476, %v2604
    %v2606 = vpop.f32.mrf.mxu0
    %v2607 = vadd.f32 %v2476, %v2606
    %2608 = vmatprep.mubr.f32.mxu0 0.0
    %2609 = vmatmul.mubr.f32.gmra.mxu0 %v2506
    %v2610 = vpop.f32.mrf.mxu0
    %v2611 = vadd.f32 %v2480, %v2610
    %v2612 = vpop.f32.mrf.mxu0
    %v2613 = vadd.f32 %v2480, %v2612
    %2614 = vmatprep.mubr.f32.mxu0 0.0
    %2615 = vmatmul.mubr.f32.gmra.mxu0 %v2509
    %v2616 = vpop.f32.mrf.mxu0
    %v2617 = vadd.f32 %v2484, %v2616
    %v2618 = vpop.f32.mrf.mxu0
    %v2619 = vadd.f32 %v2484, %v2618
    %2620 = vmatprep.mubr.f32.mxu0 0.0
    %2621 = vmatmul.mubr.f32.gmra.mxu0 %v2512
    %v2622 = vpop.f32.mrf.mxu0
    %v2623 = vadd.f32 %v2488, %v2622
    %v2624 = vpop.f32.mrf.mxu0
    %v2625 = vadd.f32 %v2488, %v2624
    %2626 = vdwg.mxu0
    %vm2627 = vcmp.gt.f32.partialorder %v2581, 0.0
    %vm2628 = vcmp.gt.f32.partialorder %v2583, 0.0
    %vm2629 = vcmp.gt.f32.partialorder %v2587, 0.0
    %vm2630 = vcmp.gt.f32.partialorder %v2589, 0.0
    %vm2631 = vcmp.gt.f32.partialorder %v2593, 0.0
    %vm2632 = vcmp.gt.f32.partialorder %v2595, 0.0
    %vm2633 = vcmp.gt.f32.partialorder %v2599, 0.0
    %vm2634 = vcmp.gt.f32.partialorder %v2601, 0.0
    %vm2635 = vcmp.gt.f32.partialorder %v2605, 0.0
    %vm2636 = vcmp.gt.f32.partialorder %v2607, 0.0
    %vm2637 = vcmp.gt.f32.partialorder %v2611, 0.0
    %vm2638 = vcmp.gt.f32.partialorder %v2613, 0.0
    %vm2639 = vcmp.gt.f32.partialorder %v2617, 0.0
    %vm2640 = vcmp.gt.f32.partialorder %v2619, 0.0
    %vm2641 = vcmp.gt.f32.partialorder %v2623, 0.0
    %vm2642 = vcmp.gt.f32.partialorder %v2625, 0.0
    %v2643 = vmin.f32 %v2581, 0.0
    %v2644 = vmin.f32 %v2583, 0.0
    %v2645 = vmin.f32 %v2587, 0.0
    %v2646 = vmin.f32 %v2589, 0.0
    %v2647 = vmin.f32 %v2593, 0.0
    %v2648 = vmin.f32 %v2595, 0.0
    %v2649 = vmin.f32 %v2599, 0.0
    %v2650 = vmin.f32 %v2601, 0.0
    %v2651 = vmin.f32 %v2605, 0.0
    %v2652 = vmin.f32 %v2607, 0.0
    %v2653 = vmin.f32 %v2611, 0.0
    %v2654 = vmin.f32 %v2613, 0.0
    %v2655 = vmin.f32 %v2617, 0.0
    %v2656 = vmin.f32 %v2619, 0.0
    %v2657 = vmin.f32 %v2623, 0.0
    %v2658 = vmin.f32 %v2625, 0.0
    %v2659 = vmul.f32 %v2643, 1.442695
    %v2660 = vpow.pop %v2659
    %v2661 = vmul.f32 %v2644, 1.442695
    %v2662 = vpow.pop %v2661
    %v2663 = vmul.f32 %v2645, 1.442695
    %v2664 = vpow.pop %v2663
    %v2665 = vmul.f32 %v2646, 1.442695
    %v2666 = vpow.pop %v2665
    %v2667 = vmul.f32 %v2647, 1.442695
    %v2668 = vpow.pop %v2667
    %v2669 = vmul.f32 %v2648, 1.442695
    %v2670 = vpow.pop %v2669
    %v2671 = vmul.f32 %v2649, 1.442695
    %v2672 = vpow.pop %v2671
    %v2673 = vmul.f32 %v2650, 1.442695
    %v2674 = vpow.pop %v2673
    %v2675 = vmul.f32 %v2651, 1.442695
    %v2676 = vpow.pop %v2675
    %v2677 = vmul.f32 %v2652, 1.442695
    %v2678 = vpow.pop %v2677
    %v2679 = vmul.f32 %v2653, 1.442695
    %v2680 = vpow.pop %v2679
    %v2681 = vmul.f32 %v2654, 1.442695
    %v2682 = vpow.pop %v2681
    %v2683 = vmul.f32 %v2655, 1.442695
    %v2684 = vpow.pop %v2683
    %v2685 = vmul.f32 %v2656, 1.442695
    %v2686 = vpow.pop %v2685
    %v2687 = vmul.f32 %v2657, 1.442695
    %v2688 = vpow.pop %v2687
    %v2689 = vmul.f32 %v2658, 1.442695
    %v2690 = vpow.pop %v2689
    %v2691 = vsub.f32 %v2660, 1.0
    %v2692 = vsub.f32 %v2662, 1.0
    %v2693 = vsub.f32 %v2664, 1.0
    %v2694 = vsub.f32 %v2666, 1.0
    %v2695 = vsub.f32 %v2668, 1.0
    %v2696 = vsub.f32 %v2670, 1.0
    %v2697 = vsub.f32 %v2672, 1.0
    %v2698 = vsub.f32 %v2674, 1.0
    %v2699 = vsub.f32 %v2676, 1.0
    %v2700 = vsub.f32 %v2678, 1.0
    %v2701 = vsub.f32 %v2680, 1.0
    %v2702 = vsub.f32 %v2682, 1.0
    %v2703 = vsub.f32 %v2684, 1.0
    %v2704 = vsub.f32 %v2686, 1.0
    %v2705 = vsub.f32 %v2688, 1.0
    %v2706 = vsub.f32 %v2690, 1.0
    %v2707 = vsel %vm2627, %v2581, %v2691
    %v2708 = vsel %vm2628, %v2583, %v2692
    %v2709 = vsel %vm2629, %v2587, %v2693
    %v2710 = vsel %vm2630, %v2589, %v2694
    %v2711 = vsel %vm2631, %v2593, %v2695
    %v2712 = vsel %vm2632, %v2595, %v2696
    %v2713 = vsel %vm2633, %v2599, %v2697
    %v2714 = vsel %vm2634, %v2601, %v2698
    %v2715 = vsel %vm2635, %v2605, %v2699
    %v2716 = vsel %vm2636, %v2607, %v2700
    %v2717 = vsel %vm2637, %v2611, %v2701
    %v2718 = vsel %vm2638, %v2613, %v2702
    %v2719 = vsel %vm2639, %v2617, %v2703
    %v2720 = vsel %vm2640, %v2619, %v2704
    %v2721 = vsel %vm2641, %v2623, %v2705
    %v2722 = vsel %vm2642, %v2625, %v2706
    %v2723 = vadd.f32 %v2434, %v2707
    %v2724 = vadd.f32 %v2435, %v2708
    %v2725 = vadd.f32 %v2436, %v2709
    %v2726 = vadd.f32 %v2437, %v2710
    %v2727 = vadd.f32 %v2438, %v2711
    %v2728 = vadd.f32 %v2439, %v2712
    %v2729 = vadd.f32 %v2440, %v2713
    %v2730 = vadd.f32 %v2441, %v2714
    %v2731 = vadd.f32 %v2442, %v2715
    %v2732 = vadd.f32 %v2443, %v2716
    %v2733 = vadd.f32 %v2444, %v2717
    %v2734 = vadd.f32 %v2445, %v2718
    %v2735 = vadd.f32 %v2446, %v2719
    %v2736 = vadd.f32 %v2447, %v2720
    %v2737 = vadd.f32 %v2448, %v2721
    %v2738 = vadd.f32 %v2449, %v2722
    %v2739 = vld [vmem:[%s1238] sm:$0xff]
    %v2740 = vld [vmem:[%s1238 + $0x8] sm:$0xff]
    %v2741 = vld [vmem:[%s1238 + $0x10] sm:$0xff]
    %v2742 = vld [vmem:[%s1238 + $0x18] sm:$0xff]
    %v2743 = vld [vmem:[%s1238 + $0x20] sm:$0xff]
    %v2744 = vld [vmem:[%s1238 + $0x28] sm:$0xff]
    %v2745 = vld [vmem:[%s1238 + $0x30] sm:$0xff]
    %v2746 = vld [vmem:[%s1238 + $0x38] sm:$0xff]
    %2747 = vset.pattern.permute.xlu0 4
    %2748 = vperm.xlu0 %2747, %v1712
    %v2749 = vpop.permute.xlu0 %2748
    %2751 = vset.pattern.permute.xlu0 4
    %2752 = vperm.xlu0 %2751, %v1713
    %v2753 = vpop.permute.xlu0 %2752
    %2755 = vset.pattern.permute.xlu0 4
    %2756 = vperm.xlu0 %2755, %v1714
    %v2757 = vpop.permute.xlu0 %2756
    %2759 = vset.pattern.permute.xlu0 4
    %2760 = vperm.xlu0 %2759, %v1715
    %v2761 = vpop.permute.xlu0 %2760
    %2763 = vset.pattern.permute.xlu0 4
    %2764 = vperm.xlu0 %2763, %v1716
    %v2765 = vpop.permute.xlu0 %2764
    %2767 = vset.pattern.permute.xlu0 4
    %2768 = vperm.xlu0 %2767, %v1717
    %v2769 = vpop.permute.xlu0 %2768
    %2771 = vset.pattern.permute.xlu0 4
    %2772 = vperm.xlu0 %2771, %v1718
    %v2773 = vpop.permute.xlu0 %2772
    %2775 = vset.pattern.permute.xlu0 4
    %2776 = vperm.xlu0 %2775, %v1719
    %v2777 = vpop.permute.xlu0 %2776
    %v2780 = vsel %vm408, %v2739, 0
    %v2783 = vsel %vm408, %v2740, 0
    %v2786 = vsel %vm408, %v2741, 0
    %v2789 = vsel %vm408, %v2742, 0
    %v2792 = vsel %vm408, %v2743, 0
    %v2795 = vsel %vm408, %v2744, 0
    %v2798 = vsel %vm408, %v2745, 0
    %v2801 = vsel %vm408, %v2746, 0
    %2803 = vmatprep.subr.mxu0 0.0
    %2804 = vmatpush1.msra.mxu0 0.0
    %2805 = vmatprep.subr.mxu0 0.0
    %2806 = vmatpush1.msra.mxu0 0.0
    %2807 = vmatprep.subr.mxu0 0.0
    %2808 = vmatpush1.msra.mxu0 0.0
    %2809 = vmatprep.subr.mxu0 0.0
    %2810 = vmatpush1.msra.mxu0 0.0
    %2811 = vmatprep.subr.mxu0 0.0
    %2812 = vmatpush1.msra.mxu0 0.0
    %2813 = vmatprep.subr.mxu0 0.0
    %2814 = vmatpush1.msra.mxu0 0.0
    %2815 = vmatprep.subr.mxu0 0.0
    %2816 = vmatpush1.msra.mxu0 0.0
    %2817 = vmatprep.subr.mxu0 0.0
    %2818 = vmatpush1.msra.mxu0 0.0
    %2819 = vmatprep.subr.mxu0 %v2738
    %2820 = vmatpush1.msra.mxu0 %v2737
    %2821 = vmatprep.subr.mxu0 %v2736
    %2822 = vmatpush1.msra.mxu0 %v2735
    %2823 = vmatprep.subr.mxu0 %v2734
    %2824 = vmatpush1.msra.mxu0 %v2733
    %2825 = vmatprep.subr.mxu0 %v2732
    %2826 = vmatpush1.msra.mxu0 %v2731
    %2827 = vmatprep.subr.mxu0 %v2730
    %2828 = vmatpush1.msra.mxu0 %v2729
    %2829 = vmatprep.subr.mxu0 %v2728
    %2830 = vmatpush1.msra.mxu0 %v2727
    %2831 = vmatprep.subr.mxu0 %v2726
    %2832 = vmatpush1.msra.mxu0 %v2725
    %2833 = vmatprep.subr.mxu0 %v2724
    %2834 = vmatpush1.msra.mxu0 %v2723
    %2835 = vmatprep.subr.mxu0 0.0
    %2836 = vmatpush2.msra.mxu0 0.0
    %2837 = vmatprep.subr.mxu0 0.0
    %2838 = vmatpush2.msra.mxu0 0.0
    %2839 = vmatprep.subr.mxu0 0.0
    %2840 = vmatpush2.msra.mxu0 0.0
    %2841 = vmatprep.subr.mxu0 0.0
    %2842 = vmatpush2.msra.mxu0 0.0
    %2843 = vmatprep.subr.mxu0 0.0
    %2844 = vmatpush2.msra.mxu0 0.0
    %2845 = vmatprep.subr.mxu0 0.0
    %2846 = vmatpush2.msra.mxu0 0.0
    %2847 = vmatprep.subr.mxu0 0.0
    %2848 = vmatpush2.msra.mxu0 0.0
    %2849 = vmatprep.subr.mxu0 0.0
    %2850 = vmatpush2.msra.mxu0 0.0
    %2851 = vmatprep.subr.mxu0 0.0
    %2852 = vmatpush2.msra.mxu0 0.0
    %2853 = vmatprep.subr.mxu0 0.0
    %2854 = vmatpush2.msra.mxu0 0.0
    %2855 = vmatprep.subr.mxu0 0.0
    %2856 = vmatpush2.msra.mxu0 0.0
    %2857 = vmatprep.subr.mxu0 0.0
    %2858 = vmatpush2.msra.mxu0 0.0
    %2859 = vmatprep.subr.mxu0 0.0
    %2860 = vmatpush2.msra.mxu0 0.0
    %2861 = vmatprep.subr.mxu0 0.0
    %2862 = vmatpush2.msra.mxu0 0.0
    %2863 = vmatprep.subr.mxu0 0.0
    %2864 = vmatpush2.msra.mxu0 0.0
    %2865 = vmatprep.subr.mxu0 0.0
    %2866 = vmatpush2.msra.mxu0 0.0
    %2867 = vmatprep.mubr.f32.mxu0 0.0
    %2868 = vmatmul.mubr.f32.gmra.mxu0 %v2780
    %v2869 = vpop.f32.mrf.mxu0
    %v2870 = vadd.f32 %v2749, %v2869
    %v2871 = vpop.f32.mrf.mxu0
    %v2872 = vadd.f32 %v2749, %v2871
    %2873 = vmatprep.mubr.f32.mxu0 0.0
    %2874 = vmatmul.mubr.f32.gmra.mxu0 %v2783
    %v2875 = vpop.f32.mrf.mxu0
    %v2876 = vadd.f32 %v2753, %v2875
    %v2877 = vpop.f32.mrf.mxu0
    %v2878 = vadd.f32 %v2753, %v2877
    %2879 = vmatprep.mubr.f32.mxu0 0.0
    %2880 = vmatmul.mubr.f32.gmra.mxu0 %v2786
    %v2881 = vpop.f32.mrf.mxu0
    %v2882 = vadd.f32 %v2757, %v2881
    %v2883 = vpop.f32.mrf.mxu0
    %v2884 = vadd.f32 %v2757, %v2883
    %2885 = vmatprep.mubr.f32.mxu0 0.0
    %2886 = vmatmul.mubr.f32.gmra.mxu0 %v2789
    %v2887 = vpop.f32.mrf.mxu0
    %v2888 = vadd.f32 %v2761, %v2887
    %v2889 = vpop.f32.mrf.mxu0
    %v2890 = vadd.f32 %v2761, %v2889
    %2891 = vmatprep.mubr.f32.mxu0 0.0
    %2892 = vmatmul.mubr.f32.gmra.mxu0 %v2792
    %v2893 = vpop.f32.mrf.mxu0
    %v2894 = vadd.f32 %v2765, %v2893
    %v2895 = vpop.f32.mrf.mxu0
    %v2896 = vadd.f32 %v2765, %v2895
    %2897 = vmatprep.mubr.f32.mxu0 0.0
    %2898 = vmatmul.mubr.f32.gmra.mxu0 %v2795
    %v2899 = vpop.f32.mrf.mxu0
    %v2900 = vadd.f32 %v2769, %v2899
    %v2901 = vpop.f32.mrf.mxu0
    %v2902 = vadd.f32 %v2769, %v2901
    %2903 = vmatprep.mubr.f32.mxu0 0.0
    %2904 = vmatmul.mubr.f32.gmra.mxu0 %v2798
    %v2905 = vpop.f32.mrf.mxu0
    %v2906 = vadd.f32 %v2773, %v2905
    %v2907 = vpop.f32.mrf.mxu0
    %v2908 = vadd.f32 %v2773, %v2907
    %2909 = vmatprep.mubr.f32.mxu0 0.0
    %2910 = vmatmul.mubr.f32.gmra.mxu0 %v2801
    %v2911 = vpop.f32.mrf.mxu0
    %v2912 = vadd.f32 %v2777, %v2911
    %v2913 = vpop.f32.mrf.mxu0
    %v2914 = vadd.f32 %v2777, %v2913
    %2915 = vdwg.mxu0
    %vm2916 = vcmp.gt.f32.partialorder %v2870, 0.0
    %vm2917 = vcmp.gt.f32.partialorder %v2872, 0.0
    %vm2918 = vcmp.gt.f32.partialorder %v2876, 0.0
    %vm2919 = vcmp.gt.f32.partialorder %v2878, 0.0
    %vm2920 = vcmp.gt.f32.partialorder %v2882, 0.0
    %vm2921 = vcmp.gt.f32.partialorder %v2884, 0.0
    %vm2922 = vcmp.gt.f32.partialorder %v2888, 0.0
    %vm2923 = vcmp.gt.f32.partialorder %v2890, 0.0
    %vm2924 = vcmp.gt.f32.partialorder %v2894, 0.0
    %vm2925 = vcmp.gt.f32.partialorder %v2896, 0.0
    %vm2926 = vcmp.gt.f32.partialorder %v2900, 0.0
    %vm2927 = vcmp.gt.f32.partialorder %v2902, 0.0
    %vm2928 = vcmp.gt.f32.partialorder %v2906, 0.0
    %vm2929 = vcmp.gt.f32.partialorder %v2908, 0.0
    %vm2930 = vcmp.gt.f32.partialorder %v2912, 0.0
    %vm2931 = vcmp.gt.f32.partialorder %v2914, 0.0
    %v2932 = vmin.f32 %v2870, 0.0
    %v2933 = vmin.f32 %v2872, 0.0
    %v2934 = vmin.f32 %v2876, 0.0
    %v2935 = vmin.f32 %v2878, 0.0
    %v2936 = vmin.f32 %v2882, 0.0
    %v2937 = vmin.f32 %v2884, 0.0
    %v2938 = vmin.f32 %v2888, 0.0
    %v2939 = vmin.f32 %v2890, 0.0
    %v2940 = vmin.f32 %v2894, 0.0
    %v2941 = vmin.f32 %v2896, 0.0
    %v2942 = vmin.f32 %v2900, 0.0
    %v2943 = vmin.f32 %v2902, 0.0
    %v2944 = vmin.f32 %v2906, 0.0
    %v2945 = vmin.f32 %v2908, 0.0
    %v2946 = vmin.f32 %v2912, 0.0
    %v2947 = vmin.f32 %v2914, 0.0
    %v2948 = vmul.f32 %v2932, 1.442695
    %v2949 = vpow.pop %v2948
    %v2950 = vmul.f32 %v2933, 1.442695
    %v2951 = vpow.pop %v2950
    %v2952 = vmul.f32 %v2934, 1.442695
    %v2953 = vpow.pop %v2952
    %v2954 = vmul.f32 %v2935, 1.442695
    %v2955 = vpow.pop %v2954
    %v2956 = vmul.f32 %v2936, 1.442695
    %v2957 = vpow.pop %v2956
    %v2958 = vmul.f32 %v2937, 1.442695
    %v2959 = vpow.pop %v2958
    %v2960 = vmul.f32 %v2938, 1.442695
    %v2961 = vpow.pop %v2960
    %v2962 = vmul.f32 %v2939, 1.442695
    %v2963 = vpow.pop %v2962
    %v2964 = vmul.f32 %v2940, 1.442695
    %v2965 = vpow.pop %v2964
    %v2966 = vmul.f32 %v2941, 1.442695
    %v2967 = vpow.pop %v2966
    %v2968 = vmul.f32 %v2942, 1.442695
    %v2969 = vpow.pop %v2968
    %v2970 = vmul.f32 %v2943, 1.442695
    %v2971 = vpow.pop %v2970
    %v2972 = vmul.f32 %v2944, 1.442695
    %v2973 = vpow.pop %v2972
    %v2974 = vmul.f32 %v2945, 1.442695
    %v2975 = vpow.pop %v2974
    %v2976 = vmul.f32 %v2946, 1.442695
    %v2977 = vpow.pop %v2976
    %v2978 = vmul.f32 %v2947, 1.442695
    %v2979 = vpow.pop %v2978
    %v2980 = vsub.f32 %v2949, 1.0
    %v2981 = vsub.f32 %v2951, 1.0
    %v2982 = vsub.f32 %v2953, 1.0
    %v2983 = vsub.f32 %v2955, 1.0
    %v2984 = vsub.f32 %v2957, 1.0
    %v2985 = vsub.f32 %v2959, 1.0
    %v2986 = vsub.f32 %v2961, 1.0
    %v2987 = vsub.f32 %v2963, 1.0
    %v2988 = vsub.f32 %v2965, 1.0
    %v2989 = vsub.f32 %v2967, 1.0
    %v2990 = vsub.f32 %v2969, 1.0
    %v2991 = vsub.f32 %v2971, 1.0
    %v2992 = vsub.f32 %v2973, 1.0
    %v2993 = vsub.f32 %v2975, 1.0
    %v2994 = vsub.f32 %v2977, 1.0
    %v2995 = vsub.f32 %v2979, 1.0
    %v2996 = vsel %vm2916, %v2870, %v2980
    %v2997 = vsel %vm2917, %v2872, %v2981
    %v2998 = vsel %vm2918, %v2876, %v2982
    %v2999 = vsel %vm2919, %v2878, %v2983
    %v3000 = vsel %vm2920, %v2882, %v2984
    %v3001 = vsel %vm2921, %v2884, %v2985
    %v3002 = vsel %vm2922, %v2888, %v2986
    %v3003 = vsel %vm2923, %v2890, %v2987
    %v3004 = vsel %vm2924, %v2894, %v2988
    %v3005 = vsel %vm2925, %v2896, %v2989
    %v3006 = vsel %vm2926, %v2900, %v2990
    %v3007 = vsel %vm2927, %v2902, %v2991
    %v3008 = vsel %vm2928, %v2906, %v2992
    %v3009 = vsel %vm2929, %v2908, %v2993
    %v3010 = vsel %vm2930, %v2912, %v2994
    %v3011 = vsel %vm2931, %v2914, %v2995
    %v3012 = vadd.f32 %v2723, %v2996
    %v3013 = vadd.f32 %v2724, %v2997
    %v3014 = vadd.f32 %v2725, %v2998
    %v3015 = vadd.f32 %v2726, %v2999
    %v3016 = vadd.f32 %v2727, %v3000
    %v3017 = vadd.f32 %v2728, %v3001
    %v3018 = vadd.f32 %v2729, %v3002
    %v3019 = vadd.f32 %v2730, %v3003
    %v3020 = vadd.f32 %v2731, %v3004
    %v3021 = vadd.f32 %v2732, %v3005
    %v3022 = vadd.f32 %v2733, %v3006
    %v3023 = vadd.f32 %v2734, %v3007
    %v3024 = vadd.f32 %v2735, %v3008
    %v3025 = vadd.f32 %v2736, %v3009
    %v3026 = vadd.f32 %v2737, %v3010
    %v3027 = vadd.f32 %v2738, %v3011
    %3028 = vmatprep.subr.mxu0 0.0
    %3029 = vmatpush1.msra.mxu0 0.0
    %3030 = vmatprep.subr.mxu0 0.0
    %3031 = vmatpush1.msra.mxu0 0.0
    %3032 = vmatprep.subr.mxu0 0.0
    %3033 = vmatpush1.msra.mxu0 0.0
    %3034 = vmatprep.subr.mxu0 0.0
    %3035 = vmatpush1.msra.mxu0 0.0
    %3036 = vmatprep.subr.mxu0 0.0
    %3037 = vmatpush1.msra.mxu0 0.0
    %3038 = vmatprep.subr.mxu0 0.0
    %3039 = vmatpush1.msra.mxu0 0.0
    %3040 = vmatprep.subr.mxu0 0.0
    %3041 = vmatpush1.msra.mxu0 0.0
    %3042 = vmatprep.subr.mxu0 0.0
    %3043 = vmatpush1.msra.mxu0 0.0
    %3044 = vmatprep.subr.mxu0 %v3027
    %3045 = vmatpush1.msra.mxu0 %v3026
    %3046 = vmatprep.subr.mxu0 %v3025
    %3047 = vmatpush1.msra.mxu0 %v3024
    %3048 = vmatprep.subr.mxu0 %v3023
    %3049 = vmatpush1.msra.mxu0 %v3022
    %3050 = vmatprep.subr.mxu0 %v3021
    %3051 = vmatpush1.msra.mxu0 %v3020
    %3052 = vmatprep.subr.mxu0 %v3019
    %3053 = vmatpush1.msra.mxu0 %v3018
    %3054 = vmatprep.subr.mxu0 %v3017
    %3055 = vmatpush1.msra.mxu0 %v3016
    %3056 = vmatprep.subr.mxu0 %v3015
    %3057 = vmatpush1.msra.mxu0 %v3014
    %3058 = vmatprep.subr.mxu0 %v3013
    %3059 = vmatpush1.msra.mxu0 %v3012
    %3060 = vmatprep.subr.mxu0 0.0
    %3061 = vmatpush2.msra.mxu0 0.0
    %3062 = vmatprep.subr.mxu0 0.0
    %3063 = vmatpush2.msra.mxu0 0.0
    %3064 = vmatprep.subr.mxu0 0.0
    %3065 = vmatpush2.msra.mxu0 0.0
    %3066 = vmatprep.subr.mxu0 0.0
    %3067 = vmatpush2.msra.mxu0 0.0
    %3068 = vmatprep.subr.mxu0 0.0
    %3069 = vmatpush2.msra.mxu0 0.0
    %3070 = vmatprep.subr.mxu0 0.0
    %3071 = vmatpush2.msra.mxu0 0.0
    %3072 = vmatprep.subr.mxu0 0.0
    %3073 = vmatpush2.msra.mxu0 0.0
    %3074 = vmatprep.subr.mxu0 0.0
    %3075 = vmatpush2.msra.mxu0 0.0
    %3076 = vmatprep.subr.mxu0 0.0
    %3077 = vmatpush2.msra.mxu0 0.0
    %3078 = vmatprep.subr.mxu0 0.0
    %3079 = vmatpush2.msra.mxu0 0.0
    %3080 = vmatprep.subr.mxu0 0.0
    %3081 = vmatpush2.msra.mxu0 0.0
    %3082 = vmatprep.subr.mxu0 0.0
    %3083 = vmatpush2.msra.mxu0 0.0
    %3084 = vmatprep.subr.mxu0 0.0
    %3085 = vmatpush2.msra.mxu0 0.0
    %3086 = vmatprep.subr.mxu0 0.0
    %3087 = vmatpush2.msra.mxu0 0.0
    %3088 = vmatprep.subr.mxu0 0.0
    %3089 = vmatpush2.msra.mxu0 0.0
    %3090 = vmatprep.subr.mxu0 0.0
    %3091 = vmatpush2.msra.mxu0 0.0
    %3092 = vmatprep.mubr.f32.mxu0 0.0
    %3093 = vmatmul.mubr.f32.gmra.mxu0 %v1539
    %v3094 = vpop.f32.mrf.mxu0
    %v3095 = vadd.f32 %v1531, %v3094
    %v3096 = vpop.f32.mrf.mxu0
    %v3097 = vadd.f32 %v1531, %v3096
    %3098 = vmatprep.mubr.f32.mxu0 0.0
    %3099 = vmatmul.mubr.f32.gmra.mxu0 %v1542
    %v3100 = vpop.f32.mrf.mxu0
    %v3101 = vadd.f32 %v1536, %v3100
    %v3102 = vpop.f32.mrf.mxu0
    %v3103 = vadd.f32 %v1536, %v3102
    %3104 = vdwg.mxu0
    %s3105 = scalar_lea.vmem [#allocation5], 16
    %3106 = vst [vmem:[%s3105] sm:$0xff] %v3095
    %3107 = vst [vmem:[%s3105 + $0x8] sm:$0xff] %v3097
    %3108 = vst [vmem:[%s3105 + $0x20] sm:$0xff] %v3101
    %3109 = vst [vmem:[%s3105 + $0x28] sm:$0xff] %v3103
    // Predicated region
    $region30: #{tpu_custom_call.1} parent=1 // pred_check
      _
    $region31: #{tpu_custom_call.1} parent=1 // pred_check_branch
      %3111 = sbr.rel (0) target = $region33
    $region32: #{tpu_custom_call.1} parent=1 // pred_region
      %s3113 = ssub.s32 1024, 1024
      %3114 = vsyncadd [#allocation4], %s3113
      %s3115 = sshll.u32 [#allocation5], 4
      %s3116 = int_to_ptr.vmem [resolvable:$true] %s3115
      %3121 = dma.vmem_to_hbm [thread:$0]  %s3116, 1024, %s6, [#allocation4], 512, 512, 32
    $region33: #{tpu_custom_call.1} parent=1 // pred_fallthru
      _
    // Predicated region
    $region34: #{tpu_custom_call.1} parent=1 // pred_check
      _
    $region35: #{tpu_custom_call.1} parent=1 // pred_check_branch
      %3123 = sbr.rel (0) target = $region37
    $region36: #{tpu_custom_call.1} parent=1 // pred_region
      %3124 = dma.done [#allocation4], 1024
    $region37: #{tpu_custom_call.1} parent=1 // pred_fallthru
      _
    %3125 = vsyncpa [#allocation3], 1
    %3126 = vsyncpa [#allocation4], 1

</llo_original>
